<compile_context>
chip_gen: v5e
topology: v5e:2x2
jax: 0.10.0
libtpu: 0.0.40
codegen_flags: <defaults>
</compile_context>

<pallas_src>
import functools
import math

import jax
import jax.numpy as jnp
from jax.experimental import pallas as pl
from jax.experimental.pallas import tpu as pltpu


# ---------------------------------------------------------------------------
# shared math helpers (pure jnp: used both inside the Pallas kernels and in the
# pure-JAX reference so the numerics are identical)
# ---------------------------------------------------------------------------

def _gelu(x):
    # exact (erf-based) GELU == PyTorch nn.GELU() default
    return 0.5 * x * (1.0 + jax.lax.erf(x * (1.0 / math.sqrt(2.0))))


def _layernorm(x, gamma, beta, eps=1e-5):
    mu = jnp.mean(x, axis=-1, keepdims=True)
    xc = x - mu
    var = jnp.mean(xc * xc, axis=-1, keepdims=True)
    return xc * jax.lax.rsqrt(var + eps) * gamma + beta


def _dot_bf16(a_f32, w):
    # bf16 operands on the MXU, f32 accumulation
    return jnp.dot(a_f32.astype(w.dtype), w, preferred_element_type=jnp.float32)


def _mha_math(x, wq, wk, wv, bq, bk, bv, wo, bo, *, nhead):
    """Multi-head self-attention for one sequence. x: (S, d) f32."""
    S, d = x.shape
    dh = d // nhead
    scale = 1.0 / math.sqrt(dh)
    bf = wq.dtype
    xb = x.astype(bf)
    q = jnp.dot(xb, wq, preferred_element_type=jnp.float32) + bq
    k = jnp.dot(xb, wk, preferred_element_type=jnp.float32) + bk
    v = jnp.dot(xb, wv, preferred_element_type=jnp.float32) + bv
    acc = jnp.zeros((S, d), jnp.float32)
    for h in range(nhead):                      # static head loop
        lo, hi = h * dh, (h + 1) * dh
        qh = q[:, lo:hi].astype(bf)
        kh = k[:, lo:hi].astype(bf)
        vh = v[:, lo:hi].astype(bf)
        # scores = q @ k^T  (contract the last dim of both; no explicit transpose)
        s = jax.lax.dot_general(qh, kh, (((1,), (1,)), ((), ())),
                                preferred_element_type=jnp.float32) * scale
        s = s - jnp.max(s, axis=-1, keepdims=True)
        p = jnp.exp(s)
        p = p / jnp.sum(p, axis=-1, keepdims=True)   # attn-dropout = identity (eval)
        oh = jnp.dot(p.astype(bf), vh, preferred_element_type=jnp.float32)
        # fold this head's slice of the output projection (block-matmul identity)
        acc = acc + jnp.dot(oh.astype(bf), wo[lo:hi, :],
                            preferred_element_type=jnp.float32)
    return acc + bo


def _encoder_tail_math(src, attn, w):
    """Residual+LN1, FFN, residual+LN2 and the physics constraint layer.
    src/attn: (rows, d) f32; all dropout = identity (eval)."""
    x = _layernorm(src + attn, w["g_n1"], w["b_n1"])
    h = _gelu(_dot_bf16(x, w["w_ff1"]) + w["b_ff1"])
    ff = _dot_bf16(h, w["w_ff2"]) + w["b_ff2"]
    x = _layernorm(x + ff, w["g_n2"], w["b_n2"])
    # --- PhysicsConstraintLayer ---
    h2 = _gelu(_dot_bf16(x, w["w_p1"]) + w["b_p1"])
    h2 = _layernorm(h2, w["g_p1"], w["be_p1"])
    y = _gelu(_dot_bf16(h2, w["w_p2"]) + w["b_p2"])
    y = _layernorm(y, w["g_p2"], w["be_p2"])
    return y + x


# ---------------------------------------------------------------------------
# Pallas kernels
# ---------------------------------------------------------------------------

def mha_kernel(x_ref, wq_ref, wk_ref, wv_ref, bq_ref, bk_ref, bv_ref,
               wo_ref, bo_ref, o_ref, *, nhead):
    f32 = jnp.float32
    out = _mha_math(
        x_ref[...].astype(f32),
        wq_ref[...], wk_ref[...], wv_ref[...],
        bq_ref[...].astype(f32), bk_ref[...].astype(f32), bv_ref[...].astype(f32),
        wo_ref[...], bo_ref[...].astype(f32),
        nhead=nhead)
    o_ref[...] = out.astype(o_ref.dtype)


def encoder_rows_kernel(src_ref, attn_ref,
                        wff1_ref, bff1_ref, wff2_ref, bff2_ref,
                        gn1_ref, bn1_ref, gn2_ref, bn2_ref,
                        wp1_ref, bp1_ref, gp1_ref, bep1_ref,
                        wp2_ref, bp2_ref, gp2_ref, bep2_ref,
                        o_ref):
    f32 = jnp.float32
    # load every parameter exactly once (hoisted broadcasts, low vreg pressure)
    w = dict(
        w_ff1=wff1_ref[...], b_ff1=bff1_ref[...].astype(f32),
        w_ff2=wff2_ref[...], b_ff2=bff2_ref[...].astype(f32),
        g_n1=gn1_ref[...].astype(f32), b_n1=bn1_ref[...].astype(f32),
        g_n2=gn2_ref[...].astype(f32), b_n2=bn2_ref[...].astype(f32),
        w_p1=wp1_ref[...], b_p1=bp1_ref[...].astype(f32),
        g_p1=gp1_ref[...].astype(f32), be_p1=bep1_ref[...].astype(f32),
        w_p2=wp2_ref[...], b_p2=bp2_ref[...].astype(f32),
        g_p2=gp2_ref[...].astype(f32), be_p2=bep2_ref[...].astype(f32),
    )
    out = _encoder_tail_math(src_ref[...].astype(f32), attn_ref[...].astype(f32), w)
    o_ref[...] = out.astype(o_ref.dtype)


# ---------------------------------------------------------------------------
# wrappers
# ---------------------------------------------------------------------------

_COMPILER_PARAMS = pltpu.CompilerParams(
    dimension_semantics=("parallel",),
    vmem_limit_bytes=64 * 1024 * 1024,
)


def _round_up(x, m):
    return ((x + m - 1) // m) * m


def multihead_self_attention(src, p, *, nhead):
    B, S, d = src.shape
    full = lambda b: (0, 0)
    seq_spec = pl.BlockSpec((None, S, d), lambda b: (b, 0, 0))
    return pl.pallas_call(
        functools.partial(mha_kernel, nhead=nhead),
        out_shape=jax.ShapeDtypeStruct((B, S, d), src.dtype),
        grid_spec=pltpu.PrefetchScalarGridSpec(
            num_scalar_prefetch=0,
            grid=(B,),
            in_specs=[
                seq_spec,
                pl.BlockSpec((d, d), full),   # Wq
                pl.BlockSpec((d, d), full),   # Wk
                pl.BlockSpec((d, d), full),   # Wv
                pl.BlockSpec((1, d), full),   # bq
                pl.BlockSpec((1, d), full),   # bk
                pl.BlockSpec((1, d), full),   # bv
                pl.BlockSpec((d, d), full),   # W_out
                pl.BlockSpec((1, d), full),   # b_out
            ],
            out_specs=seq_spec,
        ),
        compiler_params=_COMPILER_PARAMS,
    )(src, p["wq"], p["wk"], p["wv"], p["bq"], p["bk"], p["bv"], p["wo"], p["bo"])


def encoder_tail(src, attn, p, *, tm=256):
    """Residual+LN1 + FFN + residual+LN2 + physics layer, tiled over tokens."""
    B, S, d = src.shape
    dff = p["w_ff1"].shape[1]
    d2 = p["w_p1"].shape[1]
    rows = B * S
    src2 = src.reshape(rows, d)
    attn2 = attn.reshape(rows, d)

    # adaptive row tile + round-up padding (no divisibility requirement for callers)
    tm_eff = min(tm, _round_up(rows, 8))
    rows_p = _round_up(rows, tm_eff)
    if rows_p != rows:
        pad = rows_p - rows
        src2 = jnp.pad(src2, ((0, pad), (0, 0)))
        attn2 = jnp.pad(attn2, ((0, pad), (0, 0)))

    row_spec = pl.BlockSpec((tm_eff, d), lambda i: (i, 0))
    full = lambda i: (0, 0)

    out = pl.pallas_call(
        encoder_rows_kernel,
        out_shape=jax.ShapeDtypeStruct((rows_p, d), src.dtype),
        grid_spec=pltpu.PrefetchScalarGridSpec(
            num_scalar_prefetch=0,
            grid=(rows_p // tm_eff,),
            in_specs=[
                row_spec,                           # src rows
                row_spec,                           # attention output rows
                pl.BlockSpec((d, dff), full),       # FFN W1
                pl.BlockSpec((1, dff), full),       # FFN b1
                pl.BlockSpec((dff, d), full),       # FFN W2
                pl.BlockSpec((1, d), full),         # FFN b2
                pl.BlockSpec((1, d), full),         # norm1 gamma
                pl.BlockSpec((1, d), full),         # norm1 beta
                pl.BlockSpec((1, d), full),         # norm2 gamma
                pl.BlockSpec((1, d), full),         # norm2 beta
                pl.BlockSpec((d, d2), full),        # physics W1
                pl.BlockSpec((1, d2), full),        # physics b1
                pl.BlockSpec((1, d2), full),        # physics LN1 gamma
                pl.BlockSpec((1, d2), full),        # physics LN1 beta
                pl.BlockSpec((d2, d), full),        # physics W2
                pl.BlockSpec((1, d), full),         # physics b2
                pl.BlockSpec((1, d), full),         # physics LN2 gamma
                pl.BlockSpec((1, d), full),         # physics LN2 beta
            ],
            out_specs=row_spec,
        ),
        compiler_params=_COMPILER_PARAMS,
    )(src2, attn2,
      p["w_ff1"], p["b_ff1"], p["w_ff2"], p["b_ff2"],
      p["g_n1"], p["b_n1"], p["g_n2"], p["b_n2"],
      p["w_p1"], p["b_p1"], p["g_p1"], p["be_p1"],
      p["w_p2"], p["b_p2"], p["g_p2"], p["be_p2"])

    return out[:rows].reshape(B, S, d)


def transformer_encoder_with_physics(src, params, *, nhead, tm=256):
    # src_mask / src_key_padding_mask are None in this forward (not implemented).
    attn = multihead_self_attention(src, params, nhead=nhead)
    return encoder_tail(src, attn, params, tm=tm)


# ---------------------------------------------------------------------------
# parameter init (PyTorch-Linear-like scales; matmul weights stored transposed
# (in, out) and cast to bf16; biases / LayerNorm params in f32)
# ---------------------------------------------------------------------------

def init_params(key, d_model, nhead, dim_feedforward, w_dtype=jnp.bfloat16):
    assert d_model % nhead == 0
    d, dff, d2 = d_model, dim_feedforward, 2 * d_model
    ks = iter(jax.random.split(key, 24))

    def lin(fan_in, fan_out):
        bnd = 1.0 / math.sqrt(fan_in)
        w = jax.random.uniform(next(ks), (fan_in, fan_out), jnp.float32, -bnd, bnd)
        b = jax.random.uniform(next(ks), (1, fan_out), jnp.float32, -bnd, bnd)
        return w.astype(w_dtype), b

    def ln(dim):
        g = 1.0 + 0.05 * jax.random.normal(next(ks), (1, dim), jnp.float32)
        b = 0.05 * jax.random.normal(next(ks), (1, dim), jnp.float32)
        return g, b

    wq, bq = lin(d, d)
    wk, bk = lin(d, d)
    wv, bv = lin(d, d)
    wo, bo = lin(d, d)
    w_ff1, b_ff1 = lin(d, dff)
    w_ff2, b_ff2 = lin(dff, d)
    g_n1, b_n1 = ln(d)
    g_n2, b_n2 = ln(d)
    w_p1, b_p1 = lin(d, d2)
    w_p2, b_p2 = lin(d2, d)
    g_p1, be_p1 = ln(d2)
    g_p2, be_p2 = ln(d)
    return dict(wq=wq, wk=wk, wv=wv, bq=bq, bk=bk, bv=bv, wo=wo, bo=bo,
                w_ff1=w_ff1, b_ff1=b_ff1, w_ff2=w_ff2, b_ff2=b_ff2,
                g_n1=g_n1, b_n1=b_n1, g_n2=g_n2, b_n2=b_n2,
                w_p1=w_p1, b_p1=b_p1, g_p1=g_p1, be_p1=be_p1,
                w_p2=w_p2, b_p2=b_p2, g_p2=g_p2, be_p2=be_p2)


# ---------------------------------------------------------------------------
# pure-JAX reference (same math / precision policy)
# ---------------------------------------------------------------------------

def _reference(src, p, *, nhead):
    B, S, d = src.shape
    f32 = jnp.float32
    attn = jnp.stack([
        _mha_math(src[b].astype(f32),
                  p["wq"], p["wk"], p["wv"], p["bq"], p["bk"], p["bv"],
                  p["wo"], p["bo"], nhead=nhead)
        for b in range(B)])
    out = _encoder_tail_math(src.reshape(B * S, d).astype(f32),
                             attn.reshape(B * S, d), p)
    return out.reshape(B, S, d).astype(src.dtype)


if __name__ == "__main__":
    key = jax.random.PRNGKey(0)
    kx, kp = jax.random.split(key)

    # small demo shapes; d_model chosen lane-dense (multiple of 128) per perf review
    batch, seq, d_model, nhead, dim_ff = 2, 8, 128, 4, 256
    src = jax.random.normal(kx, (batch, seq, d_model), jnp.float32)
    params = init_params(kp, d_model, nhead, dim_ff)

    fwd = jax.jit(lambda s, p: transformer_encoder_with_physics(s, p, nhead=nhead))
    out = jax.block_until_ready(fwd(src, params))

    ref = _reference(src, params, nhead=nhead)
    assert out.shape == src.shape and out.dtype == src.dtype
    err = float(jnp.max(jnp.abs(out - ref)))
    assert err < 2e-2, f"max abs err {err}"

    print("KERNEL_OK")
</pallas_src>

<mosaic_0001>
module attributes {stable_mosaic.version = 11 : i64} {
  func.func @mha_kernel(%arg0: i32, %arg1: memref<1x8x128xf32, #tpu.memory_space<vmem>>, %arg2: memref<128x128xbf16, #tpu.memory_space<vmem>>, %arg3: memref<128x128xbf16, #tpu.memory_space<vmem>>, %arg4: memref<128x128xbf16, #tpu.memory_space<vmem>>, %arg5: memref<1x128xf32, #tpu.memory_space<vmem>>, %arg6: memref<1x128xf32, #tpu.memory_space<vmem>>, %arg7: memref<1x128xf32, #tpu.memory_space<vmem>>, %arg8: memref<128x128xbf16, #tpu.memory_space<vmem>>, %arg9: memref<1x128xf32, #tpu.memory_space<vmem>>, %arg10: memref<1x8x128xf32, #tpu.memory_space<vmem>>) attributes {dimension_semantics = [#tpu.dimension_semantics<parallel>], iteration_bounds = array<i64: 2>, scalar_prefetch = 0 : i64, scratch_operands = 0 : i64, tpu.core_type = #tpu.core_type<tc>, window_params = [{transform_indices = @transform_0, window_bounds = array<i64: 1, 8, 128>}, {pipeline_mode = #tpu.pipeline_mode<synchronous>, transform_indices = @transform_1, window_bounds = array<i64: 128, 128>}, {pipeline_mode = #tpu.pipeline_mode<synchronous>, transform_indices = @transform_2, window_bounds = array<i64: 128, 128>}, {pipeline_mode = #tpu.pipeline_mode<synchronous>, transform_indices = @transform_3, window_bounds = array<i64: 128, 128>}, {pipeline_mode = #tpu.pipeline_mode<synchronous>, transform_indices = @transform_4, window_bounds = array<i64: 1, 128>}, {pipeline_mode = #tpu.pipeline_mode<synchronous>, transform_indices = @transform_5, window_bounds = array<i64: 1, 128>}, {pipeline_mode = #tpu.pipeline_mode<synchronous>, transform_indices = @transform_6, window_bounds = array<i64: 1, 128>}, {pipeline_mode = #tpu.pipeline_mode<synchronous>, transform_indices = @transform_7, window_bounds = array<i64: 128, 128>}, {pipeline_mode = #tpu.pipeline_mode<synchronous>, transform_indices = @transform_8, window_bounds = array<i64: 1, 128>}, {transform_indices = @transform_9, window_bounds = array<i64: 1, 8, 128>}]} {
    %c0 = arith.constant 0 : index
    %c0_0 = arith.constant 0 : index
    %c0_1 = arith.constant 0 : index
    %0 = vector.load %arg1[%c0, %c0_0, %c0_1] : memref<1x8x128xf32, #tpu.memory_space<vmem>>, vector<1x8x128xf32>
    %1 = vector.shape_cast %0 : vector<1x8x128xf32> to vector<8x128xf32>
    %c0_2 = arith.constant 0 : index
    %c0_3 = arith.constant 0 : index
    %2 = vector.load %arg2[%c0_2, %c0_3] : memref<128x128xbf16, #tpu.memory_space<vmem>>, vector<128x128xbf16>
    %c0_4 = arith.constant 0 : index
    %c0_5 = arith.constant 0 : index
    %3 = vector.load %arg3[%c0_4, %c0_5] : memref<128x128xbf16, #tpu.memory_space<vmem>>, vector<128x128xbf16>
    %c0_6 = arith.constant 0 : index
    %c0_7 = arith.constant 0 : index
    %4 = vector.load %arg4[%c0_6, %c0_7] : memref<128x128xbf16, #tpu.memory_space<vmem>>, vector<128x128xbf16>
    %c0_8 = arith.constant 0 : index
    %c0_9 = arith.constant 0 : index
    %5 = vector.load %arg5[%c0_8, %c0_9] : memref<1x128xf32, #tpu.memory_space<vmem>>, vector<1x128xf32>
    %c0_10 = arith.constant 0 : index
    %c0_11 = arith.constant 0 : index
    %6 = vector.load %arg6[%c0_10, %c0_11] : memref<1x128xf32, #tpu.memory_space<vmem>>, vector<1x128xf32>
    %c0_12 = arith.constant 0 : index
    %c0_13 = arith.constant 0 : index
    %7 = vector.load %arg7[%c0_12, %c0_13] : memref<1x128xf32, #tpu.memory_space<vmem>>, vector<1x128xf32>
    %c0_14 = arith.constant 0 : index
    %c0_15 = arith.constant 0 : index
    %8 = vector.load %arg8[%c0_14, %c0_15] : memref<128x128xbf16, #tpu.memory_space<vmem>>, vector<128x128xbf16>
    %c0_16 = arith.constant 0 : index
    %c0_17 = arith.constant 0 : index
    %9 = vector.load %arg9[%c0_16, %c0_17] : memref<1x128xf32, #tpu.memory_space<vmem>>, vector<1x128xf32>
    %10 = arith.truncf %1 : vector<8x128xf32> to vector<8x128xbf16>
    %cst = arith.constant dense<0.000000e+00> : vector<8x128xf32>
    %11 = tpu.matmul %10, %2, %cst {dimension_numbers = #tpu.dot_dimension_numbers<[1], [0], [0], [1], [0, 0, 1, 1], [], []>} : vector<8x128xbf16>, vector<128x128xbf16>, vector<8x128xf32> -> vector<8x128xf32>
    %12 = vector.broadcast %5 : vector<1x128xf32> to vector<8x128xf32>
    %13 = arith.addf %11, %12 : vector<8x128xf32>
    %cst_18 = arith.constant dense<0.000000e+00> : vector<8x128xf32>
    %14 = tpu.matmul %10, %3, %cst_18 {dimension_numbers = #tpu.dot_dimension_numbers<[1], [0], [0], [1], [0, 0, 1, 1], [], []>} : vector<8x128xbf16>, vector<128x128xbf16>, vector<8x128xf32> -> vector<8x128xf32>
    %15 = vector.broadcast %6 : vector<1x128xf32> to vector<8x128xf32>
    %16 = arith.addf %14, %15 : vector<8x128xf32>
    %cst_19 = arith.constant dense<0.000000e+00> : vector<8x128xf32>
    %17 = tpu.matmul %10, %4, %cst_19 {dimension_numbers = #tpu.dot_dimension_numbers<[1], [0], [0], [1], [0, 0, 1, 1], [], []>} : vector<8x128xbf16>, vector<128x128xbf16>, vector<8x128xf32> -> vector<8x128xf32>
    %18 = vector.broadcast %7 : vector<1x128xf32> to vector<8x128xf32>
    %19 = arith.addf %17, %18 : vector<8x128xf32>
    %cst_20 = arith.constant 0.000000e+00 : f32
    %20 = vector.broadcast %cst_20 : f32 to vector<8x128xf32>
    %21 = vector.extract_strided_slice %13 {offsets = [0, 0], sizes = [8, 32], strides = [1, 1]} : vector<8x128xf32> to vector<8x32xf32>
    %22 = arith.truncf %21 : vector<8x32xf32> to vector<8x32xbf16>
    %23 = vector.extract_strided_slice %16 {offsets = [0, 0], sizes = [8, 32], strides = [1, 1]} : vector<8x128xf32> to vector<8x32xf32>
    %24 = arith.truncf %23 : vector<8x32xf32> to vector<8x32xbf16>
    %25 = vector.extract_strided_slice %19 {offsets = [0, 0], sizes = [8, 32], strides = [1, 1]} : vector<8x128xf32> to vector<8x32xf32>
    %26 = arith.truncf %25 : vector<8x32xf32> to vector<8x32xbf16>
    %cst_21 = arith.constant dense<0.000000e+00> : vector<8x8xf32>
    %27 = tpu.matmul %22, %24, %cst_21 {dimension_numbers = #tpu.dot_dimension_numbers<[1], [1], [0], [0], [0, 0, 1, 0], [], []>} : vector<8x32xbf16>, vector<8x32xbf16>, vector<8x8xf32> -> vector<8x8xf32>
    %cst_22 = arith.constant 0.176776692 : f32
    %28 = vector.broadcast %cst_22 : f32 to vector<8x8xf32>
    %29 = arith.mulf %27, %28 : vector<8x8xf32>
    %cst_23 = arith.constant dense<0xFF800000> : vector<8xf32>
    %30 = vector.multi_reduction <maximumf>, %29, %cst_23 [1] : vector<8x8xf32> to vector<8xf32>
    %31 = vector.shape_cast %30 : vector<8xf32> to vector<8x1xf32>
    %32 = vector.broadcast %31 : vector<8x1xf32> to vector<8x8xf32>
    %33 = arith.subf %29, %32 : vector<8x8xf32>
    %34 = math.exp %33 : vector<8x8xf32>
    %cst_24 = arith.constant dense<0.000000e+00> : vector<8xf32>
    %35 = vector.multi_reduction <add>, %34, %cst_24 [1] : vector<8x8xf32> to vector<8xf32>
    %36 = vector.shape_cast %35 : vector<8xf32> to vector<8x1xf32>
    %37 = vector.broadcast %36 : vector<8x1xf32> to vector<8x8xf32>
    %38 = arith.divf %34, %37 : vector<8x8xf32>
    %39 = arith.truncf %38 : vector<8x8xf32> to vector<8x8xbf16>
    %cst_25 = arith.constant dense<0.000000e+00> : vector<8x32xf32>
    %40 = tpu.matmul %39, %26, %cst_25 {dimension_numbers = #tpu.dot_dimension_numbers<[1], [0], [0], [1], [0, 0, 1, 1], [], []>} : vector<8x8xbf16>, vector<8x32xbf16>, vector<8x32xf32> -> vector<8x32xf32>
    %41 = arith.truncf %40 : vector<8x32xf32> to vector<8x32xbf16>
    %42 = vector.extract_strided_slice %8 {offsets = [0, 0], sizes = [32, 128], strides = [1, 1]} : vector<128x128xbf16> to vector<32x128xbf16>
    %cst_26 = arith.constant dense<0.000000e+00> : vector<8x128xf32>
    %43 = tpu.matmul %41, %42, %cst_26 {dimension_numbers = #tpu.dot_dimension_numbers<[1], [0], [0], [1], [0, 0, 1, 1], [], []>} : vector<8x32xbf16>, vector<32x128xbf16>, vector<8x128xf32> -> vector<8x128xf32>
    %44 = arith.addf %20, %43 : vector<8x128xf32>
    %45 = vector.extract_strided_slice %13 {offsets = [0, 32], sizes = [8, 32], strides = [1, 1]} : vector<8x128xf32> to vector<8x32xf32>
    %46 = arith.truncf %45 : vector<8x32xf32> to vector<8x32xbf16>
    %47 = vector.extract_strided_slice %16 {offsets = [0, 32], sizes = [8, 32], strides = [1, 1]} : vector<8x128xf32> to vector<8x32xf32>
    %48 = arith.truncf %47 : vector<8x32xf32> to vector<8x32xbf16>
    %49 = vector.extract_strided_slice %19 {offsets = [0, 32], sizes = [8, 32], strides = [1, 1]} : vector<8x128xf32> to vector<8x32xf32>
    %50 = arith.truncf %49 : vector<8x32xf32> to vector<8x32xbf16>
    %cst_27 = arith.constant dense<0.000000e+00> : vector<8x8xf32>
    %51 = tpu.matmul %46, %48, %cst_27 {dimension_numbers = #tpu.dot_dimension_numbers<[1], [1], [0], [0], [0, 0, 1, 0], [], []>} : vector<8x32xbf16>, vector<8x32xbf16>, vector<8x8xf32> -> vector<8x8xf32>
    %cst_28 = arith.constant 0.176776692 : f32
    %52 = vector.broadcast %cst_28 : f32 to vector<8x8xf32>
    %53 = arith.mulf %51, %52 : vector<8x8xf32>
    %cst_29 = arith.constant dense<0xFF800000> : vector<8xf32>
    %54 = vector.multi_reduction <maximumf>, %53, %cst_29 [1] : vector<8x8xf32> to vector<8xf32>
    %55 = vector.shape_cast %54 : vector<8xf32> to vector<8x1xf32>
    %56 = vector.broadcast %55 : vector<8x1xf32> to vector<8x8xf32>
    %57 = arith.subf %53, %56 : vector<8x8xf32>
    %58 = math.exp %57 : vector<8x8xf32>
    %cst_30 = arith.constant dense<0.000000e+00> : vector<8xf32>
    %59 = vector.multi_reduction <add>, %58, %cst_30 [1] : vector<8x8xf32> to vector<8xf32>
    %60 = vector.shape_cast %59 : vector<8xf32> to vector<8x1xf32>
    %61 = vector.broadcast %60 : vector<8x1xf32> to vector<8x8xf32>
    %62 = arith.divf %58, %61 : vector<8x8xf32>
    %63 = arith.truncf %62 : vector<8x8xf32> to vector<8x8xbf16>
    %cst_31 = arith.constant dense<0.000000e+00> : vector<8x32xf32>
    %64 = tpu.matmul %63, %50, %cst_31 {dimension_numbers = #tpu.dot_dimension_numbers<[1], [0], [0], [1], [0, 0, 1, 1], [], []>} : vector<8x8xbf16>, vector<8x32xbf16>, vector<8x32xf32> -> vector<8x32xf32>
    %65 = arith.truncf %64 : vector<8x32xf32> to vector<8x32xbf16>
    %66 = vector.extract_strided_slice %8 {offsets = [32, 0], sizes = [32, 128], strides = [1, 1]} : vector<128x128xbf16> to vector<32x128xbf16>
    %cst_32 = arith.constant dense<0.000000e+00> : vector<8x128xf32>
    %67 = tpu.matmul %65, %66, %cst_32 {dimension_numbers = #tpu.dot_dimension_numbers<[1], [0], [0], [1], [0, 0, 1, 1], [], []>} : vector<8x32xbf16>, vector<32x128xbf16>, vector<8x128xf32> -> vector<8x128xf32>
    %68 = arith.addf %44, %67 : vector<8x128xf32>
    %69 = vector.extract_strided_slice %13 {offsets = [0, 64], sizes = [8, 32], strides = [1, 1]} : vector<8x128xf32> to vector<8x32xf32>
    %70 = arith.truncf %69 : vector<8x32xf32> to vector<8x32xbf16>
    %71 = vector.extract_strided_slice %16 {offsets = [0, 64], sizes = [8, 32], strides = [1, 1]} : vector<8x128xf32> to vector<8x32xf32>
    %72 = arith.truncf %71 : vector<8x32xf32> to vector<8x32xbf16>
    %73 = vector.extract_strided_slice %19 {offsets = [0, 64], sizes = [8, 32], strides = [1, 1]} : vector<8x128xf32> to vector<8x32xf32>
    %74 = arith.truncf %73 : vector<8x32xf32> to vector<8x32xbf16>
    %cst_33 = arith.constant dense<0.000000e+00> : vector<8x8xf32>
    %75 = tpu.matmul %70, %72, %cst_33 {dimension_numbers = #tpu.dot_dimension_numbers<[1], [1], [0], [0], [0, 0, 1, 0], [], []>} : vector<8x32xbf16>, vector<8x32xbf16>, vector<8x8xf32> -> vector<8x8xf32>
    %cst_34 = arith.constant 0.176776692 : f32
    %76 = vector.broadcast %cst_34 : f32 to vector<8x8xf32>
    %77 = arith.mulf %75, %76 : vector<8x8xf32>
    %cst_35 = arith.constant dense<0xFF800000> : vector<8xf32>
    %78 = vector.multi_reduction <maximumf>, %77, %cst_35 [1] : vector<8x8xf32> to vector<8xf32>
    %79 = vector.shape_cast %78 : vector<8xf32> to vector<8x1xf32>
    %80 = vector.broadcast %79 : vector<8x1xf32> to vector<8x8xf32>
    %81 = arith.subf %77, %80 : vector<8x8xf32>
    %82 = math.exp %81 : vector<8x8xf32>
    %cst_36 = arith.constant dense<0.000000e+00> : vector<8xf32>
    %83 = vector.multi_reduction <add>, %82, %cst_36 [1] : vector<8x8xf32> to vector<8xf32>
    %84 = vector.shape_cast %83 : vector<8xf32> to vector<8x1xf32>
    %85 = vector.broadcast %84 : vector<8x1xf32> to vector<8x8xf32>
    %86 = arith.divf %82, %85 : vector<8x8xf32>
    %87 = arith.truncf %86 : vector<8x8xf32> to vector<8x8xbf16>
    %cst_37 = arith.constant dense<0.000000e+00> : vector<8x32xf32>
    %88 = tpu.matmul %87, %74, %cst_37 {dimension_numbers = #tpu.dot_dimension_numbers<[1], [0], [0], [1], [0, 0, 1, 1], [], []>} : vector<8x8xbf16>, vector<8x32xbf16>, vector<8x32xf32> -> vector<8x32xf32>
    %89 = arith.truncf %88 : vector<8x32xf32> to vector<8x32xbf16>
    %90 = vector.extract_strided_slice %8 {offsets = [64, 0], sizes = [32, 128], strides = [1, 1]} : vector<128x128xbf16> to vector<32x128xbf16>
    %cst_38 = arith.constant dense<0.000000e+00> : vector<8x128xf32>
    %91 = tpu.matmul %89, %90, %cst_38 {dimension_numbers = #tpu.dot_dimension_numbers<[1], [0], [0], [1], [0, 0, 1, 1], [], []>} : vector<8x32xbf16>, vector<32x128xbf16>, vector<8x128xf32> -> vector<8x128xf32>
    %92 = arith.addf %68, %91 : vector<8x128xf32>
    %93 = vector.extract_strided_slice %13 {offsets = [0, 96], sizes = [8, 32], strides = [1, 1]} : vector<8x128xf32> to vector<8x32xf32>
    %94 = arith.truncf %93 : vector<8x32xf32> to vector<8x32xbf16>
    %95 = vector.extract_strided_slice %16 {offsets = [0, 96], sizes = [8, 32], strides = [1, 1]} : vector<8x128xf32> to vector<8x32xf32>
    %96 = arith.truncf %95 : vector<8x32xf32> to vector<8x32xbf16>
    %97 = vector.extract_strided_slice %19 {offsets = [0, 96], sizes = [8, 32], strides = [1, 1]} : vector<8x128xf32> to vector<8x32xf32>
    %98 = arith.truncf %97 : vector<8x32xf32> to vector<8x32xbf16>
    %cst_39 = arith.constant dense<0.000000e+00> : vector<8x8xf32>
    %99 = tpu.matmul %94, %96, %cst_39 {dimension_numbers = #tpu.dot_dimension_numbers<[1], [1], [0], [0], [0, 0, 1, 0], [], []>} : vector<8x32xbf16>, vector<8x32xbf16>, vector<8x8xf32> -> vector<8x8xf32>
    %cst_40 = arith.constant 0.176776692 : f32
    %100 = vector.broadcast %cst_40 : f32 to vector<8x8xf32>
    %101 = arith.mulf %99, %100 : vector<8x8xf32>
    %cst_41 = arith.constant dense<0xFF800000> : vector<8xf32>
    %102 = vector.multi_reduction <maximumf>, %101, %cst_41 [1] : vector<8x8xf32> to vector<8xf32>
    %103 = vector.shape_cast %102 : vector<8xf32> to vector<8x1xf32>
    %104 = vector.broadcast %103 : vector<8x1xf32> to vector<8x8xf32>
    %105 = arith.subf %101, %104 : vector<8x8xf32>
    %106 = math.exp %105 : vector<8x8xf32>
    %cst_42 = arith.constant dense<0.000000e+00> : vector<8xf32>
    %107 = vector.multi_reduction <add>, %106, %cst_42 [1] : vector<8x8xf32> to vector<8xf32>
    %108 = vector.shape_cast %107 : vector<8xf32> to vector<8x1xf32>
    %109 = vector.broadcast %108 : vector<8x1xf32> to vector<8x8xf32>
    %110 = arith.divf %106, %109 : vector<8x8xf32>
    %111 = arith.truncf %110 : vector<8x8xf32> to vector<8x8xbf16>
    %cst_43 = arith.constant dense<0.000000e+00> : vector<8x32xf32>
    %112 = tpu.matmul %111, %98, %cst_43 {dimension_numbers = #tpu.dot_dimension_numbers<[1], [0], [0], [1], [0, 0, 1, 1], [], []>} : vector<8x8xbf16>, vector<8x32xbf16>, vector<8x32xf32> -> vector<8x32xf32>
    %113 = arith.truncf %112 : vector<8x32xf32> to vector<8x32xbf16>
    %114 = vector.extract_strided_slice %8 {offsets = [96, 0], sizes = [32, 128], strides = [1, 1]} : vector<128x128xbf16> to vector<32x128xbf16>
    %cst_44 = arith.constant dense<0.000000e+00> : vector<8x128xf32>
    %115 = tpu.matmul %113, %114, %cst_44 {dimension_numbers = #tpu.dot_dimension_numbers<[1], [0], [0], [1], [0, 0, 1, 1], [], []>} : vector<8x32xbf16>, vector<32x128xbf16>, vector<8x128xf32> -> vector<8x128xf32>
    %116 = arith.addf %92, %115 : vector<8x128xf32>
    %117 = vector.broadcast %9 : vector<1x128xf32> to vector<8x128xf32>
    %118 = arith.addf %116, %117 : vector<8x128xf32>
    %c0_45 = arith.constant 0 : index
    %c0_46 = arith.constant 0 : index
    %c0_47 = arith.constant 0 : index
    %119 = vector.load %arg10[%c0_45, %c0_46, %c0_47] : memref<1x8x128xf32, #tpu.memory_space<vmem>>, vector<1x8x128xf32>
    %120 = vector.shape_cast %119 : vector<1x8x128xf32> to vector<8x128xf32>
    %121 = vector.shape_cast %118 : vector<8x128xf32> to vector<1x8x128xf32>
    tpu.vector_store %arg10[%c0_45, %c0_46, %c0_47], %121 {strides = array<i32>} : memref<1x8x128xf32, #tpu.memory_space<vmem>>, vector<1x8x128xf32>,
    return
  }
  func.func @transform_0(%arg0: i32) -> (i32, i32, i32) {
    %c0_i32 = arith.constant 0 : i32
    %c0_i32_0 = arith.constant 0 : i32
    %c0_i32_1 = arith.constant 0 : i32
    return %arg0, %c0_i32, %c0_i32_0 : i32, i32, i32
  }
  func.func @transform_1(%arg0: i32) -> (i32, i32) {
    %c0_i32 = arith.constant 0 : i32
    %c0_i32_0 = arith.constant 0 : i32
    %c0_i32_1 = arith.constant 0 : i32
    return %c0_i32, %c0_i32_0 : i32, i32
  }
  func.func @transform_2(%arg0: i32) -> (i32, i32) {
    %c0_i32 = arith.constant 0 : i32
    %c0_i32_0 = arith.constant 0 : i32
    %c0_i32_1 = arith.constant 0 : i32
    return %c0_i32, %c0_i32_0 : i32, i32
  }
  func.func @transform_3(%arg0: i32) -> (i32, i32) {
    %c0_i32 = arith.constant 0 : i32
    %c0_i32_0 = arith.constant 0 : i32
    %c0_i32_1 = arith.constant 0 : i32
    return %c0_i32, %c0_i32_0 : i32, i32
  }
  func.func @transform_4(%arg0: i32) -> (i32, i32) {
    %c0_i32 = arith.constant 0 : i32
    %c0_i32_0 = arith.constant 0 : i32
    %c0_i32_1 = arith.constant 0 : i32
    return %c0_i32, %c0_i32_0 : i32, i32
  }
  func.func @transform_5(%arg0: i32) -> (i32, i32) {
    %c0_i32 = arith.constant 0 : i32
    %c0_i32_0 = arith.constant 0 : i32
    %c0_i32_1 = arith.constant 0 : i32
    return %c0_i32, %c0_i32_0 : i32, i32
  }
  func.func @transform_6(%arg0: i32) -> (i32, i32) {
    %c0_i32 = arith.constant 0 : i32
    %c0_i32_0 = arith.constant 0 : i32
    %c0_i32_1 = arith.constant 0 : i32
    return %c0_i32, %c0_i32_0 : i32, i32
  }
  func.func @transform_7(%arg0: i32) -> (i32, i32) {
    %c0_i32 = arith.constant 0 : i32
    %c0_i32_0 = arith.constant 0 : i32
    %c0_i32_1 = arith.constant 0 : i32
    return %c0_i32, %c0_i32_0 : i32, i32
  }
  func.func @transform_8(%arg0: i32) -> (i32, i32) {
    %c0_i32 = arith.constant 0 : i32
    %c0_i32_0 = arith.constant 0 : i32
    %c0_i32_1 = arith.constant 0 : i32
    return %c0_i32, %c0_i32_0 : i32, i32
  }
  func.func @transform_9(%arg0: i32) -> (i32, i32, i32) {
    %c0_i32 = arith.constant 0 : i32
    %c0_i32_0 = arith.constant 0 : i32
    %c0_i32_1 = arith.constant 0 : i32
    return %arg0, %c0_i32, %c0_i32_0 : i32, i32, i32
  }
}

module attributes {stable_mosaic.version = 11 : i64} {
  func.func @encoder_rows_kernel(%arg0: i32, %arg1: memref<16x128xf32, #tpu.memory_space<vmem>>, %arg2: memref<16x128xf32, #tpu.memory_space<vmem>>, %arg3: memref<128x256xbf16, #tpu.memory_space<vmem>>, %arg4: memref<1x256xf32, #tpu.memory_space<vmem>>, %arg5: memref<256x128xbf16, #tpu.memory_space<vmem>>, %arg6: memref<1x128xf32, #tpu.memory_space<vmem>>, %arg7: memref<1x128xf32, #tpu.memory_space<vmem>>, %arg8: memref<1x128xf32, #tpu.memory_space<vmem>>, %arg9: memref<1x128xf32, #tpu.memory_space<vmem>>, %arg10: memref<1x128xf32, #tpu.memory_space<vmem>>, %arg11: memref<128x256xbf16, #tpu.memory_space<vmem>>, %arg12: memref<1x256xf32, #tpu.memory_space<vmem>>, %arg13: memref<1x256xf32, #tpu.memory_space<vmem>>, %arg14: memref<1x256xf32, #tpu.memory_space<vmem>>, %arg15: memref<256x128xbf16, #tpu.memory_space<vmem>>, %arg16: memref<1x128xf32, #tpu.memory_space<vmem>>, %arg17: memref<1x128xf32, #tpu.memory_space<vmem>>, %arg18: memref<1x128xf32, #tpu.memory_space<vmem>>, %arg19: memref<16x128xf32, #tpu.memory_space<vmem>>) attributes {dimension_semantics = [#tpu.dimension_semantics<parallel>], iteration_bounds = array<i64: 1>, scalar_prefetch = 0 : i64, scratch_operands = 0 : i64, tpu.core_type = #tpu.core_type<tc>, window_params = [{transform_indices = @transform_0, window_bounds = array<i64: 16, 128>}, {transform_indices = @transform_1, window_bounds = array<i64: 16, 128>}, {pipeline_mode = #tpu.pipeline_mode<synchronous>, transform_indices = @transform_2, window_bounds = array<i64: 128, 256>}, {pipeline_mode = #tpu.pipeline_mode<synchronous>, transform_indices = @transform_3, window_bounds = array<i64: 1, 256>}, {pipeline_mode = #tpu.pipeline_mode<synchronous>, transform_indices = @transform_4, window_bounds = array<i64: 256, 128>}, {pipeline_mode = #tpu.pipeline_mode<synchronous>, transform_indices = @transform_5, window_bounds = array<i64: 1, 128>}, {pipeline_mode = #tpu.pipeline_mode<synchronous>, transform_indices = @transform_6, window_bounds = array<i64: 1, 128>}, {pipeline_mode = #tpu.pipeline_mode<synchronous>, transform_indices = @transform_7, window_bounds = array<i64: 1, 128>}, {pipeline_mode = #tpu.pipeline_mode<synchronous>, transform_indices = @transform_8, window_bounds = array<i64: 1, 128>}, {pipeline_mode = #tpu.pipeline_mode<synchronous>, transform_indices = @transform_9, window_bounds = array<i64: 1, 128>}, {pipeline_mode = #tpu.pipeline_mode<synchronous>, transform_indices = @transform_10, window_bounds = array<i64: 128, 256>}, {pipeline_mode = #tpu.pipeline_mode<synchronous>, transform_indices = @transform_11, window_bounds = array<i64: 1, 256>}, {pipeline_mode = #tpu.pipeline_mode<synchronous>, transform_indices = @transform_12, window_bounds = array<i64: 1, 256>}, {pipeline_mode = #tpu.pipeline_mode<synchronous>, transform_indices = @transform_13, window_bounds = array<i64: 1, 256>}, {pipeline_mode = #tpu.pipeline_mode<synchronous>, transform_indices = @transform_14, window_bounds = array<i64: 256, 128>}, {pipeline_mode = #tpu.pipeline_mode<synchronous>, transform_indices = @transform_15, window_bounds = array<i64: 1, 128>}, {pipeline_mode = #tpu.pipeline_mode<synchronous>, transform_indices = @transform_16, window_bounds = array<i64: 1, 128>}, {pipeline_mode = #tpu.pipeline_mode<synchronous>, transform_indices = @transform_17, window_bounds = array<i64: 1, 128>}, {transform_indices = @transform_18, window_bounds = array<i64: 16, 128>}]} {
    %c0 = arith.constant 0 : index
    %c0_0 = arith.constant 0 : index
    %0 = vector.load %arg3[%c0, %c0_0] : memref<128x256xbf16, #tpu.memory_space<vmem>>, vector<128x256xbf16>
    %c0_1 = arith.constant 0 : index
    %c0_2 = arith.constant 0 : index
    %1 = vector.load %arg4[%c0_1, %c0_2] : memref<1x256xf32, #tpu.memory_space<vmem>>, vector<1x256xf32>
    %c0_3 = arith.constant 0 : index
    %c0_4 = arith.constant 0 : index
    %2 = vector.load %arg5[%c0_3, %c0_4] : memref<256x128xbf16, #tpu.memory_space<vmem>>, vector<256x128xbf16>
    %c0_5 = arith.constant 0 : index
    %c0_6 = arith.constant 0 : index
    %3 = vector.load %arg6[%c0_5, %c0_6] : memref<1x128xf32, #tpu.memory_space<vmem>>, vector<1x128xf32>
    %c0_7 = arith.constant 0 : index
    %c0_8 = arith.constant 0 : index
    %4 = vector.load %arg7[%c0_7, %c0_8] : memref<1x128xf32, #tpu.memory_space<vmem>>, vector<1x128xf32>
    %c0_9 = arith.constant 0 : index
    %c0_10 = arith.constant 0 : index
    %5 = vector.load %arg8[%c0_9, %c0_10] : memref<1x128xf32, #tpu.memory_space<vmem>>, vector<1x128xf32>
    %c0_11 = arith.constant 0 : index
    %c0_12 = arith.constant 0 : index
    %6 = vector.load %arg9[%c0_11, %c0_12] : memref<1x128xf32, #tpu.memory_space<vmem>>, vector<1x128xf32>
    %c0_13 = arith.constant 0 : index
    %c0_14 = arith.constant 0 : index
    %7 = vector.load %arg10[%c0_13, %c0_14] : memref<1x128xf32, #tpu.memory_space<vmem>>, vector<1x128xf32>
    %c0_15 = arith.constant 0 : index
    %c0_16 = arith.constant 0 : index
    %8 = vector.load %arg11[%c0_15, %c0_16] : memref<128x256xbf16, #tpu.memory_space<vmem>>, vector<128x256xbf16>
    %c0_17 = arith.constant 0 : index
    %c0_18 = arith.constant 0 : index
    %9 = vector.load %arg12[%c0_17, %c0_18] : memref<1x256xf32, #tpu.memory_space<vmem>>, vector<1x256xf32>
    %c0_19 = arith.constant 0 : index
    %c0_20 = arith.constant 0 : index
    %10 = vector.load %arg13[%c0_19, %c0_20] : memref<1x256xf32, #tpu.memory_space<vmem>>, vector<1x256xf32>
    %c0_21 = arith.constant 0 : index
    %c0_22 = arith.constant 0 : index
    %11 = vector.load %arg14[%c0_21, %c0_22] : memref<1x256xf32, #tpu.memory_space<vmem>>, vector<1x256xf32>
    %c0_23 = arith.constant 0 : index
    %c0_24 = arith.constant 0 : index
    %12 = vector.load %arg15[%c0_23, %c0_24] : memref<256x128xbf16, #tpu.memory_space<vmem>>, vector<256x128xbf16>
    %c0_25 = arith.constant 0 : index
    %c0_26 = arith.constant 0 : index
    %13 = vector.load %arg16[%c0_25, %c0_26] : memref<1x128xf32, #tpu.memory_space<vmem>>, vector<1x128xf32>
    %c0_27 = arith.constant 0 : index
    %c0_28 = arith.constant 0 : index
    %14 = vector.load %arg17[%c0_27, %c0_28] : memref<1x128xf32, #tpu.memory_space<vmem>>, vector<1x128xf32>
    %c0_29 = arith.constant 0 : index
    %c0_30 = arith.constant 0 : index
    %15 = vector.load %arg18[%c0_29, %c0_30] : memref<1x128xf32, #tpu.memory_space<vmem>>, vector<1x128xf32>
    %c0_31 = arith.constant 0 : index
    %c0_32 = arith.constant 0 : index
    %16 = vector.load %arg1[%c0_31, %c0_32] : memref<16x128xf32, #tpu.memory_space<vmem>>, vector<16x128xf32>
    %c0_33 = arith.constant 0 : index
    %c0_34 = arith.constant 0 : index
    %17 = vector.load %arg2[%c0_33, %c0_34] : memref<16x128xf32, #tpu.memory_space<vmem>>, vector<16x128xf32>
    %18 = arith.addf %16, %17 : vector<16x128xf32>
    %cst = arith.constant dense<0.000000e+00> : vector<16xf32>
    %19 = vector.multi_reduction <add>, %18, %cst [1] : vector<16x128xf32> to vector<16xf32>
    %20 = vector.shape_cast %19 : vector<16xf32> to vector<16x1xf32>
    %cst_35 = arith.constant 1.280000e+02 : f32
    %21 = vector.broadcast %cst_35 : f32 to vector<16x1xf32>
    %22 = arith.divf %20, %21 : vector<16x1xf32>
    %23 = vector.broadcast %22 : vector<16x1xf32> to vector<16x128xf32>
    %24 = arith.subf %18, %23 : vector<16x128xf32>
    %25 = arith.mulf %24, %24 : vector<16x128xf32>
    %cst_36 = arith.constant dense<0.000000e+00> : vector<16xf32>
    %26 = vector.multi_reduction <add>, %25, %cst_36 [1] : vector<16x128xf32> to vector<16xf32>
    %27 = vector.shape_cast %26 : vector<16xf32> to vector<16x1xf32>
    %cst_37 = arith.constant 1.280000e+02 : f32
    %28 = vector.broadcast %cst_37 : f32 to vector<16x1xf32>
    %29 = arith.divf %27, %28 : vector<16x1xf32>
    %cst_38 = arith.constant 9.99999974E-6 : f32
    %30 = vector.broadcast %cst_38 : f32 to vector<16x1xf32>
    %31 = arith.addf %29, %30 : vector<16x1xf32>
    %32 = math.rsqrt %31 : vector<16x1xf32>
    %33 = vector.broadcast %32 : vector<16x1xf32> to vector<16x128xf32>
    %34 = arith.mulf %24, %33 : vector<16x128xf32>
    %35 = vector.broadcast %4 : vector<1x128xf32> to vector<16x128xf32>
    %36 = arith.mulf %34, %35 : vector<16x128xf32>
    %37 = vector.broadcast %5 : vector<1x128xf32> to vector<16x128xf32>
    %38 = arith.addf %36, %37 : vector<16x128xf32>
    %39 = arith.truncf %38 : vector<16x128xf32> to vector<16x128xbf16>
    %cst_39 = arith.constant dense<0.000000e+00> : vector<16x256xf32>
    %40 = tpu.matmul %39, %0, %cst_39 {dimension_numbers = #tpu.dot_dimension_numbers<[1], [0], [0], [1], [0, 0, 1, 1], [], []>} : vector<16x128xbf16>, vector<128x256xbf16>, vector<16x256xf32> -> vector<16x256xf32>
    %41 = vector.broadcast %1 : vector<1x256xf32> to vector<16x256xf32>
    %42 = arith.addf %40, %41 : vector<16x256xf32>
    %cst_40 = arith.constant 5.000000e-01 : f32
    %43 = vector.broadcast %cst_40 : f32 to vector<16x256xf32>
    %44 = arith.mulf %43, %42 : vector<16x256xf32>
    %cst_41 = arith.constant 0.707106769 : f32
    %45 = vector.broadcast %cst_41 : f32 to vector<16x256xf32>
    %46 = arith.mulf %42, %45 : vector<16x256xf32>
    %47 = math.erf %46 : vector<16x256xf32>
    %cst_42 = arith.constant 1.000000e+00 : f32
    %48 = vector.broadcast %cst_42 : f32 to vector<16x256xf32>
    %49 = arith.addf %48, %47 : vector<16x256xf32>
    %50 = arith.mulf %44, %49 : vector<16x256xf32>
    %51 = arith.truncf %50 : vector<16x256xf32> to vector<16x256xbf16>
    %cst_43 = arith.constant dense<0.000000e+00> : vector<16x128xf32>
    %52 = tpu.matmul %51, %2, %cst_43 {dimension_numbers = #tpu.dot_dimension_numbers<[1], [0], [0], [1], [0, 0, 1, 1], [], []>} : vector<16x256xbf16>, vector<256x128xbf16>, vector<16x128xf32> -> vector<16x128xf32>
    %53 = vector.broadcast %3 : vector<1x128xf32> to vector<16x128xf32>
    %54 = arith.addf %52, %53 : vector<16x128xf32>
    %55 = arith.addf %38, %54 : vector<16x128xf32>
    %cst_44 = arith.constant dense<0.000000e+00> : vector<16xf32>
    %56 = vector.multi_reduction <add>, %55, %cst_44 [1] : vector<16x128xf32> to vector<16xf32>
    %57 = vector.shape_cast %56 : vector<16xf32> to vector<16x1xf32>
    %cst_45 = arith.constant 1.280000e+02 : f32
    %58 = vector.broadcast %cst_45 : f32 to vector<16x1xf32>
    %59 = arith.divf %57, %58 : vector<16x1xf32>
    %60 = vector.broadcast %59 : vector<16x1xf32> to vector<16x128xf32>
    %61 = arith.subf %55, %60 : vector<16x128xf32>
    %62 = arith.mulf %61, %61 : vector<16x128xf32>
    %cst_46 = arith.constant dense<0.000000e+00> : vector<16xf32>
    %63 = vector.multi_reduction <add>, %62, %cst_46 [1] : vector<16x128xf32> to vector<16xf32>
    %64 = vector.shape_cast %63 : vector<16xf32> to vector<16x1xf32>
    %cst_47 = arith.constant 1.280000e+02 : f32
    %65 = vector.broadcast %cst_47 : f32 to vector<16x1xf32>
    %66 = arith.divf %64, %65 : vector<16x1xf32>
    %cst_48 = arith.constant 9.99999974E-6 : f32
    %67 = vector.broadcast %cst_48 : f32 to vector<16x1xf32>
    %68 = arith.addf %66, %67 : vector<16x1xf32>
    %69 = math.rsqrt %68 : vector<16x1xf32>
    %70 = vector.broadcast %69 : vector<16x1xf32> to vector<16x128xf32>
    %71 = arith.mulf %61, %70 : vector<16x128xf32>
    %72 = vector.broadcast %6 : vector<1x128xf32> to vector<16x128xf32>
    %73 = arith.mulf %71, %72 : vector<16x128xf32>
    %74 = vector.broadcast %7 : vector<1x128xf32> to vector<16x128xf32>
    %75 = arith.addf %73, %74 : vector<16x128xf32>
    %76 = arith.truncf %75 : vector<16x128xf32> to vector<16x128xbf16>
    %cst_49 = arith.constant dense<0.000000e+00> : vector<16x256xf32>
    %77 = tpu.matmul %76, %8, %cst_49 {dimension_numbers = #tpu.dot_dimension_numbers<[1], [0], [0], [1], [0, 0, 1, 1], [], []>} : vector<16x128xbf16>, vector<128x256xbf16>, vector<16x256xf32> -> vector<16x256xf32>
    %78 = vector.broadcast %9 : vector<1x256xf32> to vector<16x256xf32>
    %79 = arith.addf %77, %78 : vector<16x256xf32>
    %cst_50 = arith.constant 5.000000e-01 : f32
    %80 = vector.broadcast %cst_50 : f32 to vector<16x256xf32>
    %81 = arith.mulf %80, %79 : vector<16x256xf32>
    %cst_51 = arith.constant 0.707106769 : f32
    %82 = vector.broadcast %cst_51 : f32 to vector<16x256xf32>
    %83 = arith.mulf %79, %82 : vector<16x256xf32>
    %84 = math.erf %83 : vector<16x256xf32>
    %cst_52 = arith.constant 1.000000e+00 : f32
    %85 = vector.broadcast %cst_52 : f32 to vector<16x256xf32>
    %86 = arith.addf %85, %84 : vector<16x256xf32>
    %87 = arith.mulf %81, %86 : vector<16x256xf32>
    %cst_53 = arith.constant dense<0.000000e+00> : vector<16xf32>
    %88 = vector.multi_reduction <add>, %87, %cst_53 [1] : vector<16x256xf32> to vector<16xf32>
    %89 = vector.shape_cast %88 : vector<16xf32> to vector<16x1xf32>
    %cst_54 = arith.constant 2.560000e+02 : f32
    %90 = vector.broadcast %cst_54 : f32 to vector<16x1xf32>
    %91 = arith.divf %89, %90 : vector<16x1xf32>
    %92 = vector.broadcast %91 : vector<16x1xf32> to vector<16x256xf32>
    %93 = arith.subf %87, %92 : vector<16x256xf32>
    %94 = arith.mulf %93, %93 : vector<16x256xf32>
    %cst_55 = arith.constant dense<0.000000e+00> : vector<16xf32>
    %95 = vector.multi_reduction <add>, %94, %cst_55 [1] : vector<16x256xf32> to vector<16xf32>
    %96 = vector.shape_cast %95 : vector<16xf32> to vector<16x1xf32>
    %cst_56 = arith.constant 2.560000e+02 : f32
    %97 = vector.broadcast %cst_56 : f32 to vector<16x1xf32>
    %98 = arith.divf %96, %97 : vector<16x1xf32>
    %cst_57 = arith.constant 9.99999974E-6 : f32
    %99 = vector.broadcast %cst_57 : f32 to vector<16x1xf32>
    %100 = arith.addf %98, %99 : vector<16x1xf32>
    %101 = math.rsqrt %100 : vector<16x1xf32>
    %102 = vector.broadcast %101 : vector<16x1xf32> to vector<16x256xf32>
    %103 = arith.mulf %93, %102 : vector<16x256xf32>
    %104 = vector.broadcast %10 : vector<1x256xf32> to vector<16x256xf32>
    %105 = arith.mulf %103, %104 : vector<16x256xf32>
    %106 = vector.broadcast %11 : vector<1x256xf32> to vector<16x256xf32>
    %107 = arith.addf %105, %106 : vector<16x256xf32>
    %108 = arith.truncf %107 : vector<16x256xf32> to vector<16x256xbf16>
    %cst_58 = arith.constant dense<0.000000e+00> : vector<16x128xf32>
    %109 = tpu.matmul %108, %12, %cst_58 {dimension_numbers = #tpu.dot_dimension_numbers<[1], [0], [0], [1], [0, 0, 1, 1], [], []>} : vector<16x256xbf16>, vector<256x128xbf16>, vector<16x128xf32> -> vector<16x128xf32>
    %110 = vector.broadcast %13 : vector<1x128xf32> to vector<16x128xf32>
    %111 = arith.addf %109, %110 : vector<16x128xf32>
    %cst_59 = arith.constant 5.000000e-01 : f32
    %112 = vector.broadcast %cst_59 : f32 to vector<16x128xf32>
    %113 = arith.mulf %112, %111 : vector<16x128xf32>
    %cst_60 = arith.constant 0.707106769 : f32
    %114 = vector.broadcast %cst_60 : f32 to vector<16x128xf32>
    %115 = arith.mulf %111, %114 : vector<16x128xf32>
    %116 = math.erf %115 : vector<16x128xf32>
    %cst_61 = arith.constant 1.000000e+00 : f32
    %117 = vector.broadcast %cst_61 : f32 to vector<16x128xf32>
    %118 = arith.addf %117, %116 : vector<16x128xf32>
    %119 = arith.mulf %113, %118 : vector<16x128xf32>
    %cst_62 = arith.constant dense<0.000000e+00> : vector<16xf32>
    %120 = vector.multi_reduction <add>, %119, %cst_62 [1] : vector<16x128xf32> to vector<16xf32>
    %121 = vector.shape_cast %120 : vector<16xf32> to vector<16x1xf32>
    %cst_63 = arith.constant 1.280000e+02 : f32
    %122 = vector.broadcast %cst_63 : f32 to vector<16x1xf32>
    %123 = arith.divf %121, %122 : vector<16x1xf32>
    %124 = vector.broadcast %123 : vector<16x1xf32> to vector<16x128xf32>
    %125 = arith.subf %119, %124 : vector<16x128xf32>
    %126 = arith.mulf %125, %125 : vector<16x128xf32>
    %cst_64 = arith.constant dense<0.000000e+00> : vector<16xf32>
    %127 = vector.multi_reduction <add>, %126, %cst_64 [1] : vector<16x128xf32> to vector<16xf32>
    %128 = vector.shape_cast %127 : vector<16xf32> to vector<16x1xf32>
    %cst_65 = arith.constant 1.280000e+02 : f32
    %129 = vector.broadcast %cst_65 : f32 to vector<16x1xf32>
    %130 = arith.divf %128, %129 : vector<16x1xf32>
    %cst_66 = arith.constant 9.99999974E-6 : f32
    %131 = vector.broadcast %cst_66 : f32 to vector<16x1xf32>
    %132 = arith.addf %130, %131 : vector<16x1xf32>
    %133 = math.rsqrt %132 : vector<16x1xf32>
    %134 = vector.broadcast %133 : vector<16x1xf32> to vector<16x128xf32>
    %135 = arith.mulf %125, %134 : vector<16x128xf32>
    %136 = vector.broadcast %14 : vector<1x128xf32> to vector<16x128xf32>
    %137 = arith.mulf %135, %136 : vector<16x128xf32>
    %138 = vector.broadcast %15 : vector<1x128xf32> to vector<16x128xf32>
    %139 = arith.addf %137, %138 : vector<16x128xf32>
    %140 = arith.addf %139, %75 : vector<16x128xf32>
    %c0_67 = arith.constant 0 : index
    %c0_68 = arith.constant 0 : index
    %141 = vector.load %arg19[%c0_67, %c0_68] : memref<16x128xf32, #tpu.memory_space<vmem>>, vector<16x128xf32>
    tpu.vector_store %arg19[%c0_67, %c0_68], %140 {strides = array<i32>} : memref<16x128xf32, #tpu.memory_space<vmem>>, vector<16x128xf32>,
    return
  }
  func.func @transform_0(%arg0: i32) -> (i32, i32) {
    %c0_i32 = arith.constant 0 : i32
    %c0_i32_0 = arith.constant 0 : i32
    return %arg0, %c0_i32 : i32, i32
  }
  func.func @transform_1(%arg0: i32) -> (i32, i32) {
    %c0_i32 = arith.constant 0 : i32
    %c0_i32_0 = arith.constant 0 : i32
    return %arg0, %c0_i32 : i32, i32
  }
  func.func @transform_2(%arg0: i32) -> (i32, i32) {
    %c0_i32 = arith.constant 0 : i32
    %c0_i32_0 = arith.constant 0 : i32
    %c0_i32_1 = arith.constant 0 : i32
    return %c0_i32, %c0_i32_0 : i32, i32
  }
  func.func @transform_3(%arg0: i32) -> (i32, i32) {
    %c0_i32 = arith.constant 0 : i32
    %c0_i32_0 = arith.constant 0 : i32
    %c0_i32_1 = arith.constant 0 : i32
    return %c0_i32, %c0_i32_0 : i32, i32
  }
  func.func @transform_4(%arg0: i32) -> (i32, i32) {
    %c0_i32 = arith.constant 0 : i32
    %c0_i32_0 = arith.constant 0 : i32
    %c0_i32_1 = arith.constant 0 : i32
    return %c0_i32, %c0_i32_0 : i32, i32
  }
  func.func @transform_5(%arg0: i32) -> (i32, i32) {
    %c0_i32 = arith.constant 0 : i32
    %c0_i32_0 = arith.constant 0 : i32
    %c0_i32_1 = arith.constant 0 : i32
    return %c0_i32, %c0_i32_0 : i32, i32
  }
  func.func @transform_6(%arg0: i32) -> (i32, i32) {
    %c0_i32 = arith.constant 0 : i32
    %c0_i32_0 = arith.constant 0 : i32
    %c0_i32_1 = arith.constant 0 : i32
    return %c0_i32, %c0_i32_0 : i32, i32
  }
  func.func @transform_7(%arg0: i32) -> (i32, i32) {
    %c0_i32 = arith.constant 0 : i32
    %c0_i32_0 = arith.constant 0 : i32
    %c0_i32_1 = arith.constant 0 : i32
    return %c0_i32, %c0_i32_0 : i32, i32
  }
  func.func @transform_8(%arg0: i32) -> (i32, i32) {
    %c0_i32 = arith.constant 0 : i32
    %c0_i32_0 = arith.constant 0 : i32
    %c0_i32_1 = arith.constant 0 : i32
    return %c0_i32, %c0_i32_0 : i32, i32
  }
  func.func @transform_9(%arg0: i32) -> (i32, i32) {
    %c0_i32 = arith.constant 0 : i32
    %c0_i32_0 = arith.constant 0 : i32
    %c0_i32_1 = arith.constant 0 : i32
    return %c0_i32, %c0_i32_0 : i32, i32
  }
  func.func @transform_10(%arg0: i32) -> (i32, i32) {
    %c0_i32 = arith.constant 0 : i32
    %c0_i32_0 = arith.constant 0 : i32
    %c0_i32_1 = arith.constant 0 : i32
    return %c0_i32, %c0_i32_0 : i32, i32
  }
  func.func @transform_11(%arg0: i32) -> (i32, i32) {
    %c0_i32 = arith.constant 0 : i32
    %c0_i32_0 = arith.constant 0 : i32
    %c0_i32_1 = arith.constant 0 : i32
    return %c0_i32, %c0_i32_0 : i32, i32
  }
  func.func @transform_12(%arg0: i32) -> (i32, i32) {
    %c0_i32 = arith.constant 0 : i32
    %c0_i32_0 = arith.constant 0 : i32
    %c0_i32_1 = arith.constant 0 : i32
    return %c0_i32, %c0_i32_0 : i32, i32
  }
  func.func @transform_13(%arg0: i32) -> (i32, i32) {
    %c0_i32 = arith.constant 0 : i32
    %c0_i32_0 = arith.constant 0 : i32
    %c0_i32_1 = arith.constant 0 : i32
    return %c0_i32, %c0_i32_0 : i32, i32
  }
  func.func @transform_14(%arg0: i32) -> (i32, i32) {
    %c0_i32 = arith.constant 0 : i32
    %c0_i32_0 = arith.constant 0 : i32
    %c0_i32_1 = arith.constant 0 : i32
    return %c0_i32, %c0_i32_0 : i32, i32
  }
  func.func @transform_15(%arg0: i32) -> (i32, i32) {
    %c0_i32 = arith.constant 0 : i32
    %c0_i32_0 = arith.constant 0 : i32
    %c0_i32_1 = arith.constant 0 : i32
    return %c0_i32, %c0_i32_0 : i32, i32
  }
  func.func @transform_16(%arg0: i32) -> (i32, i32) {
    %c0_i32 = arith.constant 0 : i32
    %c0_i32_0 = arith.constant 0 : i32
    %c0_i32_1 = arith.constant 0 : i32
    return %c0_i32, %c0_i32_0 : i32, i32
  }
  func.func @transform_17(%arg0: i32) -> (i32, i32) {
    %c0_i32 = arith.constant 0 : i32
    %c0_i32_0 = arith.constant 0 : i32
    %c0_i32_1 = arith.constant 0 : i32
    return %c0_i32, %c0_i32_0 : i32, i32
  }
  func.func @transform_18(%arg0: i32) -> (i32, i32) {
    %c0_i32 = arith.constant 0 : i32
    %c0_i32_0 = arith.constant 0 : i32
    return %arg0, %c0_i32 : i32, i32
  }
}

</mosaic_0001>

<llo_original>
// kernel: _lambda_.2
$region0: #{_lambda_.2}
  #allocation0 [shape = 'u32[]', space=smem, size = 0x4, offset = 0x4, fixed_abs, tag = 'smem constant byte address 0x4 - core index']
  #allocation1 [shape = 'u32[72,128]{1,0:T(1,128)}', space=vmem, size = 0x9000, scoped, tag = 'internal scratch']
  %s0 = inlined_call_operand.vmem [shape: f32[2,8,128], index: 0, kind: input, shape index: {}]
  %s1 = inlined_call_operand.hbm [shape: bf16[128,128], index: 1, kind: input, shape index: {}]
  %s2 = inlined_call_operand.hbm [shape: bf16[128,128], index: 2, kind: input, shape index: {}]
  %s3 = inlined_call_operand.hbm [shape: bf16[128,128], index: 3, kind: input, shape index: {}]
  %s4 = inlined_call_operand.vmem [shape: f32[1,128], index: 4, kind: input, shape index: {}]
  %s5 = inlined_call_operand.hbm [shape: f32[1,128], index: 5, kind: input, shape index: {}]
  %s6 = inlined_call_operand.hbm [shape: f32[1,128], index: 6, kind: input, shape index: {}]
  %s7 = inlined_call_operand.hbm [shape: bf16[128,128], index: 7, kind: input, shape index: {}]
  %s8 = inlined_call_operand.hbm [shape: f32[1,128], index: 8, kind: input, shape index: {}]
  %s9 = inlined_call_operand.vmem [shape: f32[2,8,128], index: 9, kind: output, shape index: {}]
  %s10 = sld [smem:[#allocation0]]
  $region97: #{_lambda_.2} parent=0
    _
  %s12 = ssub.s32 1, %s10
  %s13 = scalar_select 0, %s12, %s10
  $region1: #{_lambda_.2} parent=0
    #allocation2 [shape = 'u8[32768]{0}', space=vmem, size = 0x8000, scoped, tag = 'input window, operand 1, single buffered']
    #allocation3 [shape = 's32[2]{0}', space=sflag, size = 0x8, scoped, tag = 'scoped memory for _lambda_.2']
    #allocation4 [shape = 'u8[32768]{0}', space=vmem, size = 0x8000, scoped, tag = 'input window, operand 2, single buffered']
    #allocation5 [shape = 's32[1]{0}', space=sflag, size = 0x4, scoped, tag = 'scoped memory for _lambda_.2']
    #allocation6 [shape = 'u8[32768]{0}', space=vmem, size = 0x8000, scoped, tag = 'input window, operand 3, single buffered']
    #allocation7 [shape = 'u8[512]{0}', space=vmem, size = 0x400, scoped, tag = 'input window, operand 5, single buffered']
    #allocation8 [shape = 's32[1]{0}', space=sflag, size = 0x4, scoped, tag = 'scoped memory for _lambda_.2']
    #allocation9 [shape = 'u8[512]{0}', space=vmem, size = 0x400, scoped, tag = 'input window, operand 6, single buffered']
    #allocation10 [shape = 'u8[32768]{0}', space=vmem, size = 0x8000, scoped, tag = 'input window, operand 7, single buffered']
    #allocation11 [shape = 's32[1]{0}', space=sflag, size = 0x4, scoped, tag = 'scoped memory for _lambda_.2']
    #allocation12 [shape = 'u8[512]{0}', space=vmem, size = 0x400, scoped, tag = 'input window, operand 8, single buffered']
    %14 = vsyncpa [#allocation3], 0
    %15 = vsyncpa [#allocation5], 0
    %16 = vsyncpa [#allocation8], 0
    %17 = vsyncpa [#allocation11], 0
    loop: start=0, step=1, limit=4
    $region2: #{_lambda_.2} parent=1 // loop_pre_header
      _
    $region3: #{_lambda_.2} parent=1 // loop_header
      %s19 = sphi 0, %s23
      %p20 = scmp.ge.s32.totalorder %s19, 4
      %s29 = sphi 0, %s31
      %s32 = sphi 0, %s29
      %s33 = sphi 0, %s32
      %s49 = sphi 0, %s33
      %s53 = sphi 0, %s53
      %s55 = sphi 0, %s53
      %s56 = sphi 0, %s55
      %s70 = sphi 0, %s56
      %s74 = sphi 0, %s74
      %s76 = sphi 0, %s74
      %s77 = sphi 0, %s76
      %s91 = sphi 0, %s77
      %s95 = sphi 0, %s95
      %s97 = sphi 0, %s95
      %s98 = sphi 0, %s97
      %s112 = sphi 0, %s98
      %s116 = sphi 0, %s116
      %s118 = sphi 0, %s116
      %s119 = sphi 0, %s118
      %s133 = sphi 0, %s119
      %s137 = sphi 0, %s137
      %s139 = sphi 0, %s137
      %s140 = sphi 0, %s139
      %s154 = sphi 0, %s140
      %s158 = sphi 0, %s158
      %s160 = sphi 0, %s158
      %s161 = sphi 0, %s160
      %s175 = sphi 0, %s161
      %s179 = sphi 0, %s179
      %s181 = sphi 0, %s179
      %s182 = sphi 0, %s181
      %s196 = sphi 0, %s182
      %s200 = sphi 0, %s200
      %s202 = sphi 0, %s200
      %s203 = sphi 0, %s202
      %s217 = sphi 0, %s203
      %s223 = sphi 0, %s225
      %s226 = sphi 0, %s223
      %s227 = sphi 0, %s226
      %s243 = sphi 0, %s227
    $region4: #{_lambda_.2} parent=1 // loop_header_branch
      %22 = sbr.rel (%p20) target = $region8
    $region5: #{_lambda_.2} parent=1 // loop_body
      %s24 = ssub.s32 %s19, 1
      %s25 = ssub.s32 %s19, 2
      %s26 = sadd.s32 %s19, 1
      %s27 = ssub.s32 %s19, %s26
      %p28 = scmp.eq.s32.totalorder %s27, 0
      %s30 = sadd.s32 %s29, 1
      %s31 = scalar_select %p28, %s29, %s30
      %p34 = pneg %p28
      %p35 = scmp.eq.s32.totalorder %s19, 1
      %p36 = por %p34, %p35
      %p37 = scmp.ne.s32.totalorder %s29, %s32
      %p38 = scmp.eq.s32.totalorder %s19, 0
      %p39 = por %p37, %p38
      %p40 = scmp.ne.s32.totalorder %s29, %s32
      %p41 = scmp.eq.s32.totalorder %s24, 1
      %p42 = por %p40, %p41
      %p43 = scmp.ne.s32.totalorder %s32, %s33
      %p44 = scmp.eq.s32.totalorder %s24, 0
      %p45 = por %p43, %p44
      %p46 = scmp.ne.s32.totalorder %s32, %s33
      %p47 = scmp.eq.s32.totalorder %s25, 1
      %p48 = por %p46, %p47
      %p50 = scmp.ne.s32.totalorder %s33, %s49
      %p51 = scmp.eq.s32.totalorder %s25, 0
      %p52 = por %p50, %p51
      %s54 = sadd.s32 %s53, 1
      %p57 = scmp.eq.s32.totalorder %s19, 1
      %p58 = scmp.ne.s32.totalorder %s53, %s55
      %p59 = scmp.eq.s32.totalorder %s19, 0
      %p60 = por %p58, %p59
      %p61 = scmp.ne.s32.totalorder %s53, %s55
      %p62 = scmp.eq.s32.totalorder %s24, 1
      %p63 = por %p61, %p62
      %p64 = scmp.ne.s32.totalorder %s55, %s56
      %p65 = scmp.eq.s32.totalorder %s24, 0
      %p66 = por %p64, %p65
      %p67 = scmp.ne.s32.totalorder %s55, %s56
      %p68 = scmp.eq.s32.totalorder %s25, 1
      %p69 = por %p67, %p68
      %p71 = scmp.ne.s32.totalorder %s56, %s70
      %p72 = scmp.eq.s32.totalorder %s25, 0
      %p73 = por %p71, %p72
      %s75 = sadd.s32 %s74, 1
      %p78 = scmp.eq.s32.totalorder %s19, 1
      %p79 = scmp.ne.s32.totalorder %s74, %s76
      %p80 = scmp.eq.s32.totalorder %s19, 0
      %p81 = por %p79, %p80
      %p82 = scmp.ne.s32.totalorder %s74, %s76
      %p83 = scmp.eq.s32.totalorder %s24, 1
      %p84 = por %p82, %p83
      %p85 = scmp.ne.s32.totalorder %s76, %s77
      %p86 = scmp.eq.s32.totalorder %s24, 0
      %p87 = por %p85, %p86
      %p88 = scmp.ne.s32.totalorder %s76, %s77
      %p89 = scmp.eq.s32.totalorder %s25, 1
      %p90 = por %p88, %p89
      %p92 = scmp.ne.s32.totalorder %s77, %s91
      %p93 = scmp.eq.s32.totalorder %s25, 0
      %p94 = por %p92, %p93
      %s96 = sadd.s32 %s95, 1
      %p99 = scmp.eq.s32.totalorder %s19, 1
      %p100 = scmp.ne.s32.totalorder %s95, %s97
      %p101 = scmp.eq.s32.totalorder %s19, 0
      %p102 = por %p100, %p101
      %p103 = scmp.ne.s32.totalorder %s95, %s97
      %p104 = scmp.eq.s32.totalorder %s24, 1
      %p105 = por %p103, %p104
      %p106 = scmp.ne.s32.totalorder %s97, %s98
      %p107 = scmp.eq.s32.totalorder %s24, 0
      %p108 = por %p106, %p107
      %p109 = scmp.ne.s32.totalorder %s97, %s98
      %p110 = scmp.eq.s32.totalorder %s25, 1
      %p111 = por %p109, %p110
      %p113 = scmp.ne.s32.totalorder %s98, %s112
      %p114 = scmp.eq.s32.totalorder %s25, 0
      %p115 = por %p113, %p114
      %s117 = sadd.s32 %s116, 1
      %p120 = scmp.eq.s32.totalorder %s19, 1
      %p121 = scmp.ne.s32.totalorder %s116, %s118
      %p122 = scmp.eq.s32.totalorder %s19, 0
      %p123 = por %p121, %p122
      %p124 = scmp.ne.s32.totalorder %s116, %s118
      %p125 = scmp.eq.s32.totalorder %s24, 1
      %p126 = por %p124, %p125
      %p127 = scmp.ne.s32.totalorder %s118, %s119
      %p128 = scmp.eq.s32.totalorder %s24, 0
      %p129 = por %p127, %p128
      %p130 = scmp.ne.s32.totalorder %s118, %s119
      %p131 = scmp.eq.s32.totalorder %s25, 1
      %p132 = por %p130, %p131
      %p134 = scmp.ne.s32.totalorder %s119, %s133
      %p135 = scmp.eq.s32.totalorder %s25, 0
      %p136 = por %p134, %p135
      %s138 = sadd.s32 %s137, 1
      %p141 = scmp.eq.s32.totalorder %s19, 1
      %p142 = scmp.ne.s32.totalorder %s137, %s139
      %p143 = scmp.eq.s32.totalorder %s19, 0
      %p144 = por %p142, %p143
      %p145 = scmp.ne.s32.totalorder %s137, %s139
      %p146 = scmp.eq.s32.totalorder %s24, 1
      %p147 = por %p145, %p146
      %p148 = scmp.ne.s32.totalorder %s139, %s140
      %p149 = scmp.eq.s32.totalorder %s24, 0
      %p150 = por %p148, %p149
      %p151 = scmp.ne.s32.totalorder %s139, %s140
      %p152 = scmp.eq.s32.totalorder %s25, 1
      %p153 = por %p151, %p152
      %p155 = scmp.ne.s32.totalorder %s140, %s154
      %p156 = scmp.eq.s32.totalorder %s25, 0
      %p157 = por %p155, %p156
      %s159 = sadd.s32 %s158, 1
      %p162 = scmp.eq.s32.totalorder %s19, 1
      %p163 = scmp.ne.s32.totalorder %s158, %s160
      %p164 = scmp.eq.s32.totalorder %s19, 0
      %p165 = por %p163, %p164
      %p166 = scmp.ne.s32.totalorder %s158, %s160
      %p167 = scmp.eq.s32.totalorder %s24, 1
      %p168 = por %p166, %p167
      %p169 = scmp.ne.s32.totalorder %s160, %s161
      %p170 = scmp.eq.s32.totalorder %s24, 0
      %p171 = por %p169, %p170
      %p172 = scmp.ne.s32.totalorder %s160, %s161
      %p173 = scmp.eq.s32.totalorder %s25, 1
      %p174 = por %p172, %p173
      %p176 = scmp.ne.s32.totalorder %s161, %s175
      %p177 = scmp.eq.s32.totalorder %s25, 0
      %p178 = por %p176, %p177
      %s180 = sadd.s32 %s179, 1
      %p183 = scmp.eq.s32.totalorder %s19, 1
      %p184 = scmp.ne.s32.totalorder %s179, %s181
      %p185 = scmp.eq.s32.totalorder %s19, 0
      %p186 = por %p184, %p185
      %p187 = scmp.ne.s32.totalorder %s179, %s181
      %p188 = scmp.eq.s32.totalorder %s24, 1
      %p189 = por %p187, %p188
      %p190 = scmp.ne.s32.totalorder %s181, %s182
      %p191 = scmp.eq.s32.totalorder %s24, 0
      %p192 = por %p190, %p191
      %p193 = scmp.ne.s32.totalorder %s181, %s182
      %p194 = scmp.eq.s32.totalorder %s25, 1
      %p195 = por %p193, %p194
      %p197 = scmp.ne.s32.totalorder %s182, %s196
      %p198 = scmp.eq.s32.totalorder %s25, 0
      %p199 = por %p197, %p198
      %s201 = sadd.s32 %s200, 1
      %p204 = scmp.eq.s32.totalorder %s19, 1
      %p205 = scmp.ne.s32.totalorder %s200, %s202
      %p206 = scmp.eq.s32.totalorder %s19, 0
      %p207 = por %p205, %p206
      %p208 = scmp.ne.s32.totalorder %s200, %s202
      %p209 = scmp.eq.s32.totalorder %s24, 1
      %p210 = por %p208, %p209
      %p211 = scmp.ne.s32.totalorder %s202, %s203
      %p212 = scmp.eq.s32.totalorder %s24, 0
      %p213 = por %p211, %p212
      %p214 = scmp.ne.s32.totalorder %s202, %s203
      %p215 = scmp.eq.s32.totalorder %s25, 1
      %p216 = por %p214, %p215
      %p218 = scmp.ne.s32.totalorder %s203, %s217
      %p219 = scmp.eq.s32.totalorder %s25, 0
      %p220 = por %p218, %p219
      %s221 = ssub.s32 %s19, %s26
      %p222 = scmp.eq.s32.totalorder %s221, 0
      %s224 = sadd.s32 %s223, 1
      %s225 = scalar_select %p222, %s223, %s224
      %p228 = pneg %p222
      %p229 = scmp.eq.s32.totalorder %s19, 1
      %p230 = por %p228, %p229
      %p231 = scmp.ne.s32.totalorder %s223, %s226
      %p232 = scmp.eq.s32.totalorder %s19, 0
      %p233 = por %p231, %p232
      %p234 = scmp.ne.s32.totalorder %s223, %s226
      %p235 = scmp.eq.s32.totalorder %s24, 1
      %p236 = por %p234, %p235
      %p237 = scmp.ne.s32.totalorder %s226, %s227
      %p238 = scmp.eq.s32.totalorder %s24, 0
      %p239 = por %p237, %p238
      %p240 = scmp.ne.s32.totalorder %s226, %s227
      %p241 = scmp.eq.s32.totalorder %s25, 1
      %p242 = por %p240, %p241
      %p244 = scmp.ne.s32.totalorder %s227, %s243
      %p245 = scmp.eq.s32.totalorder %s25, 0
      %p246 = por %p244, %p245
      %p247 = scmp.le.s32.totalorder 1, %s19
      %p248 = scmp.lt.s32.totalorder %s19, 3
      %p249 = pnand %p247, %p248
      %p250 = pneg %p249
      // Predicated region
      $region9: #{_lambda_.2} parent=5 // pred_check
        _
      $region10: #{_lambda_.2} parent=5 // pred_check_branch
        %252 = sbr.rel (%p249) target = $region12
      $region11: #{_lambda_.2} parent=5 // pred_region
        %s253 = ssub.s32 %s19, 1
        // Predicated region
        $region13: #{_lambda_.2} parent=11 // pred_check
          %p254 = pneg %p66
        $region14: #{_lambda_.2} parent=11 // pred_check_branch
          %256 = sbr.rel (%p254) target = $region16
        $region15: #{_lambda_.2} parent=11 // pred_region
          %258 = vsyncadd [#allocation3], 0
          %s259 = sshll.u32 %s1, 4
          %s260 = int_to_ptr.hbm [resolvable:$true] %s259
          %s261 = sshll.u32 [#allocation2], 4
          %s262 = int_to_ptr.vmem [resolvable:$true] %s261
          %267 = dma.hbm_to_vmem [thread:$0]  %s260, 1024, %s262, [#allocation3], 64, 64, 4
        $region16: #{_lambda_.2} parent=11 // pred_fallthru
          _
        // Predicated region
        $region17: #{_lambda_.2} parent=11 // pred_check
          %p268 = pneg %p87
        $region18: #{_lambda_.2} parent=11 // pred_check_branch
          %270 = sbr.rel (%p268) target = $region20
        $region19: #{_lambda_.2} parent=11 // pred_region
          %272 = vsyncadd [#allocation5], 0
          %s273 = sshll.u32 %s2, 4
          %s274 = int_to_ptr.hbm [resolvable:$true] %s273
          %s275 = sshll.u32 [#allocation4], 4
          %s276 = int_to_ptr.vmem [resolvable:$true] %s275
          %281 = dma.hbm_to_vmem [thread:$0]  %s274, 1024, %s276, [#allocation5], 64, 64, 4
        $region20: #{_lambda_.2} parent=11 // pred_fallthru
          _
        // Predicated region
        $region21: #{_lambda_.2} parent=11 // pred_check
          %p282 = pneg %p108
        $region22: #{_lambda_.2} parent=11 // pred_check_branch
          %284 = sbr.rel (%p282) target = $region24
        $region23: #{_lambda_.2} parent=11 // pred_region
          %286 = vsyncadd [#allocation5], 0
          %s287 = sshll.u32 %s3, 4
          %s288 = int_to_ptr.hbm [resolvable:$true] %s287
          %s289 = sshll.u32 [#allocation6], 4
          %s290 = int_to_ptr.vmem [resolvable:$true] %s289
          %295 = dma.hbm_to_vmem [thread:$0]  %s288, 1024, %s290, [#allocation5], 64, 64, 4
        $region24: #{_lambda_.2} parent=11 // pred_fallthru
          _
        // Predicated region
        $region25: #{_lambda_.2} parent=11 // pred_check
          %p296 = pneg %p129
        $region26: #{_lambda_.2} parent=11 // pred_check_branch
          %298 = sbr.rel (%p296) target = $region28
        $region27: #{_lambda_.2} parent=11 // pred_region
          _
        $region28: #{_lambda_.2} parent=11 // pred_fallthru
          _
        // Predicated region
        $region29: #{_lambda_.2} parent=11 // pred_check
          %p299 = pneg %p150
        $region30: #{_lambda_.2} parent=11 // pred_check_branch
          %301 = sbr.rel (%p299) target = $region32
        $region31: #{_lambda_.2} parent=11 // pred_region
          %303 = vsyncadd [#allocation8], 0
          %s305 = sshll.u32 %s5, 4
          %s306 = int_to_ptr.hbm [resolvable:$true] %s305
          %s307 = sshll.u32 [#allocation7], 4
          %s308 = int_to_ptr.vmem [resolvable:$true] %s307
          %310 = dma.hbm_to_vmem [thread:$0]  %s306, 16, %s308, [#allocation8]
        $region32: #{_lambda_.2} parent=11 // pred_fallthru
          _
        // Predicated region
        $region33: #{_lambda_.2} parent=11 // pred_check
          %p311 = pneg %p171
        $region34: #{_lambda_.2} parent=11 // pred_check_branch
          %313 = sbr.rel (%p311) target = $region36
        $region35: #{_lambda_.2} parent=11 // pred_region
          %315 = vsyncadd [#allocation8], 0
          %s317 = sshll.u32 %s6, 4
          %s318 = int_to_ptr.hbm [resolvable:$true] %s317
          %s319 = sshll.u32 [#allocation9], 4
          %s320 = int_to_ptr.vmem [resolvable:$true] %s319
          %322 = dma.hbm_to_vmem [thread:$0]  %s318, 16, %s320, [#allocation8]
        $region36: #{_lambda_.2} parent=11 // pred_fallthru
          _
        // Predicated region
        $region37: #{_lambda_.2} parent=11 // pred_check
          %p323 = pneg %p192
        $region38: #{_lambda_.2} parent=11 // pred_check_branch
          %325 = sbr.rel (%p323) target = $region40
        $region39: #{_lambda_.2} parent=11 // pred_region
          %327 = vsyncadd [#allocation11], 0
          %s328 = sshll.u32 %s7, 4
          %s329 = int_to_ptr.hbm [resolvable:$true] %s328
          %s330 = sshll.u32 [#allocation10], 4
          %s331 = int_to_ptr.vmem [resolvable:$true] %s330
          %336 = dma.hbm_to_vmem [thread:$0]  %s329, 1024, %s331, [#allocation11], 64, 64, 4
        $region40: #{_lambda_.2} parent=11 // pred_fallthru
          _
        // Predicated region
        $region41: #{_lambda_.2} parent=11 // pred_check
          %p337 = pneg %p213
        $region42: #{_lambda_.2} parent=11 // pred_check_branch
          %339 = sbr.rel (%p337) target = $region44
        $region43: #{_lambda_.2} parent=11 // pred_region
          %341 = vsyncadd [#allocation11], 0
          %s343 = sshll.u32 %s8, 4
          %s344 = int_to_ptr.hbm [resolvable:$true] %s343
          %s345 = sshll.u32 [#allocation12], 4
          %s346 = int_to_ptr.vmem [resolvable:$true] %s345
          %348 = dma.hbm_to_vmem [thread:$0]  %s344, 16, %s346, [#allocation11]
        $region44: #{_lambda_.2} parent=11 // pred_fallthru
          _
      $region12: #{_lambda_.2} parent=5 // pred_fallthru
        _
      %p349 = scmp.lt.s32.totalorder %s19, 2
      // Predicated region
      $region45: #{_lambda_.2} parent=5 // pred_check
        %p350 = pneg %p349
      $region46: #{_lambda_.2} parent=5 // pred_check_branch
        %352 = sbr.rel (%p350) target = $region48
      $region47: #{_lambda_.2} parent=5 // pred_region
        // Predicated region
        $region49: #{_lambda_.2} parent=47 // pred_check
          %p353 = pneg %p39
        $region50: #{_lambda_.2} parent=47 // pred_check_branch
          %355 = sbr.rel (%p353) target = $region52
        $region51: #{_lambda_.2} parent=47 // pred_region
          %p356 = scmp.lt.s32.totalorder %s19, 1
          %s357 = scalar_select %p356, %s19, 1
          %s358 = smul.addr %s357, 8
          %s359 = scalar_lea.vmem %s0, %s358
        $region52: #{_lambda_.2} parent=47 // pred_fallthru
          _
      $region48: #{_lambda_.2} parent=5 // pred_fallthru
        _
      %p360 = scmp.le.s32.totalorder 1, %s19
      %p361 = scmp.lt.s32.totalorder %s19, 3
      %p362 = pnand %p360, %p361
      %p363 = pneg %p362
      // Predicated region
      $region53: #{_lambda_.2} parent=5 // pred_check
        _
      $region54: #{_lambda_.2} parent=5 // pred_check_branch
        %365 = sbr.rel (%p362) target = $region56
      $region55: #{_lambda_.2} parent=5 // pred_region
        %s366 = ssub.s32 %s19, 1
        // Predicated region
        $region57: #{_lambda_.2} parent=55 // pred_check
          %p367 = pneg %p66
        $region58: #{_lambda_.2} parent=55 // pred_check_branch
          %369 = sbr.rel (%p367) target = $region60
        $region59: #{_lambda_.2} parent=55 // pred_region
          %371 = dma.done [#allocation3], 1024
        $region60: #{_lambda_.2} parent=55 // pred_fallthru
          _
        // Predicated region
        $region61: #{_lambda_.2} parent=55 // pred_check
          %p372 = pneg %p87
        $region62: #{_lambda_.2} parent=55 // pred_check_branch
          %374 = sbr.rel (%p372) target = $region64
        $region63: #{_lambda_.2} parent=55 // pred_region
          %376 = dma.done [#allocation5], 1024
        $region64: #{_lambda_.2} parent=55 // pred_fallthru
          _
        // Predicated region
        $region65: #{_lambda_.2} parent=55 // pred_check
          %p377 = pneg %p108
        $region66: #{_lambda_.2} parent=55 // pred_check_branch
          %379 = sbr.rel (%p377) target = $region68
        $region67: #{_lambda_.2} parent=55 // pred_region
          %381 = dma.done [#allocation5], 1024
        $region68: #{_lambda_.2} parent=55 // pred_fallthru
          _
        // Predicated region
        $region69: #{_lambda_.2} parent=55 // pred_check
          %p382 = pneg %p150
        $region70: #{_lambda_.2} parent=55 // pred_check_branch
          %384 = sbr.rel (%p382) target = $region72
        $region71: #{_lambda_.2} parent=55 // pred_region
          %386 = dma.done [#allocation8], 16
        $region72: #{_lambda_.2} parent=55 // pred_fallthru
          _
        // Predicated region
        $region73: #{_lambda_.2} parent=55 // pred_check
          %p387 = pneg %p171
        $region74: #{_lambda_.2} parent=55 // pred_check_branch
          %389 = sbr.rel (%p387) target = $region76
        $region75: #{_lambda_.2} parent=55 // pred_region
          %391 = dma.done [#allocation8], 16
        $region76: #{_lambda_.2} parent=55 // pred_fallthru
          _
        // Predicated region
        $region77: #{_lambda_.2} parent=55 // pred_check
          %p392 = pneg %p192
        $region78: #{_lambda_.2} parent=55 // pred_check_branch
          %394 = sbr.rel (%p392) target = $region80
        $region79: #{_lambda_.2} parent=55 // pred_region
          %396 = dma.done [#allocation11], 1024
        $region80: #{_lambda_.2} parent=55 // pred_fallthru
          _
        // Predicated region
        $region81: #{_lambda_.2} parent=55 // pred_check
          %p397 = pneg %p213
        $region82: #{_lambda_.2} parent=55 // pred_check_branch
          %399 = sbr.rel (%p397) target = $region84
        $region83: #{_lambda_.2} parent=55 // pred_region
          %401 = dma.done [#allocation11], 16
        $region84: #{_lambda_.2} parent=55 // pred_fallthru
          _
        %p402 = scmp.lt.s32.totalorder %s24, 1
        %s403 = scalar_select %p402, %s24, 1
        %s404 = smul.addr %s403, 8
        %s405 = scalar_lea.vmem %s0, %s404
        %p406 = pneg %p45
        %p407 = pneg %p42
        %p408 = pneg %p66
        %p409 = pneg %p63
        %p410 = pneg %p87
        %p411 = pneg %p84
        %p412 = pneg %p108
        %p413 = pneg %p105
        %p414 = pneg %p129
        %p415 = pneg %p126
        %p416 = pneg %p150
        %p417 = pneg %p147
        %p418 = pneg %p171
        %p419 = pneg %p168
        %p420 = pneg %p192
        %p421 = pneg %p189
        %p422 = pneg %p213
        %p423 = pneg %p210
        %p424 = pneg %p239
        %p425 = pneg %p236
        %p426 = scmp.lt.s32.totalorder %s24, 1
        %s427 = scalar_select %p426, %s24, 1
        %s428 = smul.addr %s427, 8
        %s429 = scalar_lea.vmem %s9, %s428
        %p430 = scmp.lt.s32.totalorder %s24, 1
        %s431 = scalar_select %p430, %s24, 1
        %s432 = smul.addr %s431, 8
        %s433 = scalar_lea.vmem %s0, %s432
        %p434 = scmp.lt.s32.totalorder %s24, 1
        %s435 = scalar_select %p434, %s24, 1
        %s436 = smul.addr %s435, 8
        %s437 = scalar_lea.vmem %s9, %s436
        %v439 = vld [vmem:[%s433] sm:$0xff]
        %v440 = vld [vmem:[#allocation2] sm:$0xf]
        %v441 = vld [vmem:[#allocation2 + $0x4] sm:$0xf]
        %v442 = vld [vmem:[#allocation2 + $0x8] sm:$0xf]
        %v443 = vld [vmem:[#allocation2 + $0xc] sm:$0xf]
        %v444 = vld [vmem:[#allocation2 + $0x10] sm:$0xf]
        %v445 = vld [vmem:[#allocation2 + $0x14] sm:$0xf]
        %v446 = vld [vmem:[#allocation2 + $0x18] sm:$0xf]
        %v447 = vld [vmem:[#allocation2 + $0x1c] sm:$0xf]
        %v448 = vld [vmem:[#allocation2 + $0x20] sm:$0xf]
        %v449 = vld [vmem:[#allocation2 + $0x24] sm:$0xf]
        %v450 = vld [vmem:[#allocation2 + $0x28] sm:$0xf]
        %v451 = vld [vmem:[#allocation2 + $0x2c] sm:$0xf]
        %v452 = vld [vmem:[#allocation2 + $0x30] sm:$0xf]
        %v453 = vld [vmem:[#allocation2 + $0x34] sm:$0xf]
        %v454 = vld [vmem:[#allocation2 + $0x38] sm:$0xf]
        %v455 = vld [vmem:[#allocation2 + $0x3c] sm:$0xf]
        %v456 = vld [vmem:[#allocation4] sm:$0xf]
        %v457 = vld [vmem:[#allocation4 + $0x4] sm:$0xf]
        %v458 = vld [vmem:[#allocation4 + $0x8] sm:$0xf]
        %v459 = vld [vmem:[#allocation4 + $0xc] sm:$0xf]
        %v460 = vld [vmem:[#allocation4 + $0x10] sm:$0xf]
        %v461 = vld [vmem:[#allocation4 + $0x14] sm:$0xf]
        %v462 = vld [vmem:[#allocation4 + $0x18] sm:$0xf]
        %v463 = vld [vmem:[#allocation4 + $0x1c] sm:$0xf]
        %v464 = vld [vmem:[#allocation4 + $0x20] sm:$0xf]
        %v465 = vld [vmem:[#allocation4 + $0x24] sm:$0xf]
        %v466 = vld [vmem:[#allocation4 + $0x28] sm:$0xf]
        %v467 = vld [vmem:[#allocation4 + $0x2c] sm:$0xf]
        %v468 = vld [vmem:[#allocation4 + $0x30] sm:$0xf]
        %v469 = vld [vmem:[#allocation4 + $0x34] sm:$0xf]
        %v470 = vld [vmem:[#allocation4 + $0x38] sm:$0xf]
        %v471 = vld [vmem:[#allocation4 + $0x3c] sm:$0xf]
        %v472 = vld [vmem:[#allocation6] sm:$0xf]
        %v473 = vld [vmem:[#allocation6 + $0x4] sm:$0xf]
        %v474 = vld [vmem:[#allocation6 + $0x8] sm:$0xf]
        %v475 = vld [vmem:[#allocation6 + $0xc] sm:$0xf]
        %v476 = vld [vmem:[#allocation6 + $0x10] sm:$0xf]
        %v477 = vld [vmem:[#allocation6 + $0x14] sm:$0xf]
        %v478 = vld [vmem:[#allocation6 + $0x18] sm:$0xf]
        %v479 = vld [vmem:[#allocation6 + $0x1c] sm:$0xf]
        %v480 = vld [vmem:[#allocation6 + $0x20] sm:$0xf]
        %v481 = vld [vmem:[#allocation6 + $0x24] sm:$0xf]
        %v482 = vld [vmem:[#allocation6 + $0x28] sm:$0xf]
        %v483 = vld [vmem:[#allocation6 + $0x2c] sm:$0xf]
        %v484 = vld [vmem:[#allocation6 + $0x30] sm:$0xf]
        %v485 = vld [vmem:[#allocation6 + $0x34] sm:$0xf]
        %v486 = vld [vmem:[#allocation6 + $0x38] sm:$0xf]
        %v487 = vld [vmem:[#allocation6 + $0x3c] sm:$0xf]
        %v488 = vld [vmem:[%s4] sm:$0x1]
        %v489 = vld [vmem:[#allocation7] sm:$0x1]
        %v490 = vld [vmem:[#allocation9] sm:$0x1]
        %v491 = vld [vmem:[#allocation10] sm:$0xf]
        %v492 = vld [vmem:[#allocation10 + $0x4] sm:$0xf]
        %v493 = vld [vmem:[#allocation10 + $0x8] sm:$0xf]
        %v494 = vld [vmem:[#allocation10 + $0xc] sm:$0xf]
        %v495 = vld [vmem:[#allocation10 + $0x10] sm:$0xf]
        %v496 = vld [vmem:[#allocation10 + $0x14] sm:$0xf]
        %v497 = vld [vmem:[#allocation10 + $0x18] sm:$0xf]
        %v498 = vld [vmem:[#allocation10 + $0x1c] sm:$0xf]
        %v499 = vld [vmem:[#allocation10 + $0x20] sm:$0xf]
        %v500 = vld [vmem:[#allocation10 + $0x24] sm:$0xf]
        %v501 = vld [vmem:[#allocation10 + $0x28] sm:$0xf]
        %v502 = vld [vmem:[#allocation10 + $0x2c] sm:$0xf]
        %v503 = vld [vmem:[#allocation10 + $0x30] sm:$0xf]
        %v504 = vld [vmem:[#allocation10 + $0x34] sm:$0xf]
        %v505 = vld [vmem:[#allocation10 + $0x38] sm:$0xf]
        %v506 = vld [vmem:[#allocation10 + $0x3c] sm:$0xf]
        %v507 = vld [vmem:[#allocation12] sm:$0x1]
        %v508 = vpack.c.bf16 %v439, %v439
        %v510 = vperm.slane %v488, 0
        %v528 = vunpack.c.l.b16 %v440
        %v529 = vunpack.c.l.b16 %v441
        %v530 = vunpack.c.l.b16 %v442
        %v531 = vunpack.c.l.b16 %v443
        %v532 = vunpack.c.l.b16 %v444
        %v533 = vunpack.c.l.b16 %v445
        %v534 = vunpack.c.l.b16 %v446
        %v535 = vunpack.c.l.b16 %v447
        %v536 = vunpack.c.l.b16 %v448
        %v537 = vunpack.c.l.b16 %v449
        %v538 = vunpack.c.l.b16 %v450
        %v539 = vunpack.c.l.b16 %v451
        %v540 = vunpack.c.l.b16 %v452
        %v541 = vunpack.c.l.b16 %v453
        %v542 = vunpack.c.l.b16 %v454
        %v543 = vunpack.c.l.b16 %v455
        %v544 = vpack.c.b16 %v529, %v528
        %v545 = vpack.c.b16 %v531, %v530
        %v546 = vpack.c.b16 %v533, %v532
        %v547 = vpack.c.b16 %v535, %v534
        %v548 = vpack.c.b16 %v537, %v536
        %v549 = vpack.c.b16 %v539, %v538
        %v550 = vpack.c.b16 %v541, %v540
        %v551 = vpack.c.b16 %v543, %v542
        %560 = vmatpush.bf16.msra.mxu0 %v551
        %561 = vmatpush.bf16.msra.mxu0 %v550
        %562 = vmatpush.bf16.msra.mxu0 %v549
        %563 = vmatpush.bf16.msra.mxu0 %v548
        %564 = vmatpush.bf16.msra.mxu0 %v547
        %565 = vmatpush.bf16.msra.mxu0 %v546
        %566 = vmatpush.bf16.msra.mxu0 %v545
        %567 = vmatpush.bf16.msra.mxu0 %v544
        %568 = vmatmul.bf16.gmra.mxu0 %v508
        %v569 = vpop.f32.mrf.mxu0
        %v570 = vadd.f32 %v510, %v569
        %v571 = vpop.f32.mrf.mxu0
        %572 = vdwg.mxu0
        %v574 = vperm.slane %v489, 0
        %v592 = vunpack.c.l.b16 %v456
        %v593 = vunpack.c.l.b16 %v457
        %v594 = vunpack.c.l.b16 %v458
        %v595 = vunpack.c.l.b16 %v459
        %v596 = vunpack.c.l.b16 %v460
        %v597 = vunpack.c.l.b16 %v461
        %v598 = vunpack.c.l.b16 %v462
        %v599 = vunpack.c.l.b16 %v463
        %v600 = vunpack.c.l.b16 %v464
        %v601 = vunpack.c.l.b16 %v465
        %v602 = vunpack.c.l.b16 %v466
        %v603 = vunpack.c.l.b16 %v467
        %v604 = vunpack.c.l.b16 %v468
        %v605 = vunpack.c.l.b16 %v469
        %v606 = vunpack.c.l.b16 %v470
        %v607 = vunpack.c.l.b16 %v471
        %v608 = vpack.c.b16 %v593, %v592
        %v609 = vpack.c.b16 %v595, %v594
        %v610 = vpack.c.b16 %v597, %v596
        %v611 = vpack.c.b16 %v599, %v598
        %v612 = vpack.c.b16 %v601, %v600
        %v613 = vpack.c.b16 %v603, %v602
        %v614 = vpack.c.b16 %v605, %v604
        %v615 = vpack.c.b16 %v607, %v606
        %624 = vmatpush.bf16.msra.mxu0 %v615
        %625 = vmatpush.bf16.msra.mxu0 %v614
        %626 = vmatpush.bf16.msra.mxu0 %v613
        %627 = vmatpush.bf16.msra.mxu0 %v612
        %628 = vmatpush.bf16.msra.mxu0 %v611
        %629 = vmatpush.bf16.msra.mxu0 %v610
        %630 = vmatpush.bf16.msra.mxu0 %v609
        %631 = vmatpush.bf16.msra.mxu0 %v608
        %632 = vmatmul.bf16.gmra.mxu0 %v508
        %v633 = vpop.f32.mrf.mxu0
        %v634 = vadd.f32 %v574, %v633
        %v635 = vpop.f32.mrf.mxu0
        %636 = vdwg.mxu0
        %v638 = vperm.slane %v490, 0
        %v656 = vunpack.c.l.b16 %v472
        %v657 = vunpack.c.l.b16 %v473
        %v658 = vunpack.c.l.b16 %v474
        %v659 = vunpack.c.l.b16 %v475
        %v660 = vunpack.c.l.b16 %v476
        %v661 = vunpack.c.l.b16 %v477
        %v662 = vunpack.c.l.b16 %v478
        %v663 = vunpack.c.l.b16 %v479
        %v664 = vunpack.c.l.b16 %v480
        %v665 = vunpack.c.l.b16 %v481
        %v666 = vunpack.c.l.b16 %v482
        %v667 = vunpack.c.l.b16 %v483
        %v668 = vunpack.c.l.b16 %v484
        %v669 = vunpack.c.l.b16 %v485
        %v670 = vunpack.c.l.b16 %v486
        %v671 = vunpack.c.l.b16 %v487
        %v672 = vpack.c.b16 %v657, %v656
        %v673 = vpack.c.b16 %v659, %v658
        %v674 = vpack.c.b16 %v661, %v660
        %v675 = vpack.c.b16 %v663, %v662
        %v676 = vpack.c.b16 %v665, %v664
        %v677 = vpack.c.b16 %v667, %v666
        %v678 = vpack.c.b16 %v669, %v668
        %v679 = vpack.c.b16 %v671, %v670
        %688 = vmatpush.bf16.msra.mxu0 %v679
        %689 = vmatpush.bf16.msra.mxu0 %v678
        %690 = vmatpush.bf16.msra.mxu0 %v677
        %691 = vmatpush.bf16.msra.mxu0 %v676
        %692 = vmatpush.bf16.msra.mxu0 %v675
        %693 = vmatpush.bf16.msra.mxu0 %v674
        %694 = vmatpush.bf16.msra.mxu0 %v673
        %695 = vmatpush.bf16.msra.mxu0 %v672
        %696 = vmatmul.bf16.gmra.mxu0 %v508
        %v697 = vpop.f32.mrf.mxu0
        %v698 = vadd.f32 %v638, %v697
        %v699 = vpop.f32.mrf.mxu0
        %700 = vdwg.mxu0
        %v701 = vpack.c.bf16 %v570, %v570
        %v702 = vpack.c.bf16 %v634, %v634
        %v703 = vpack.c.bf16 %v698, %v698
        %vm704 = vcmask 261120
        %v706 = vsel %vm704, %v701, 0
        %v709 = vsel %vm704, %v702, 0
        %711 = vmatpush.bf16.xpose.msra.mxu0 0
        %712 = vmatpush.bf16.xpose.msra.mxu0 0
        %713 = vmatpush.bf16.xpose.msra.mxu0 0
        %714 = vmatpush.bf16.xpose.msra.mxu0 0
        %715 = vmatpush.bf16.xpose.msra.mxu0 0
        %716 = vmatpush.bf16.xpose.msra.mxu0 0
        %717 = vmatpush.bf16.xpose.msra.mxu0 0
        %718 = vmatpush.bf16.xpose.msra.mxu0 %v709
        %719 = vmatmul.bf16.gmra.mxu0 %v706
        %v720 = vpop.f32.mrf.mxu0
        %v721 = vadd.f32 0.0, %v720
        %v722 = vpop.f32.mrf.mxu0
        %723 = vdwg.mxu0
        %v724 = vmul.f32 %v721, 0.17677669
        %vm725 = vcmask 64512
        %v726 = vsel %vm725, %v724, -inf
        %727 = vmax.xlane.f32.xlu0 %v726
        %v728 = vpop.xlane.xlu0 %727
        %v729 = vsub.f32 %v724, %v728
        %v730 = vmul.f32 %v729, 1.442695
        %v731 = vpow.pop %v730
        %v732 = vsel %vm725, %v731, 0.0
        %733 = vadd.xlane.f32.xlu0 %v732
        %v734 = vpop.xlane.xlu0 %733
        %v735 = vrcp.pop %v734
        %v736 = vmul.f32 %v734, %v735
        %v737 = vsub.f32 1.0, %v736
        %v738 = vmul.f32 %v735, %v737
        %v739 = vadd.f32 %v735, %v738
        %vm740 = vweird.f32 %v734
        %vm741 = vweird.f32 %v735
        %vm742 = vmor %vm740, %vm741
        %v743 = vsel %vm742, %v735, %v739
        %v744 = vand.u32 2147483647, %v734
        %vm745 = vcmp.eq.f32.partialorder %v744, 8.507059e+37
        %v746 = vand.u32 %v734, 2147483648
        %v747 = vor.u32 1.1754944e-38, %v746
        %v748 = vsel %vm745, %v747, %v743
        %v749 = vmul.f32 %v731, %v748
        %v750 = vpack.c.bf16 %v749, %v749
        %v752 = vsel %vm725, %v750, 0
        %vm754 = vcmask 1043456
        %v756 = vsel %vm754, %v703, 0
        %758 = vmatpush.bf16.msra.mxu0 0
        %759 = vmatpush.bf16.msra.mxu0 0
        %760 = vmatpush.bf16.msra.mxu0 0
        %761 = vmatpush.bf16.msra.mxu0 0
        %762 = vmatpush.bf16.msra.mxu0 0
        %763 = vmatpush.bf16.msra.mxu0 0
        %764 = vmatpush.bf16.msra.mxu0 0
        %765 = vmatpush.bf16.msra.mxu0 %v756
        %766 = vmatmul.bf16.gmra.mxu0 %v752
        %v767 = vpop.f32.mrf.mxu0
        %v768 = vadd.f32 0.0, %v767
        %v769 = vpop.f32.mrf.mxu0
        %770 = vdwg.mxu0
        %v771 = vpack.c.bf16 %v768, %v768
        %773 = vrot.lane.b32.xlu0 %v701, 96
        %v774 = vpop.permute.xlu0 %773
        %776 = vrot.lane.b32.xlu0 %v702, 96
        %v777 = vpop.permute.xlu0 %776
        %v779 = vsel %vm704, %v774, 0
        %v782 = vsel %vm704, %v777, 0
        %784 = vmatpush.bf16.xpose.msra.mxu0 0
        %785 = vmatpush.bf16.xpose.msra.mxu0 0
        %786 = vmatpush.bf16.xpose.msra.mxu0 0
        %787 = vmatpush.bf16.xpose.msra.mxu0 0
        %788 = vmatpush.bf16.xpose.msra.mxu0 0
        %789 = vmatpush.bf16.xpose.msra.mxu0 0
        %790 = vmatpush.bf16.xpose.msra.mxu0 0
        %791 = vmatpush.bf16.xpose.msra.mxu0 %v782
        %792 = vmatmul.bf16.gmra.mxu0 %v779
        %v793 = vpop.f32.mrf.mxu0
        %v794 = vadd.f32 0.0, %v793
        %v795 = vpop.f32.mrf.mxu0
        %796 = vdwg.mxu0
        %v797 = vmul.f32 %v794, 0.17677669
        %v798 = vsel %vm725, %v797, -inf
        %799 = vmax.xlane.f32.xlu0 %v798
        %v800 = vpop.xlane.xlu0 %799
        %v801 = vsub.f32 %v797, %v800
        %v802 = vmul.f32 %v801, 1.442695
        %v803 = vpow.pop %v802
        %v804 = vsel %vm725, %v803, 0.0
        %805 = vadd.xlane.f32.xlu0 %v804
        %v806 = vpop.xlane.xlu0 %805
        %v807 = vrcp.pop %v806
        %v808 = vmul.f32 %v806, %v807
        %v809 = vsub.f32 1.0, %v808
        %v810 = vmul.f32 %v807, %v809
        %v811 = vadd.f32 %v807, %v810
        %vm812 = vweird.f32 %v806
        %vm813 = vweird.f32 %v807
        %vm814 = vmor %vm812, %vm813
        %v815 = vsel %vm814, %v807, %v811
        %v816 = vand.u32 2147483647, %v806
        %vm817 = vcmp.eq.f32.partialorder %v816, 8.507059e+37
        %v818 = vand.u32 %v806, 2147483648
        %v819 = vor.u32 1.1754944e-38, %v818
        %v820 = vsel %vm817, %v819, %v815
        %v821 = vmul.f32 %v803, %v820
        %v822 = vpack.c.bf16 %v821, %v821
        %824 = vrot.lane.b32.xlu0 %v703, 96
        %v825 = vpop.permute.xlu0 %824
        %v827 = vsel %vm725, %v822, 0
        %v830 = vsel %vm754, %v825, 0
        %832 = vmatpush.bf16.msra.mxu0 0
        %833 = vmatpush.bf16.msra.mxu0 0
        %834 = vmatpush.bf16.msra.mxu0 0
        %835 = vmatpush.bf16.msra.mxu0 0
        %836 = vmatpush.bf16.msra.mxu0 0
        %837 = vmatpush.bf16.msra.mxu0 0
        %838 = vmatpush.bf16.msra.mxu0 0
        %839 = vmatpush.bf16.msra.mxu0 %v830
        %840 = vmatmul.bf16.gmra.mxu0 %v827
        %v841 = vpop.f32.mrf.mxu0
        %v842 = vadd.f32 0.0, %v841
        %v843 = vpop.f32.mrf.mxu0
        %844 = vdwg.mxu0
        %v845 = vpack.c.bf16 %v842, %v842
        %v850 = vunpack.c.l.b16 %v495
        %v851 = vunpack.c.l.b16 %v496
        %v852 = vunpack.c.l.b16 %v497
        %v853 = vunpack.c.l.b16 %v498
        %v854 = vpack.c.b16 %v851, %v850
        %v855 = vpack.c.b16 %v853, %v852
        %v859 = vsel %vm704, %v845, 0
        %861 = vmatpush.bf16.msra.mxu0 0
        %862 = vmatpush.bf16.msra.mxu0 0
        %863 = vmatpush.bf16.msra.mxu0 0
        %864 = vmatpush.bf16.msra.mxu0 0
        %865 = vmatpush.bf16.msra.mxu0 0
        %866 = vmatpush.bf16.msra.mxu0 0
        %867 = vmatpush.bf16.msra.mxu0 %v855
        %868 = vmatpush.bf16.msra.mxu0 %v854
        %869 = vmatmul.bf16.gmra.mxu0 %v859
        %v870 = vpop.f32.mrf.mxu0
        %v871 = vadd.f32 0.0, %v870
        %v872 = vpop.f32.mrf.mxu0
        %873 = vdwg.mxu0
        %v878 = vunpack.c.l.b16 %v491
        %v879 = vunpack.c.l.b16 %v492
        %v880 = vunpack.c.l.b16 %v493
        %v881 = vunpack.c.l.b16 %v494
        %v882 = vpack.c.b16 %v879, %v878
        %v883 = vpack.c.b16 %v881, %v880
        %v887 = vsel %vm704, %v771, 0
        %889 = vmatpush.bf16.msra.mxu0 0
        %890 = vmatpush.bf16.msra.mxu0 0
        %891 = vmatpush.bf16.msra.mxu0 0
        %892 = vmatpush.bf16.msra.mxu0 0
        %893 = vmatpush.bf16.msra.mxu0 0
        %894 = vmatpush.bf16.msra.mxu0 0
        %895 = vmatpush.bf16.msra.mxu0 %v883
        %896 = vmatpush.bf16.msra.mxu0 %v882
        %897 = vmatmul.bf16.gmra.mxu0 %v887
        %v898 = vpop.f32.mrf.mxu0
        %v899 = vadd.f32 %v871, %v898
        %v900 = vpop.f32.mrf.mxu0
        %901 = vdwg.mxu0
        %902 = vrot.lane.b32.xlu0 %v701, 64
        %v903 = vpop.permute.xlu0 %902
        %904 = vrot.lane.b32.xlu0 %v702, 64
        %v905 = vpop.permute.xlu0 %904
        %v907 = vsel %vm704, %v903, 0
        %v910 = vsel %vm704, %v905, 0
        %912 = vmatpush.bf16.xpose.msra.mxu0 0
        %913 = vmatpush.bf16.xpose.msra.mxu0 0
        %914 = vmatpush.bf16.xpose.msra.mxu0 0
        %915 = vmatpush.bf16.xpose.msra.mxu0 0
        %916 = vmatpush.bf16.xpose.msra.mxu0 0
        %917 = vmatpush.bf16.xpose.msra.mxu0 0
        %918 = vmatpush.bf16.xpose.msra.mxu0 0
        %919 = vmatpush.bf16.xpose.msra.mxu0 %v910
        %920 = vmatmul.bf16.gmra.mxu0 %v907
        %v921 = vpop.f32.mrf.mxu0
        %v922 = vadd.f32 0.0, %v921
        %v923 = vpop.f32.mrf.mxu0
        %924 = vdwg.mxu0
        %v925 = vmul.f32 %v922, 0.17677669
        %v926 = vsel %vm725, %v925, -inf
        %927 = vmax.xlane.f32.xlu0 %v926
        %v928 = vpop.xlane.xlu0 %927
        %v929 = vsub.f32 %v925, %v928
        %v930 = vmul.f32 %v929, 1.442695
        %v931 = vpow.pop %v930
        %v932 = vsel %vm725, %v931, 0.0
        %933 = vadd.xlane.f32.xlu0 %v932
        %v934 = vpop.xlane.xlu0 %933
        %v935 = vrcp.pop %v934
        %v936 = vmul.f32 %v934, %v935
        %v937 = vsub.f32 1.0, %v936
        %v938 = vmul.f32 %v935, %v937
        %v939 = vadd.f32 %v935, %v938
        %vm940 = vweird.f32 %v934
        %vm941 = vweird.f32 %v935
        %vm942 = vmor %vm940, %vm941
        %v943 = vsel %vm942, %v935, %v939
        %v944 = vand.u32 2147483647, %v934
        %vm945 = vcmp.eq.f32.partialorder %v944, 8.507059e+37
        %v946 = vand.u32 %v934, 2147483648
        %v947 = vor.u32 1.1754944e-38, %v946
        %v948 = vsel %vm945, %v947, %v943
        %v949 = vmul.f32 %v931, %v948
        %v950 = vpack.c.bf16 %v949, %v949
        %951 = vrot.lane.b32.xlu0 %v703, 64
        %v952 = vpop.permute.xlu0 %951
        %v954 = vsel %vm725, %v950, 0
        %v957 = vsel %vm754, %v952, 0
        %959 = vmatpush.bf16.msra.mxu0 0
        %960 = vmatpush.bf16.msra.mxu0 0
        %961 = vmatpush.bf16.msra.mxu0 0
        %962 = vmatpush.bf16.msra.mxu0 0
        %963 = vmatpush.bf16.msra.mxu0 0
        %964 = vmatpush.bf16.msra.mxu0 0
        %965 = vmatpush.bf16.msra.mxu0 0
        %966 = vmatpush.bf16.msra.mxu0 %v957
        %967 = vmatmul.bf16.gmra.mxu0 %v954
        %v968 = vpop.f32.mrf.mxu0
        %v969 = vadd.f32 0.0, %v968
        %v970 = vpop.f32.mrf.mxu0
        %971 = vdwg.mxu0
        %v972 = vpack.c.bf16 %v969, %v969
        %v977 = vunpack.c.l.b16 %v499
        %v978 = vunpack.c.l.b16 %v500
        %v979 = vunpack.c.l.b16 %v501
        %v980 = vunpack.c.l.b16 %v502
        %v981 = vpack.c.b16 %v978, %v977
        %v982 = vpack.c.b16 %v980, %v979
        %v986 = vsel %vm704, %v972, 0
        %988 = vmatpush.bf16.msra.mxu0 0
        %989 = vmatpush.bf16.msra.mxu0 0
        %990 = vmatpush.bf16.msra.mxu0 0
        %991 = vmatpush.bf16.msra.mxu0 0
        %992 = vmatpush.bf16.msra.mxu0 0
        %993 = vmatpush.bf16.msra.mxu0 0
        %994 = vmatpush.bf16.msra.mxu0 %v982
        %995 = vmatpush.bf16.msra.mxu0 %v981
        %996 = vmatmul.bf16.gmra.mxu0 %v986
        %v997 = vpop.f32.mrf.mxu0
        %v998 = vadd.f32 0.0, %v997
        %v999 = vpop.f32.mrf.mxu0
        %1000 = vdwg.mxu0
        %v1001 = vadd.f32 %v899, %v998
        %1002 = vrot.lane.b32.xlu0 %v701, 32
        %v1003 = vpop.permute.xlu0 %1002
        %1004 = vrot.lane.b32.xlu0 %v702, 32
        %v1005 = vpop.permute.xlu0 %1004
        %v1007 = vsel %vm704, %v1003, 0
        %v1010 = vsel %vm704, %v1005, 0
        %1012 = vmatpush.bf16.xpose.msra.mxu0 0
        %1013 = vmatpush.bf16.xpose.msra.mxu0 0
        %1014 = vmatpush.bf16.xpose.msra.mxu0 0
        %1015 = vmatpush.bf16.xpose.msra.mxu0 0
        %1016 = vmatpush.bf16.xpose.msra.mxu0 0
        %1017 = vmatpush.bf16.xpose.msra.mxu0 0
        %1018 = vmatpush.bf16.xpose.msra.mxu0 0
        %1019 = vmatpush.bf16.xpose.msra.mxu0 %v1010
        %1020 = vmatmul.bf16.gmra.mxu0 %v1007
        %v1021 = vpop.f32.mrf.mxu0
        %v1022 = vadd.f32 0.0, %v1021
        %v1023 = vpop.f32.mrf.mxu0
        %1024 = vdwg.mxu0
        %v1025 = vmul.f32 %v1022, 0.17677669
        %v1026 = vsel %vm725, %v1025, -inf
        %1027 = vmax.xlane.f32.xlu0 %v1026
        %v1028 = vpop.xlane.xlu0 %1027
        %v1029 = vsub.f32 %v1025, %v1028
        %v1030 = vmul.f32 %v1029, 1.442695
        %v1031 = vpow.pop %v1030
        %v1032 = vsel %vm725, %v1031, 0.0
        %1033 = vadd.xlane.f32.xlu0 %v1032
        %v1034 = vpop.xlane.xlu0 %1033
        %v1035 = vrcp.pop %v1034
        %v1036 = vmul.f32 %v1034, %v1035
        %v1037 = vsub.f32 1.0, %v1036
        %v1038 = vmul.f32 %v1035, %v1037
        %v1039 = vadd.f32 %v1035, %v1038
        %vm1040 = vweird.f32 %v1034
        %vm1041 = vweird.f32 %v1035
        %vm1042 = vmor %vm1040, %vm1041
        %v1043 = vsel %vm1042, %v1035, %v1039
        %v1044 = vand.u32 2147483647, %v1034
        %vm1045 = vcmp.eq.f32.partialorder %v1044, 8.507059e+37
        %v1046 = vand.u32 %v1034, 2147483648
        %v1047 = vor.u32 1.1754944e-38, %v1046
        %v1048 = vsel %vm1045, %v1047, %v1043
        %v1049 = vmul.f32 %v1031, %v1048
        %v1050 = vpack.c.bf16 %v1049, %v1049
        %1051 = vrot.lane.b32.xlu0 %v703, 32
        %v1052 = vpop.permute.xlu0 %1051
        %v1054 = vsel %vm725, %v1050, 0
        %v1057 = vsel %vm754, %v1052, 0
        %1059 = vmatpush.bf16.msra.mxu0 0
        %1060 = vmatpush.bf16.msra.mxu0 0
        %1061 = vmatpush.bf16.msra.mxu0 0
        %1062 = vmatpush.bf16.msra.mxu0 0
        %1063 = vmatpush.bf16.msra.mxu0 0
        %1064 = vmatpush.bf16.msra.mxu0 0
        %1065 = vmatpush.bf16.msra.mxu0 0
        %1066 = vmatpush.bf16.msra.mxu0 %v1057
        %1067 = vmatmul.bf16.gmra.mxu0 %v1054
        %v1068 = vpop.f32.mrf.mxu0
        %v1069 = vadd.f32 0.0, %v1068
        %v1070 = vpop.f32.mrf.mxu0
        %1071 = vdwg.mxu0
        %v1072 = vpack.c.bf16 %v1069, %v1069
        %v1077 = vunpack.c.l.b16 %v503
        %v1078 = vunpack.c.l.b16 %v504
        %v1079 = vunpack.c.l.b16 %v505
        %v1080 = vunpack.c.l.b16 %v506
        %v1081 = vpack.c.b16 %v1078, %v1077
        %v1082 = vpack.c.b16 %v1080, %v1079
        %v1086 = vsel %vm704, %v1072, 0
        %1088 = vmatpush.bf16.msra.mxu0 0
        %1089 = vmatpush.bf16.msra.mxu0 0
        %1090 = vmatpush.bf16.msra.mxu0 0
        %1091 = vmatpush.bf16.msra.mxu0 0
        %1092 = vmatpush.bf16.msra.mxu0 0
        %1093 = vmatpush.bf16.msra.mxu0 0
        %1094 = vmatpush.bf16.msra.mxu0 %v1082
        %1095 = vmatpush.bf16.msra.mxu0 %v1081
        %1096 = vmatmul.bf16.gmra.mxu0 %v1086
        %v1097 = vpop.f32.mrf.mxu0
        %v1098 = vadd.f32 0.0, %v1097
        %v1099 = vpop.f32.mrf.mxu0
        %1100 = vdwg.mxu0
        %v1101 = vadd.f32 %v1001, %v1098
        %v1103 = vperm.slane %v507, 0
        %v1105 = vadd.f32 %v1101, %v1103
        %1106 = vst [vmem:[%s437] sm:$0xff] %v1105
        %p1107 = scmp.lt.s32.totalorder %s24, 1
        %s1108 = scalar_select %p1107, %s24, 1
        %s1109 = smul.addr %s1108, 8
        %s1110 = scalar_lea.vmem %s9, %s1109
        // Predicated region
        $region85: #{_lambda_.2} parent=55 // pred_check
          %p1111 = pneg %p236
        $region86: #{_lambda_.2} parent=55 // pred_check_branch
          %1113 = sbr.rel (%p1111) target = $region88
        $region87: #{_lambda_.2} parent=55 // pred_region
          _
        $region88: #{_lambda_.2} parent=55 // pred_fallthru
          _
      $region56: #{_lambda_.2} parent=5 // pred_fallthru
        _
      %p1114 = scmp.le.s32.totalorder 2, %s19
      // Predicated region
      $region89: #{_lambda_.2} parent=5 // pred_check
        %p1115 = pneg %p1114
      $region90: #{_lambda_.2} parent=5 // pred_check_branch
        %1117 = sbr.rel (%p1115) target = $region92
      $region91: #{_lambda_.2} parent=5 // pred_region
        %s1118 = ssub.s32 %s19, 2
        // Predicated region
        $region93: #{_lambda_.2} parent=91 // pred_check
          %p1119 = pneg %p242
        $region94: #{_lambda_.2} parent=91 // pred_check_branch
          %1121 = sbr.rel (%p1119) target = $region96
        $region95: #{_lambda_.2} parent=91 // pred_region
          %p1122 = scmp.lt.s32.totalorder %s25, 1
          %s1123 = scalar_select %p1122, %s25, 1
          %s1124 = smul.addr %s1123, 8
          %s1125 = scalar_lea.vmem %s9, %s1124
        $region96: #{_lambda_.2} parent=91 // pred_fallthru
          _
      $region92: #{_lambda_.2} parent=5 // pred_fallthru
        _
    $region6: #{_lambda_.2} parent=1 // loop_footer
      %s23 = sadd.s32 1, %s19
    $region7: #{_lambda_.2} parent=1 // loop_footer_branch
      %18 = sbr.rel target = $region3
    $region8: #{_lambda_.2} parent=1 // loop_exit
      _
    %1126 = vsyncpa [#allocation3], 1
    %s1127 = scalar_lea.sflag [#allocation3], 1
    %1128 = vsyncpa %s1127, 1
    %1129 = vsyncpa [#allocation5], 1
    %1130 = vsyncpa [#allocation8], 1
    %1131 = vsyncpa [#allocation11], 1

// kernel: _lambda_.3
$region0: #{_lambda_.3}
  #allocation0 [shape = 'u32[]', space=smem, size = 0x4, offset = 0x4, fixed_abs, tag = 'smem constant byte address 0x4 - core index']
  #allocation1 [shape = 'u32[72,128]{1,0:T(1,128)}', space=vmem, size = 0x9000, scoped, tag = 'internal scratch']
  %s0 = inlined_call_operand.vmem [shape: f32[16,128], index: 0, kind: input, shape index: {}]
  %s1 = inlined_call_operand.vmem [shape: f32[16,128], index: 1, kind: input, shape index: {}]
  %s2 = inlined_call_operand.hbm [shape: bf16[128,256], index: 2, kind: input, shape index: {}]
  %s3 = inlined_call_operand.vmem [shape: f32[1,256], index: 3, kind: input, shape index: {}]
  %s4 = inlined_call_operand.hbm [shape: bf16[256,128], index: 4, kind: input, shape index: {}]
  %s5 = inlined_call_operand.hbm [shape: f32[1,128], index: 5, kind: input, shape index: {}]
  %s6 = inlined_call_operand.hbm [shape: f32[1,128], index: 6, kind: input, shape index: {}]
  %s7 = inlined_call_operand.hbm [shape: f32[1,128], index: 7, kind: input, shape index: {}]
  %s8 = inlined_call_operand.hbm [shape: f32[1,128], index: 8, kind: input, shape index: {}]
  %s9 = inlined_call_operand.hbm [shape: f32[1,128], index: 9, kind: input, shape index: {}]
  %s10 = inlined_call_operand.hbm [shape: bf16[128,256], index: 10, kind: input, shape index: {}]
  %s11 = inlined_call_operand.vmem [shape: f32[1,256], index: 11, kind: input, shape index: {}]
  %s12 = inlined_call_operand.vmem [shape: f32[1,256], index: 12, kind: input, shape index: {}]
  %s13 = inlined_call_operand.vmem [shape: f32[1,256], index: 13, kind: input, shape index: {}]
  %s14 = inlined_call_operand.hbm [shape: bf16[256,128], index: 14, kind: input, shape index: {}]
  %s15 = inlined_call_operand.hbm [shape: f32[1,128], index: 15, kind: input, shape index: {}]
  %s16 = inlined_call_operand.hbm [shape: f32[1,128], index: 16, kind: input, shape index: {}]
  %s17 = inlined_call_operand.hbm [shape: f32[1,128], index: 17, kind: input, shape index: {}]
  %s18 = inlined_call_operand.hbm [shape: f32[16,128], index: 18, kind: output, shape index: {}]
  %s19 = sld [smem:[#allocation0]]
  $region130: #{_lambda_.3} parent=0
    _
  %s21 = ssub.s32 1, %s19
  %s22 = scalar_select 0, %s21, %s19
  $region1: #{_lambda_.3} parent=0
    #allocation2 [shape = 'u8[65536]{0}', space=vmem, size = 0x10000, scoped, tag = 'input window, operand 2, single buffered']
    #allocation3 [shape = 's32[1]{0}', space=sflag, size = 0x4, scoped, tag = 'scoped memory for _lambda_.3']
    #allocation4 [shape = 's32[1]{0}', space=sflag, size = 0x4, scoped, tag = 'scoped memory for _lambda_.3']
    #allocation5 [shape = 'u8[65536]{0}', space=vmem, size = 0x10000, scoped, tag = 'input window, operand 4, single buffered']
    #allocation6 [shape = 's32[1]{0}', space=sflag, size = 0x4, scoped, tag = 'scoped memory for _lambda_.3']
    #allocation7 [shape = 'u8[512]{0}', space=vmem, size = 0x400, scoped, tag = 'input window, operand 5, single buffered']
    #allocation8 [shape = 'u8[512]{0}', space=vmem, size = 0x400, scoped, tag = 'input window, operand 6, single buffered']
    #allocation9 [shape = 's32[1]{0}', space=sflag, size = 0x4, scoped, tag = 'scoped memory for _lambda_.3']
    #allocation10 [shape = 'u8[512]{0}', space=vmem, size = 0x400, scoped, tag = 'input window, operand 7, single buffered']
    #allocation11 [shape = 'u8[512]{0}', space=vmem, size = 0x400, scoped, tag = 'input window, operand 8, single buffered']
    #allocation12 [shape = 's32[1]{0}', space=sflag, size = 0x4, scoped, tag = 'scoped memory for _lambda_.3']
    #allocation13 [shape = 'u8[512]{0}', space=vmem, size = 0x400, scoped, tag = 'input window, operand 9, single buffered']
    #allocation14 [shape = 'u8[65536]{0}', space=vmem, size = 0x10000, scoped, tag = 'input window, operand 10, single buffered']
    #allocation15 [shape = 's32[1]{0}', space=sflag, size = 0x4, scoped, tag = 'scoped memory for _lambda_.3']
    #allocation16 [shape = 'u8[65536]{0}', space=vmem, size = 0x10000, scoped, tag = 'input window, operand 14, single buffered']
    #allocation17 [shape = 'u8[512]{0}', space=vmem, size = 0x400, scoped, tag = 'input window, operand 15, single buffered']
    #allocation18 [shape = 's32[1]{0}', space=sflag, size = 0x4, scoped, tag = 'scoped memory for _lambda_.3']
    #allocation19 [shape = 'u8[512]{0}', space=vmem, size = 0x400, scoped, tag = 'input window, operand 16, single buffered']
    #allocation20 [shape = 'u8[512]{0}', space=vmem, size = 0x400, scoped, tag = 'input window, operand 17, single buffered']
    #allocation21 [shape = 's32[1]{0}', space=sflag, size = 0x4, scoped, tag = 'scoped memory for _lambda_.3']
    #allocation22 [shape = 'u8[8192]{0}', space=vmem, size = 0x2000, scoped, tag = 'output window, operand 0, single buffered']
    %23 = vsyncpa [#allocation3], 0
    %24 = vsyncpa [#allocation6], 0
    %25 = vsyncpa [#allocation9], 0
    %26 = vsyncpa [#allocation12], 0
    %27 = vsyncpa [#allocation15], 0
    %28 = vsyncpa [#allocation18], 0
    %29 = vsyncpa [#allocation21], 0
    %30 = vsyncpa [#allocation4], 0
    // Predicated region
    $region2: #{_lambda_.3} parent=1 // pred_check
      _
    $region3: #{_lambda_.3} parent=1 // pred_check_branch
      %32 = sbr.rel (0) target = $region5
    $region4: #{_lambda_.3} parent=1 // pred_region
      _
    $region5: #{_lambda_.3} parent=1 // pred_fallthru
      _
    // Predicated region
    $region6: #{_lambda_.3} parent=1 // pred_check
      _
    $region7: #{_lambda_.3} parent=1 // pred_check_branch
      %34 = sbr.rel (0) target = $region9
    $region8: #{_lambda_.3} parent=1 // pred_region
      _
    $region9: #{_lambda_.3} parent=1 // pred_fallthru
      _
    // Predicated region
    $region10: #{_lambda_.3} parent=1 // pred_check
      _
    $region11: #{_lambda_.3} parent=1 // pred_check_branch
      %36 = sbr.rel (0) target = $region13
    $region12: #{_lambda_.3} parent=1 // pred_region
      %38 = vsyncadd [#allocation3], 0
      %s39 = sshll.u32 %s2, 4
      %s40 = int_to_ptr.hbm [resolvable:$true] %s39
      %s41 = sshll.u32 [#allocation2], 4
      %s42 = int_to_ptr.vmem [resolvable:$true] %s41
      %47 = dma.hbm_to_vmem [thread:$0]  %s40, 2048, %s42, [#allocation3], 128, 128, 8
    $region13: #{_lambda_.3} parent=1 // pred_fallthru
      _
    // Predicated region
    $region14: #{_lambda_.3} parent=1 // pred_check
      _
    $region15: #{_lambda_.3} parent=1 // pred_check_branch
      %49 = sbr.rel (0) target = $region17
    $region16: #{_lambda_.3} parent=1 // pred_region
      _
    $region17: #{_lambda_.3} parent=1 // pred_fallthru
      _
    // Predicated region
    $region18: #{_lambda_.3} parent=1 // pred_check
      _
    $region19: #{_lambda_.3} parent=1 // pred_check_branch
      %51 = sbr.rel (0) target = $region21
    $region20: #{_lambda_.3} parent=1 // pred_region
      %53 = vsyncadd [#allocation6], 0
      %s54 = sshll.u32 %s4, 4
      %s55 = int_to_ptr.hbm [resolvable:$true] %s54
      %s56 = sshll.u32 [#allocation5], 4
      %s57 = int_to_ptr.vmem [resolvable:$true] %s56
      %62 = dma.hbm_to_vmem [thread:$0]  %s55, 2048, %s57, [#allocation6], 64, 64, 4
    $region21: #{_lambda_.3} parent=1 // pred_fallthru
      _
    // Predicated region
    $region22: #{_lambda_.3} parent=1 // pred_check
      _
    $region23: #{_lambda_.3} parent=1 // pred_check_branch
      %64 = sbr.rel (0) target = $region25
    $region24: #{_lambda_.3} parent=1 // pred_region
      %66 = vsyncadd [#allocation6], 0
      %s68 = sshll.u32 %s5, 4
      %s69 = int_to_ptr.hbm [resolvable:$true] %s68
      %s70 = sshll.u32 [#allocation7], 4
      %s71 = int_to_ptr.vmem [resolvable:$true] %s70
      %73 = dma.hbm_to_vmem [thread:$0]  %s69, 16, %s71, [#allocation6]
    $region25: #{_lambda_.3} parent=1 // pred_fallthru
      _
    // Predicated region
    $region26: #{_lambda_.3} parent=1 // pred_check
      _
    $region27: #{_lambda_.3} parent=1 // pred_check_branch
      %75 = sbr.rel (0) target = $region29
    $region28: #{_lambda_.3} parent=1 // pred_region
      %77 = vsyncadd [#allocation9], 0
      %s79 = sshll.u32 %s6, 4
      %s80 = int_to_ptr.hbm [resolvable:$true] %s79
      %s81 = sshll.u32 [#allocation8], 4
      %s82 = int_to_ptr.vmem [resolvable:$true] %s81
      %84 = dma.hbm_to_vmem [thread:$0]  %s80, 16, %s82, [#allocation9]
    $region29: #{_lambda_.3} parent=1 // pred_fallthru
      _
    // Predicated region
    $region30: #{_lambda_.3} parent=1 // pred_check
      _
    $region31: #{_lambda_.3} parent=1 // pred_check_branch
      %86 = sbr.rel (0) target = $region33
    $region32: #{_lambda_.3} parent=1 // pred_region
      %88 = vsyncadd [#allocation9], 0
      %s90 = sshll.u32 %s7, 4
      %s91 = int_to_ptr.hbm [resolvable:$true] %s90
      %s92 = sshll.u32 [#allocation10], 4
      %s93 = int_to_ptr.vmem [resolvable:$true] %s92
      %95 = dma.hbm_to_vmem [thread:$0]  %s91, 16, %s93, [#allocation9]
    $region33: #{_lambda_.3} parent=1 // pred_fallthru
      _
    // Predicated region
    $region34: #{_lambda_.3} parent=1 // pred_check
      _
    $region35: #{_lambda_.3} parent=1 // pred_check_branch
      %97 = sbr.rel (0) target = $region37
    $region36: #{_lambda_.3} parent=1 // pred_region
      %99 = vsyncadd [#allocation12], 0
      %s101 = sshll.u32 %s8, 4
      %s102 = int_to_ptr.hbm [resolvable:$true] %s101
      %s103 = sshll.u32 [#allocation11], 4
      %s104 = int_to_ptr.vmem [resolvable:$true] %s103
      %106 = dma.hbm_to_vmem [thread:$0]  %s102, 16, %s104, [#allocation12]
    $region37: #{_lambda_.3} parent=1 // pred_fallthru
      _
    // Predicated region
    $region38: #{_lambda_.3} parent=1 // pred_check
      _
    $region39: #{_lambda_.3} parent=1 // pred_check_branch
      %108 = sbr.rel (0) target = $region41
    $region40: #{_lambda_.3} parent=1 // pred_region
      %110 = vsyncadd [#allocation12], 0
      %s112 = sshll.u32 %s9, 4
      %s113 = int_to_ptr.hbm [resolvable:$true] %s112
      %s114 = sshll.u32 [#allocation13], 4
      %s115 = int_to_ptr.vmem [resolvable:$true] %s114
      %117 = dma.hbm_to_vmem [thread:$0]  %s113, 16, %s115, [#allocation12]
    $region41: #{_lambda_.3} parent=1 // pred_fallthru
      _
    // Predicated region
    $region42: #{_lambda_.3} parent=1 // pred_check
      _
    $region43: #{_lambda_.3} parent=1 // pred_check_branch
      %119 = sbr.rel (0) target = $region45
    $region44: #{_lambda_.3} parent=1 // pred_region
      %121 = vsyncadd [#allocation15], 0
      %s122 = sshll.u32 %s10, 4
      %s123 = int_to_ptr.hbm [resolvable:$true] %s122
      %s124 = sshll.u32 [#allocation14], 4
      %s125 = int_to_ptr.vmem [resolvable:$true] %s124
      %130 = dma.hbm_to_vmem [thread:$0]  %s123, 2048, %s125, [#allocation15], 128, 128, 8
    $region45: #{_lambda_.3} parent=1 // pred_fallthru
      _
    // Predicated region
    $region46: #{_lambda_.3} parent=1 // pred_check
      _
    $region47: #{_lambda_.3} parent=1 // pred_check_branch
      %132 = sbr.rel (0) target = $region49
    $region48: #{_lambda_.3} parent=1 // pred_region
      _
    $region49: #{_lambda_.3} parent=1 // pred_fallthru
      _
    // Predicated region
    $region50: #{_lambda_.3} parent=1 // pred_check
      _
    $region51: #{_lambda_.3} parent=1 // pred_check_branch
      %134 = sbr.rel (0) target = $region53
    $region52: #{_lambda_.3} parent=1 // pred_region
      _
    $region53: #{_lambda_.3} parent=1 // pred_fallthru
      _
    // Predicated region
    $region54: #{_lambda_.3} parent=1 // pred_check
      _
    $region55: #{_lambda_.3} parent=1 // pred_check_branch
      %136 = sbr.rel (0) target = $region57
    $region56: #{_lambda_.3} parent=1 // pred_region
      _
    $region57: #{_lambda_.3} parent=1 // pred_fallthru
      _
    // Predicated region
    $region58: #{_lambda_.3} parent=1 // pred_check
      _
    $region59: #{_lambda_.3} parent=1 // pred_check_branch
      %138 = sbr.rel (0) target = $region61
    $region60: #{_lambda_.3} parent=1 // pred_region
      %140 = vsyncadd [#allocation15], 0
      %s141 = sshll.u32 %s14, 4
      %s142 = int_to_ptr.hbm [resolvable:$true] %s141
      %s143 = sshll.u32 [#allocation16], 4
      %s144 = int_to_ptr.vmem [resolvable:$true] %s143
      %149 = dma.hbm_to_vmem [thread:$0]  %s142, 2048, %s144, [#allocation15], 64, 64, 4
    $region61: #{_lambda_.3} parent=1 // pred_fallthru
      _
    // Predicated region
    $region62: #{_lambda_.3} parent=1 // pred_check
      _
    $region63: #{_lambda_.3} parent=1 // pred_check_branch
      %151 = sbr.rel (0) target = $region65
    $region64: #{_lambda_.3} parent=1 // pred_region
      %153 = vsyncadd [#allocation18], 0
      %s155 = sshll.u32 %s15, 4
      %s156 = int_to_ptr.hbm [resolvable:$true] %s155
      %s157 = sshll.u32 [#allocation17], 4
      %s158 = int_to_ptr.vmem [resolvable:$true] %s157
      %160 = dma.hbm_to_vmem [thread:$0]  %s156, 16, %s158, [#allocation18]
    $region65: #{_lambda_.3} parent=1 // pred_fallthru
      _
    // Predicated region
    $region66: #{_lambda_.3} parent=1 // pred_check
      _
    $region67: #{_lambda_.3} parent=1 // pred_check_branch
      %162 = sbr.rel (0) target = $region69
    $region68: #{_lambda_.3} parent=1 // pred_region
      %164 = vsyncadd [#allocation18], 0
      %s166 = sshll.u32 %s16, 4
      %s167 = int_to_ptr.hbm [resolvable:$true] %s166
      %s168 = sshll.u32 [#allocation19], 4
      %s169 = int_to_ptr.vmem [resolvable:$true] %s168
      %171 = dma.hbm_to_vmem [thread:$0]  %s167, 16, %s169, [#allocation18]
    $region69: #{_lambda_.3} parent=1 // pred_fallthru
      _
    // Predicated region
    $region70: #{_lambda_.3} parent=1 // pred_check
      _
    $region71: #{_lambda_.3} parent=1 // pred_check_branch
      %173 = sbr.rel (0) target = $region73
    $region72: #{_lambda_.3} parent=1 // pred_region
      %175 = vsyncadd [#allocation21], 0
      %s177 = sshll.u32 %s17, 4
      %s178 = int_to_ptr.hbm [resolvable:$true] %s177
      %s179 = sshll.u32 [#allocation20], 4
      %s180 = int_to_ptr.vmem [resolvable:$true] %s179
      %182 = dma.hbm_to_vmem [thread:$0]  %s178, 16, %s180, [#allocation21]
    $region73: #{_lambda_.3} parent=1 // pred_fallthru
      _
    // Predicated region
    $region74: #{_lambda_.3} parent=1 // pred_check
      _
    $region75: #{_lambda_.3} parent=1 // pred_check_branch
      %184 = sbr.rel (0) target = $region77
    $region76: #{_lambda_.3} parent=1 // pred_region
      %186 = dma.done [#allocation3], 2048
    $region77: #{_lambda_.3} parent=1 // pred_fallthru
      _
    // Predicated region
    $region78: #{_lambda_.3} parent=1 // pred_check
      _
    $region79: #{_lambda_.3} parent=1 // pred_check_branch
      %188 = sbr.rel (0) target = $region81
    $region80: #{_lambda_.3} parent=1 // pred_region
      %190 = dma.done [#allocation6], 2048
    $region81: #{_lambda_.3} parent=1 // pred_fallthru
      _
    // Predicated region
    $region82: #{_lambda_.3} parent=1 // pred_check
      _
    $region83: #{_lambda_.3} parent=1 // pred_check_branch
      %192 = sbr.rel (0) target = $region85
    $region84: #{_lambda_.3} parent=1 // pred_region
      %194 = dma.done [#allocation6], 16
    $region85: #{_lambda_.3} parent=1 // pred_fallthru
      _
    // Predicated region
    $region86: #{_lambda_.3} parent=1 // pred_check
      _
    $region87: #{_lambda_.3} parent=1 // pred_check_branch
      %196 = sbr.rel (0) target = $region89
    $region88: #{_lambda_.3} parent=1 // pred_region
      %198 = dma.done [#allocation9], 16
    $region89: #{_lambda_.3} parent=1 // pred_fallthru
      _
    // Predicated region
    $region90: #{_lambda_.3} parent=1 // pred_check
      _
    $region91: #{_lambda_.3} parent=1 // pred_check_branch
      %200 = sbr.rel (0) target = $region93
    $region92: #{_lambda_.3} parent=1 // pred_region
      %202 = dma.done [#allocation9], 16
    $region93: #{_lambda_.3} parent=1 // pred_fallthru
      _
    // Predicated region
    $region94: #{_lambda_.3} parent=1 // pred_check
      _
    $region95: #{_lambda_.3} parent=1 // pred_check_branch
      %204 = sbr.rel (0) target = $region97
    $region96: #{_lambda_.3} parent=1 // pred_region
      %206 = dma.done [#allocation12], 16
    $region97: #{_lambda_.3} parent=1 // pred_fallthru
      _
    // Predicated region
    $region98: #{_lambda_.3} parent=1 // pred_check
      _
    $region99: #{_lambda_.3} parent=1 // pred_check_branch
      %208 = sbr.rel (0) target = $region101
    $region100: #{_lambda_.3} parent=1 // pred_region
      %210 = dma.done [#allocation12], 16
    $region101: #{_lambda_.3} parent=1 // pred_fallthru
      _
    // Predicated region
    $region102: #{_lambda_.3} parent=1 // pred_check
      _
    $region103: #{_lambda_.3} parent=1 // pred_check_branch
      %212 = sbr.rel (0) target = $region105
    $region104: #{_lambda_.3} parent=1 // pred_region
      %214 = dma.done [#allocation15], 2048
    $region105: #{_lambda_.3} parent=1 // pred_fallthru
      _
    // Predicated region
    $region106: #{_lambda_.3} parent=1 // pred_check
      _
    $region107: #{_lambda_.3} parent=1 // pred_check_branch
      %216 = sbr.rel (0) target = $region109
    $region108: #{_lambda_.3} parent=1 // pred_region
      %218 = dma.done [#allocation15], 2048
    $region109: #{_lambda_.3} parent=1 // pred_fallthru
      _
    // Predicated region
    $region110: #{_lambda_.3} parent=1 // pred_check
      _
    $region111: #{_lambda_.3} parent=1 // pred_check_branch
      %220 = sbr.rel (0) target = $region113
    $region112: #{_lambda_.3} parent=1 // pred_region
      %222 = dma.done [#allocation18], 16
    $region113: #{_lambda_.3} parent=1 // pred_fallthru
      _
    // Predicated region
    $region114: #{_lambda_.3} parent=1 // pred_check
      _
    $region115: #{_lambda_.3} parent=1 // pred_check_branch
      %224 = sbr.rel (0) target = $region117
    $region116: #{_lambda_.3} parent=1 // pred_region
      %226 = dma.done [#allocation18], 16
    $region117: #{_lambda_.3} parent=1 // pred_fallthru
      _
    // Predicated region
    $region118: #{_lambda_.3} parent=1 // pred_check
      _
    $region119: #{_lambda_.3} parent=1 // pred_check_branch
      %228 = sbr.rel (0) target = $region121
    $region120: #{_lambda_.3} parent=1 // pred_region
      %230 = dma.done [#allocation21], 16
    $region121: #{_lambda_.3} parent=1 // pred_fallthru
      _
    %v231 = vld [vmem:[#allocation2] sm:$0xff]
    %v232 = vld [vmem:[#allocation2 + $0x8] sm:$0xff]
    %v233 = vld [vmem:[#allocation2 + $0x10] sm:$0xff]
    %v234 = vld [vmem:[#allocation2 + $0x18] sm:$0xff]
    %v235 = vld [vmem:[#allocation2 + $0x20] sm:$0xff]
    %v236 = vld [vmem:[#allocation2 + $0x28] sm:$0xff]
    %v237 = vld [vmem:[#allocation2 + $0x30] sm:$0xff]
    %v238 = vld [vmem:[#allocation2 + $0x38] sm:$0xff]
    %v239 = vld [vmem:[#allocation2 + $0x40] sm:$0xff]
    %v240 = vld [vmem:[#allocation2 + $0x48] sm:$0xff]
    %v241 = vld [vmem:[#allocation2 + $0x50] sm:$0xff]
    %v242 = vld [vmem:[#allocation2 + $0x58] sm:$0xff]
    %v243 = vld [vmem:[#allocation2 + $0x60] sm:$0xff]
    %v244 = vld [vmem:[#allocation2 + $0x68] sm:$0xff]
    %v245 = vld [vmem:[#allocation2 + $0x70] sm:$0xff]
    %v246 = vld [vmem:[#allocation2 + $0x78] sm:$0xff]
    %v247 = vld [vmem:[%s3] sm:$0x3]
    %v248 = vld [vmem:[#allocation5] sm:$0xf]
    %v249 = vld [vmem:[#allocation5 + $0x4] sm:$0xf]
    %v250 = vld [vmem:[#allocation5 + $0x8] sm:$0xf]
    %v251 = vld [vmem:[#allocation5 + $0xc] sm:$0xf]
    %v252 = vld [vmem:[#allocation5 + $0x10] sm:$0xf]
    %v253 = vld [vmem:[#allocation5 + $0x14] sm:$0xf]
    %v254 = vld [vmem:[#allocation5 + $0x18] sm:$0xf]
    %v255 = vld [vmem:[#allocation5 + $0x1c] sm:$0xf]
    %v256 = vld [vmem:[#allocation5 + $0x20] sm:$0xf]
    %v257 = vld [vmem:[#allocation5 + $0x24] sm:$0xf]
    %v258 = vld [vmem:[#allocation5 + $0x28] sm:$0xf]
    %v259 = vld [vmem:[#allocation5 + $0x2c] sm:$0xf]
    %v260 = vld [vmem:[#allocation5 + $0x30] sm:$0xf]
    %v261 = vld [vmem:[#allocation5 + $0x34] sm:$0xf]
    %v262 = vld [vmem:[#allocation5 + $0x38] sm:$0xf]
    %v263 = vld [vmem:[#allocation5 + $0x3c] sm:$0xf]
    %v264 = vld [vmem:[#allocation5 + $0x40] sm:$0xf]
    %v265 = vld [vmem:[#allocation5 + $0x44] sm:$0xf]
    %v266 = vld [vmem:[#allocation5 + $0x48] sm:$0xf]
    %v267 = vld [vmem:[#allocation5 + $0x4c] sm:$0xf]
    %v268 = vld [vmem:[#allocation5 + $0x50] sm:$0xf]
    %v269 = vld [vmem:[#allocation5 + $0x54] sm:$0xf]
    %v270 = vld [vmem:[#allocation5 + $0x58] sm:$0xf]
    %v271 = vld [vmem:[#allocation5 + $0x5c] sm:$0xf]
    %v272 = vld [vmem:[#allocation5 + $0x60] sm:$0xf]
    %v273 = vld [vmem:[#allocation5 + $0x64] sm:$0xf]
    %v274 = vld [vmem:[#allocation5 + $0x68] sm:$0xf]
    %v275 = vld [vmem:[#allocation5 + $0x6c] sm:$0xf]
    %v276 = vld [vmem:[#allocation5 + $0x70] sm:$0xf]
    %v277 = vld [vmem:[#allocation5 + $0x74] sm:$0xf]
    %v278 = vld [vmem:[#allocation5 + $0x78] sm:$0xf]
    %v279 = vld [vmem:[#allocation5 + $0x7c] sm:$0xf]
    %v280 = vld [vmem:[#allocation7] sm:$0x1]
    %v281 = vld [vmem:[#allocation8] sm:$0x1]
    %v282 = vld [vmem:[#allocation10] sm:$0x1]
    %v283 = vld [vmem:[#allocation11] sm:$0x1]
    %v284 = vld [vmem:[#allocation13] sm:$0x1]
    %v285 = vld [vmem:[#allocation14] sm:$0xff]
    %v286 = vld [vmem:[#allocation14 + $0x8] sm:$0xff]
    %v287 = vld [vmem:[#allocation14 + $0x10] sm:$0xff]
    %v288 = vld [vmem:[#allocation14 + $0x18] sm:$0xff]
    %v289 = vld [vmem:[#allocation14 + $0x20] sm:$0xff]
    %v290 = vld [vmem:[#allocation14 + $0x28] sm:$0xff]
    %v291 = vld [vmem:[#allocation14 + $0x30] sm:$0xff]
    %v292 = vld [vmem:[#allocation14 + $0x38] sm:$0xff]
    %v293 = vld [vmem:[#allocation14 + $0x40] sm:$0xff]
    %v294 = vld [vmem:[#allocation14 + $0x48] sm:$0xff]
    %v295 = vld [vmem:[#allocation14 + $0x50] sm:$0xff]
    %v296 = vld [vmem:[#allocation14 + $0x58] sm:$0xff]
    %v297 = vld [vmem:[#allocation14 + $0x60] sm:$0xff]
    %v298 = vld [vmem:[#allocation14 + $0x68] sm:$0xff]
    %v299 = vld [vmem:[#allocation14 + $0x70] sm:$0xff]
    %v300 = vld [vmem:[#allocation14 + $0x78] sm:$0xff]
    %v301 = vld [vmem:[%s11] sm:$0x3]
    %v302 = vld [vmem:[%s12] sm:$0x3]
    %v303 = vld [vmem:[%s13] sm:$0x3]
    %v304 = vld [vmem:[#allocation16] sm:$0xf]
    %v305 = vld [vmem:[#allocation16 + $0x4] sm:$0xf]
    %v306 = vld [vmem:[#allocation16 + $0x8] sm:$0xf]
    %v307 = vld [vmem:[#allocation16 + $0xc] sm:$0xf]
    %v308 = vld [vmem:[#allocation16 + $0x10] sm:$0xf]
    %v309 = vld [vmem:[#allocation16 + $0x14] sm:$0xf]
    %v310 = vld [vmem:[#allocation16 + $0x18] sm:$0xf]
    %v311 = vld [vmem:[#allocation16 + $0x1c] sm:$0xf]
    %v312 = vld [vmem:[#allocation16 + $0x20] sm:$0xf]
    %v313 = vld [vmem:[#allocation16 + $0x24] sm:$0xf]
    %v314 = vld [vmem:[#allocation16 + $0x28] sm:$0xf]
    %v315 = vld [vmem:[#allocation16 + $0x2c] sm:$0xf]
    %v316 = vld [vmem:[#allocation16 + $0x30] sm:$0xf]
    %v317 = vld [vmem:[#allocation16 + $0x34] sm:$0xf]
    %v318 = vld [vmem:[#allocation16 + $0x38] sm:$0xf]
    %v319 = vld [vmem:[#allocation16 + $0x3c] sm:$0xf]
    %v320 = vld [vmem:[#allocation16 + $0x40] sm:$0xf]
    %v321 = vld [vmem:[#allocation16 + $0x44] sm:$0xf]
    %v322 = vld [vmem:[#allocation16 + $0x48] sm:$0xf]
    %v323 = vld [vmem:[#allocation16 + $0x4c] sm:$0xf]
    %v324 = vld [vmem:[#allocation16 + $0x50] sm:$0xf]
    %v325 = vld [vmem:[#allocation16 + $0x54] sm:$0xf]
    %v326 = vld [vmem:[#allocation16 + $0x58] sm:$0xf]
    %v327 = vld [vmem:[#allocation16 + $0x5c] sm:$0xf]
    %v328 = vld [vmem:[#allocation16 + $0x60] sm:$0xf]
    %v329 = vld [vmem:[#allocation16 + $0x64] sm:$0xf]
    %v330 = vld [vmem:[#allocation16 + $0x68] sm:$0xf]
    %v331 = vld [vmem:[#allocation16 + $0x6c] sm:$0xf]
    %v332 = vld [vmem:[#allocation16 + $0x70] sm:$0xf]
    %v333 = vld [vmem:[#allocation16 + $0x74] sm:$0xf]
    %v334 = vld [vmem:[#allocation16 + $0x78] sm:$0xf]
    %v335 = vld [vmem:[#allocation16 + $0x7c] sm:$0xf]
    %v336 = vld [vmem:[#allocation17] sm:$0x1]
    %v337 = vld [vmem:[#allocation19] sm:$0x1]
    %v338 = vld [vmem:[#allocation20] sm:$0x1]
    %v339 = vld [vmem:[%s0] sm:$0xff]
    %v340 = vld [vmem:[%s0 + $0x8] sm:$0xff]
    %v341 = vld [vmem:[%s1] sm:$0xff]
    %v342 = vld [vmem:[%s1 + $0x8] sm:$0xff]
    %v343 = vadd.f32 %v339, %v341
    %v344 = vadd.f32 %v340, %v342
    %345 = vadd.xlane.f32.xlu0 %v343
    %v346 = vpop.xlane.xlu0 %345
    %347 = vadd.xlane.f32.xlu0 %v344
    %v348 = vpop.xlane.xlu0 %347
    %v349 = vrcp.pop 128.0
    %v350 = vmul.f32 128.0, %v349
    %v351 = vsub.f32 1.0, %v350
    %v352 = vmul.f32 %v349, %v351
    %v353 = vadd.f32 %v349, %v352
    %vm354 = vweird.f32 %v349
    %v355 = vsel %vm354, %v349, %v353
    %v356 = vmul.f32 %v346, %v355
    %v357 = vmul.f32 %v348, %v355
    %v358 = vsub.f32 %v343, %v356
    %v359 = vsub.f32 %v344, %v357
    %v360 = vmul.f32 %v358, %v358
    %v361 = vmul.f32 %v359, %v359
    %362 = vadd.xlane.f32.xlu0 %v360
    %v363 = vpop.xlane.xlu0 %362
    %364 = vadd.xlane.f32.xlu0 %v361
    %v365 = vpop.xlane.xlu0 %364
    %v366 = vmul.f32 %v363, %v355
    %v367 = vmul.f32 %v365, %v355
    %v368 = vadd.f32 %v366, 1e-05
    %v369 = vadd.f32 %v367, 1e-05
    %v370 = vrsqrt.pop %v368
    %v371 = vmul.f32 %v370, %v368
    %v372 = vmul.f32 %v371, %v370
    %v373 = vmul.f32 0.5, %v372
    %v374 = vsub.f32 1.5, %v373
    %v375 = vmul.f32 %v370, %v374
    %vm376 = vweird.f32 %v368
    %vm377 = vweird.f32 %v370
    %vm378 = vmor %vm376, %vm377
    %v379 = vsel %vm378, %v370, %v375
    %v380 = vrsqrt.pop %v369
    %v381 = vmul.f32 %v380, %v369
    %v382 = vmul.f32 %v381, %v380
    %v383 = vmul.f32 0.5, %v382
    %v384 = vsub.f32 1.5, %v383
    %v385 = vmul.f32 %v380, %v384
    %vm386 = vweird.f32 %v369
    %vm387 = vweird.f32 %v380
    %vm388 = vmor %vm386, %vm387
    %v389 = vsel %vm388, %v380, %v385
    %v390 = vmul.f32 %v358, %v379
    %v391 = vmul.f32 %v359, %v389
    %v393 = vperm.slane %v281, 0
    %v395 = vmul.f32 %v390, %v393
    %v396 = vmul.f32 %v391, %v393
    %v398 = vperm.slane %v282, 0
    %v400 = vadd.f32 %v395, %v398
    %v401 = vadd.f32 %v396, %v398
    %v402 = vpack.c.bf16 %v401, %v400
    %v404 = vperm.slane %v247, 0
    %v405 = vperm.slane %v247, 1
    %v424 = vunpack.c.l.b16 %v231
    %v425 = vunpack.c.h.b16 %v231
    %v426 = vunpack.c.l.b16 %v232
    %v427 = vunpack.c.h.b16 %v232
    %v428 = vunpack.c.l.b16 %v233
    %v429 = vunpack.c.h.b16 %v233
    %v430 = vunpack.c.l.b16 %v234
    %v431 = vunpack.c.h.b16 %v234
    %v432 = vunpack.c.l.b16 %v235
    %v433 = vunpack.c.h.b16 %v235
    %v434 = vunpack.c.l.b16 %v236
    %v435 = vunpack.c.h.b16 %v236
    %v436 = vunpack.c.l.b16 %v237
    %v437 = vunpack.c.h.b16 %v237
    %v438 = vunpack.c.l.b16 %v238
    %v439 = vunpack.c.h.b16 %v238
    %v440 = vunpack.c.l.b16 %v239
    %v441 = vunpack.c.h.b16 %v239
    %v442 = vunpack.c.l.b16 %v240
    %v443 = vunpack.c.h.b16 %v240
    %v444 = vunpack.c.l.b16 %v241
    %v445 = vunpack.c.h.b16 %v241
    %v446 = vunpack.c.l.b16 %v242
    %v447 = vunpack.c.h.b16 %v242
    %v448 = vunpack.c.l.b16 %v243
    %v449 = vunpack.c.h.b16 %v243
    %v450 = vunpack.c.l.b16 %v244
    %v451 = vunpack.c.h.b16 %v244
    %v452 = vunpack.c.l.b16 %v245
    %v453 = vunpack.c.h.b16 %v245
    %v454 = vunpack.c.l.b16 %v246
    %v455 = vunpack.c.h.b16 %v246
    %v456 = vpack.c.b16 %v426, %v424
    %v457 = vpack.c.b16 %v427, %v425
    %v458 = vpack.c.b16 %v430, %v428
    %v459 = vpack.c.b16 %v431, %v429
    %v460 = vpack.c.b16 %v434, %v432
    %v461 = vpack.c.b16 %v435, %v433
    %v462 = vpack.c.b16 %v438, %v436
    %v463 = vpack.c.b16 %v439, %v437
    %v464 = vpack.c.b16 %v442, %v440
    %v465 = vpack.c.b16 %v443, %v441
    %v466 = vpack.c.b16 %v446, %v444
    %v467 = vpack.c.b16 %v447, %v445
    %v468 = vpack.c.b16 %v450, %v448
    %v469 = vpack.c.b16 %v451, %v449
    %v470 = vpack.c.b16 %v454, %v452
    %v471 = vpack.c.b16 %v455, %v453
    %488 = vmatpush.bf16.msra.mxu0 %v470
    %489 = vmatpush.bf16.msra.mxu0 %v468
    %490 = vmatpush.bf16.msra.mxu0 %v466
    %491 = vmatpush.bf16.msra.mxu0 %v464
    %492 = vmatpush.bf16.msra.mxu0 %v462
    %493 = vmatpush.bf16.msra.mxu0 %v460
    %494 = vmatpush.bf16.msra.mxu0 %v458
    %495 = vmatpush.bf16.msra.mxu0 %v456
    %496 = vmatmul.bf16.gmra.mxu0 %v402
    %v497 = vpop.f32.mrf.mxu0
    %v498 = vadd.f32 %v404, %v497
    %v499 = vpop.f32.mrf.mxu0
    %v500 = vadd.f32 %v404, %v499
    %501 = vdwg.mxu0
    %502 = vmatpush.bf16.msra.mxu0 %v471
    %503 = vmatpush.bf16.msra.mxu0 %v469
    %504 = vmatpush.bf16.msra.mxu0 %v467
    %505 = vmatpush.bf16.msra.mxu0 %v465
    %506 = vmatpush.bf16.msra.mxu0 %v463
    %507 = vmatpush.bf16.msra.mxu0 %v461
    %508 = vmatpush.bf16.msra.mxu0 %v459
    %509 = vmatpush.bf16.msra.mxu0 %v457
    %510 = vmatmul.bf16.gmra.mxu0 %v402
    %v511 = vpop.f32.mrf.mxu0
    %v512 = vadd.f32 %v405, %v511
    %v513 = vpop.f32.mrf.mxu0
    %v514 = vadd.f32 %v405, %v513
    %515 = vdwg.mxu0
    %v516 = vmul.f32 %v498, 0.5
    %v517 = vmul.f32 %v512, 0.5
    %v518 = vmul.f32 %v500, 0.5
    %v519 = vmul.f32 %v514, 0.5
    %v520 = vmul.f32 %v498, 0.70710677
    %v521 = vmul.f32 %v512, 0.70710677
    %v522 = vmul.f32 %v500, 0.70710677
    %v523 = vmul.f32 %v514, 0.70710677
    %v524 = vmul.f32 %v520, %v520
    %v525 = vmin.f32 16.0, %v524
    %v526 = vmul.f32 %v525, 2.1237322e-06
    %v527 = vadd.f32 %v526, 0.00028619796
    %v528 = vmul.f32 %v525, %v527
    %v529 = vadd.f32 %v528, 0.0036580483
    %v530 = vmul.f32 %v525, %v529
    %v531 = vadd.f32 %v530, 0.05243302
    %v532 = vmul.f32 %v525, %v531
    %v533 = vadd.f32 %v532, 0.18741608
    %v534 = vmul.f32 %v525, %v533
    %v535 = vadd.f32 %v534, 1.1283791
    %v536 = vmul.f32 %v520, %v535
    %v537 = vmul.f32 %v525, 3.8918573e-05
    %v538 = vadd.f32 %v537, 0.001143296
    %v539 = vmul.f32 %v525, %v538
    %v540 = vadd.f32 %v539, 0.014752088
    %v541 = vmul.f32 %v525, %v540
    %v542 = vadd.f32 %v541, 0.112945676
    %v543 = vmul.f32 %v525, %v542
    %v544 = vadd.f32 %v543, 0.4994258
    %v545 = vmul.f32 %v525, %v544
    %v546 = vadd.f32 %v545, 1.0
    %v547 = vrcp.pop %v546
    %v548 = vmul.f32 %v546, %v547
    %v549 = vsub.f32 1.0, %v548
    %v550 = vmul.f32 %v547, %v549
    %v551 = vadd.f32 %v547, %v550
    %vm552 = vweird.f32 %v546
    %vm553 = vweird.f32 %v547
    %vm554 = vmor %vm552, %vm553
    %v555 = vsel %vm554, %v547, %v551
    %v556 = vand.u32 2147483647, %v546
    %vm557 = vcmp.eq.f32.partialorder %v556, 8.507059e+37
    %v558 = vand.u32 %v546, 2147483648
    %v559 = vor.u32 1.1754944e-38, %v558
    %v560 = vsel %vm557, %v559, %v555
    %v561 = vmul.f32 %v536, %v560
    %v562 = vmin.f32 %v561, 1.0
    %v563 = vmax.f32 %v562, -1.0
    %v564 = vmul.f32 %v521, %v521
    %v565 = vmin.f32 16.0, %v564
    %v566 = vmul.f32 %v565, 2.1237322e-06
    %v567 = vadd.f32 %v566, 0.00028619796
    %v568 = vmul.f32 %v565, %v567
    %v569 = vadd.f32 %v568, 0.0036580483
    %v570 = vmul.f32 %v565, %v569
    %v571 = vadd.f32 %v570, 0.05243302
    %v572 = vmul.f32 %v565, %v571
    %v573 = vadd.f32 %v572, 0.18741608
    %v574 = vmul.f32 %v565, %v573
    %v575 = vadd.f32 %v574, 1.1283791
    %v576 = vmul.f32 %v521, %v575
    %v577 = vmul.f32 %v565, 3.8918573e-05
    %v578 = vadd.f32 %v577, 0.001143296
    %v579 = vmul.f32 %v565, %v578
    %v580 = vadd.f32 %v579, 0.014752088
    %v581 = vmul.f32 %v565, %v580
    %v582 = vadd.f32 %v581, 0.112945676
    %v583 = vmul.f32 %v565, %v582
    %v584 = vadd.f32 %v583, 0.4994258
    %v585 = vmul.f32 %v565, %v584
    %v586 = vadd.f32 %v585, 1.0
    %v587 = vrcp.pop %v586
    %v588 = vmul.f32 %v586, %v587
    %v589 = vsub.f32 1.0, %v588
    %v590 = vmul.f32 %v587, %v589
    %v591 = vadd.f32 %v587, %v590
    %vm592 = vweird.f32 %v586
    %vm593 = vweird.f32 %v587
    %vm594 = vmor %vm592, %vm593
    %v595 = vsel %vm594, %v587, %v591
    %v596 = vand.u32 2147483647, %v586
    %vm597 = vcmp.eq.f32.partialorder %v596, 8.507059e+37
    %v598 = vand.u32 %v586, 2147483648
    %v599 = vor.u32 1.1754944e-38, %v598
    %v600 = vsel %vm597, %v599, %v595
    %v601 = vmul.f32 %v576, %v600
    %v602 = vmin.f32 %v601, 1.0
    %v603 = vmax.f32 %v602, -1.0
    %v604 = vmul.f32 %v522, %v522
    %v605 = vmin.f32 16.0, %v604
    %v606 = vmul.f32 %v605, 2.1237322e-06
    %v607 = vadd.f32 %v606, 0.00028619796
    %v608 = vmul.f32 %v605, %v607
    %v609 = vadd.f32 %v608, 0.0036580483
    %v610 = vmul.f32 %v605, %v609
    %v611 = vadd.f32 %v610, 0.05243302
    %v612 = vmul.f32 %v605, %v611
    %v613 = vadd.f32 %v612, 0.18741608
    %v614 = vmul.f32 %v605, %v613
    %v615 = vadd.f32 %v614, 1.1283791
    %v616 = vmul.f32 %v522, %v615
    %v617 = vmul.f32 %v605, 3.8918573e-05
    %v618 = vadd.f32 %v617, 0.001143296
    %v619 = vmul.f32 %v605, %v618
    %v620 = vadd.f32 %v619, 0.014752088
    %v621 = vmul.f32 %v605, %v620
    %v622 = vadd.f32 %v621, 0.112945676
    %v623 = vmul.f32 %v605, %v622
    %v624 = vadd.f32 %v623, 0.4994258
    %v625 = vmul.f32 %v605, %v624
    %v626 = vadd.f32 %v625, 1.0
    %v627 = vrcp.pop %v626
    %v628 = vmul.f32 %v626, %v627
    %v629 = vsub.f32 1.0, %v628
    %v630 = vmul.f32 %v627, %v629
    %v631 = vadd.f32 %v627, %v630
    %vm632 = vweird.f32 %v626
    %vm633 = vweird.f32 %v627
    %vm634 = vmor %vm632, %vm633
    %v635 = vsel %vm634, %v627, %v631
    %v636 = vand.u32 2147483647, %v626
    %vm637 = vcmp.eq.f32.partialorder %v636, 8.507059e+37
    %v638 = vand.u32 %v626, 2147483648
    %v639 = vor.u32 1.1754944e-38, %v638
    %v640 = vsel %vm637, %v639, %v635
    %v641 = vmul.f32 %v616, %v640
    %v642 = vmin.f32 %v641, 1.0
    %v643 = vmax.f32 %v642, -1.0
    %v644 = vmul.f32 %v523, %v523
    %v645 = vmin.f32 16.0, %v644
    %v646 = vmul.f32 %v645, 2.1237322e-06
    %v647 = vadd.f32 %v646, 0.00028619796
    %v648 = vmul.f32 %v645, %v647
    %v649 = vadd.f32 %v648, 0.0036580483
    %v650 = vmul.f32 %v645, %v649
    %v651 = vadd.f32 %v650, 0.05243302
    %v652 = vmul.f32 %v645, %v651
    %v653 = vadd.f32 %v652, 0.18741608
    %v654 = vmul.f32 %v645, %v653
    %v655 = vadd.f32 %v654, 1.1283791
    %v656 = vmul.f32 %v523, %v655
    %v657 = vmul.f32 %v645, 3.8918573e-05
    %v658 = vadd.f32 %v657, 0.001143296
    %v659 = vmul.f32 %v645, %v658
    %v660 = vadd.f32 %v659, 0.014752088
    %v661 = vmul.f32 %v645, %v660
    %v662 = vadd.f32 %v661, 0.112945676
    %v663 = vmul.f32 %v645, %v662
    %v664 = vadd.f32 %v663, 0.4994258
    %v665 = vmul.f32 %v645, %v664
    %v666 = vadd.f32 %v665, 1.0
    %v667 = vrcp.pop %v666
    %v668 = vmul.f32 %v666, %v667
    %v669 = vsub.f32 1.0, %v668
    %v670 = vmul.f32 %v667, %v669
    %v671 = vadd.f32 %v667, %v670
    %vm672 = vweird.f32 %v666
    %vm673 = vweird.f32 %v667
    %vm674 = vmor %vm672, %vm673
    %v675 = vsel %vm674, %v667, %v671
    %v676 = vand.u32 2147483647, %v666
    %vm677 = vcmp.eq.f32.partialorder %v676, 8.507059e+37
    %v678 = vand.u32 %v666, 2147483648
    %v679 = vor.u32 1.1754944e-38, %v678
    %v680 = vsel %vm677, %v679, %v675
    %v681 = vmul.f32 %v656, %v680
    %v682 = vmin.f32 %v681, 1.0
    %v683 = vmax.f32 %v682, -1.0
    %v684 = vadd.f32 %v563, 1.0
    %v685 = vadd.f32 %v603, 1.0
    %v686 = vadd.f32 %v643, 1.0
    %v687 = vadd.f32 %v683, 1.0
    %v688 = vmul.f32 %v516, %v684
    %v689 = vmul.f32 %v517, %v685
    %v690 = vmul.f32 %v518, %v686
    %v691 = vmul.f32 %v519, %v687
    %v692 = vpack.c.bf16 %v690, %v688
    %v693 = vpack.c.bf16 %v691, %v689
    %v695 = vperm.slane %v280, 0
    %v729 = vunpack.c.l.b16 %v248
    %v730 = vunpack.c.l.b16 %v249
    %v731 = vunpack.c.l.b16 %v250
    %v732 = vunpack.c.l.b16 %v251
    %v733 = vunpack.c.l.b16 %v252
    %v734 = vunpack.c.l.b16 %v253
    %v735 = vunpack.c.l.b16 %v254
    %v736 = vunpack.c.l.b16 %v255
    %v737 = vunpack.c.l.b16 %v256
    %v738 = vunpack.c.l.b16 %v257
    %v739 = vunpack.c.l.b16 %v258
    %v740 = vunpack.c.l.b16 %v259
    %v741 = vunpack.c.l.b16 %v260
    %v742 = vunpack.c.l.b16 %v261
    %v743 = vunpack.c.l.b16 %v262
    %v744 = vunpack.c.l.b16 %v263
    %v745 = vunpack.c.l.b16 %v264
    %v746 = vunpack.c.l.b16 %v265
    %v747 = vunpack.c.l.b16 %v266
    %v748 = vunpack.c.l.b16 %v267
    %v749 = vunpack.c.l.b16 %v268
    %v750 = vunpack.c.l.b16 %v269
    %v751 = vunpack.c.l.b16 %v270
    %v752 = vunpack.c.l.b16 %v271
    %v753 = vunpack.c.l.b16 %v272
    %v754 = vunpack.c.l.b16 %v273
    %v755 = vunpack.c.l.b16 %v274
    %v756 = vunpack.c.l.b16 %v275
    %v757 = vunpack.c.l.b16 %v276
    %v758 = vunpack.c.l.b16 %v277
    %v759 = vunpack.c.l.b16 %v278
    %v760 = vunpack.c.l.b16 %v279
    %v761 = vpack.c.b16 %v730, %v729
    %v762 = vpack.c.b16 %v732, %v731
    %v763 = vpack.c.b16 %v734, %v733
    %v764 = vpack.c.b16 %v736, %v735
    %v765 = vpack.c.b16 %v738, %v737
    %v766 = vpack.c.b16 %v740, %v739
    %v767 = vpack.c.b16 %v742, %v741
    %v768 = vpack.c.b16 %v744, %v743
    %v769 = vpack.c.b16 %v746, %v745
    %v770 = vpack.c.b16 %v748, %v747
    %v771 = vpack.c.b16 %v750, %v749
    %v772 = vpack.c.b16 %v752, %v751
    %v773 = vpack.c.b16 %v754, %v753
    %v774 = vpack.c.b16 %v756, %v755
    %v775 = vpack.c.b16 %v758, %v757
    %v776 = vpack.c.b16 %v760, %v759
    %793 = vmatpush.bf16.msra.mxu0 %v768
    %794 = vmatpush.bf16.msra.mxu0 %v767
    %795 = vmatpush.bf16.msra.mxu0 %v766
    %796 = vmatpush.bf16.msra.mxu0 %v765
    %797 = vmatpush.bf16.msra.mxu0 %v764
    %798 = vmatpush.bf16.msra.mxu0 %v763
    %799 = vmatpush.bf16.msra.mxu0 %v762
    %800 = vmatpush.bf16.msra.mxu0 %v761
    %801 = vmatmul.bf16.gmra.mxu0 %v692
    %v802 = vpop.f32.mrf.mxu0
    %v803 = vadd.f32 %v695, %v802
    %v804 = vpop.f32.mrf.mxu0
    %v805 = vadd.f32 %v695, %v804
    %806 = vdwg.mxu0
    %807 = vmatpush.bf16.msra.mxu0 %v776
    %808 = vmatpush.bf16.msra.mxu0 %v775
    %809 = vmatpush.bf16.msra.mxu0 %v774
    %810 = vmatpush.bf16.msra.mxu0 %v773
    %811 = vmatpush.bf16.msra.mxu0 %v772
    %812 = vmatpush.bf16.msra.mxu0 %v771
    %813 = vmatpush.bf16.msra.mxu0 %v770
    %814 = vmatpush.bf16.msra.mxu0 %v769
    %815 = vmatmul.bf16.gmra.mxu0 %v693
    %v816 = vpop.f32.mrf.mxu0
    %v817 = vadd.f32 %v803, %v816
    %v818 = vpop.f32.mrf.mxu0
    %v819 = vadd.f32 %v805, %v818
    %820 = vdwg.mxu0
    %v821 = vadd.f32 %v400, %v817
    %v822 = vadd.f32 %v401, %v819
    %823 = vadd.xlane.f32.xlu0 %v821
    %v824 = vpop.xlane.xlu0 %823
    %825 = vadd.xlane.f32.xlu0 %v822
    %v826 = vpop.xlane.xlu0 %825
    %v827 = vmul.f32 %v824, %v355
    %v828 = vmul.f32 %v826, %v355
    %v829 = vsub.f32 %v821, %v827
    %v830 = vsub.f32 %v822, %v828
    %v831 = vmul.f32 %v829, %v829
    %v832 = vmul.f32 %v830, %v830
    %833 = vadd.xlane.f32.xlu0 %v831
    %v834 = vpop.xlane.xlu0 %833
    %835 = vadd.xlane.f32.xlu0 %v832
    %v836 = vpop.xlane.xlu0 %835
    %v837 = vmul.f32 %v834, %v355
    %v838 = vmul.f32 %v836, %v355
    %v839 = vadd.f32 %v837, 1e-05
    %v840 = vadd.f32 %v838, 1e-05
    %v841 = vrsqrt.pop %v839
    %v842 = vmul.f32 %v841, %v839
    %v843 = vmul.f32 %v842, %v841
    %v844 = vmul.f32 0.5, %v843
    %v845 = vsub.f32 1.5, %v844
    %v846 = vmul.f32 %v841, %v845
    %vm847 = vweird.f32 %v839
    %vm848 = vweird.f32 %v841
    %vm849 = vmor %vm847, %vm848
    %v850 = vsel %vm849, %v841, %v846
    %v851 = vrsqrt.pop %v840
    %v852 = vmul.f32 %v851, %v840
    %v853 = vmul.f32 %v852, %v851
    %v854 = vmul.f32 0.5, %v853
    %v855 = vsub.f32 1.5, %v854
    %v856 = vmul.f32 %v851, %v855
    %vm857 = vweird.f32 %v840
    %vm858 = vweird.f32 %v851
    %vm859 = vmor %vm857, %vm858
    %v860 = vsel %vm859, %v851, %v856
    %v861 = vmul.f32 %v829, %v850
    %v862 = vmul.f32 %v830, %v860
    %v864 = vperm.slane %v283, 0
    %v866 = vmul.f32 %v861, %v864
    %v867 = vmul.f32 %v862, %v864
    %v869 = vperm.slane %v284, 0
    %v871 = vadd.f32 %v866, %v869
    %v872 = vadd.f32 %v867, %v869
    %v873 = vpack.c.bf16 %v872, %v871
    %v875 = vperm.slane %v301, 0
    %v876 = vperm.slane %v301, 1
    %v895 = vunpack.c.l.b16 %v285
    %v896 = vunpack.c.h.b16 %v285
    %v897 = vunpack.c.l.b16 %v286
    %v898 = vunpack.c.h.b16 %v286
    %v899 = vunpack.c.l.b16 %v287
    %v900 = vunpack.c.h.b16 %v287
    %v901 = vunpack.c.l.b16 %v288
    %v902 = vunpack.c.h.b16 %v288
    %v903 = vunpack.c.l.b16 %v289
    %v904 = vunpack.c.h.b16 %v289
    %v905 = vunpack.c.l.b16 %v290
    %v906 = vunpack.c.h.b16 %v290
    %v907 = vunpack.c.l.b16 %v291
    %v908 = vunpack.c.h.b16 %v291
    %v909 = vunpack.c.l.b16 %v292
    %v910 = vunpack.c.h.b16 %v292
    %v911 = vunpack.c.l.b16 %v293
    %v912 = vunpack.c.h.b16 %v293
    %v913 = vunpack.c.l.b16 %v294
    %v914 = vunpack.c.h.b16 %v294
    %v915 = vunpack.c.l.b16 %v295
    %v916 = vunpack.c.h.b16 %v295
    %v917 = vunpack.c.l.b16 %v296
    %v918 = vunpack.c.h.b16 %v296
    %v919 = vunpack.c.l.b16 %v297
    %v920 = vunpack.c.h.b16 %v297
    %v921 = vunpack.c.l.b16 %v298
    %v922 = vunpack.c.h.b16 %v298
    %v923 = vunpack.c.l.b16 %v299
    %v924 = vunpack.c.h.b16 %v299
    %v925 = vunpack.c.l.b16 %v300
    %v926 = vunpack.c.h.b16 %v300
    %v927 = vpack.c.b16 %v897, %v895
    %v928 = vpack.c.b16 %v898, %v896
    %v929 = vpack.c.b16 %v901, %v899
    %v930 = vpack.c.b16 %v902, %v900
    %v931 = vpack.c.b16 %v905, %v903
    %v932 = vpack.c.b16 %v906, %v904
    %v933 = vpack.c.b16 %v909, %v907
    %v934 = vpack.c.b16 %v910, %v908
    %v935 = vpack.c.b16 %v913, %v911
    %v936 = vpack.c.b16 %v914, %v912
    %v937 = vpack.c.b16 %v917, %v915
    %v938 = vpack.c.b16 %v918, %v916
    %v939 = vpack.c.b16 %v921, %v919
    %v940 = vpack.c.b16 %v922, %v920
    %v941 = vpack.c.b16 %v925, %v923
    %v942 = vpack.c.b16 %v926, %v924
    %959 = vmatpush.bf16.msra.mxu0 %v941
    %960 = vmatpush.bf16.msra.mxu0 %v939
    %961 = vmatpush.bf16.msra.mxu0 %v937
    %962 = vmatpush.bf16.msra.mxu0 %v935
    %963 = vmatpush.bf16.msra.mxu0 %v933
    %964 = vmatpush.bf16.msra.mxu0 %v931
    %965 = vmatpush.bf16.msra.mxu0 %v929
    %966 = vmatpush.bf16.msra.mxu0 %v927
    %967 = vmatmul.bf16.gmra.mxu0 %v873
    %v968 = vpop.f32.mrf.mxu0
    %v969 = vadd.f32 %v875, %v968
    %v970 = vpop.f32.mrf.mxu0
    %v971 = vadd.f32 %v875, %v970
    %972 = vdwg.mxu0
    %973 = vmatpush.bf16.msra.mxu0 %v942
    %974 = vmatpush.bf16.msra.mxu0 %v940
    %975 = vmatpush.bf16.msra.mxu0 %v938
    %976 = vmatpush.bf16.msra.mxu0 %v936
    %977 = vmatpush.bf16.msra.mxu0 %v934
    %978 = vmatpush.bf16.msra.mxu0 %v932
    %979 = vmatpush.bf16.msra.mxu0 %v930
    %980 = vmatpush.bf16.msra.mxu0 %v928
    %981 = vmatmul.bf16.gmra.mxu0 %v873
    %v982 = vpop.f32.mrf.mxu0
    %v983 = vadd.f32 %v876, %v982
    %v984 = vpop.f32.mrf.mxu0
    %v985 = vadd.f32 %v876, %v984
    %986 = vdwg.mxu0
    %v987 = vmul.f32 %v969, 0.5
    %v988 = vmul.f32 %v983, 0.5
    %v989 = vmul.f32 %v971, 0.5
    %v990 = vmul.f32 %v985, 0.5
    %v991 = vmul.f32 %v969, 0.70710677
    %v992 = vmul.f32 %v983, 0.70710677
    %v993 = vmul.f32 %v971, 0.70710677
    %v994 = vmul.f32 %v985, 0.70710677
    %v995 = vmul.f32 %v991, %v991
    %v996 = vmin.f32 16.0, %v995
    %v997 = vmul.f32 %v996, 2.1237322e-06
    %v998 = vadd.f32 %v997, 0.00028619796
    %v999 = vmul.f32 %v996, %v998
    %v1000 = vadd.f32 %v999, 0.0036580483
    %v1001 = vmul.f32 %v996, %v1000
    %v1002 = vadd.f32 %v1001, 0.05243302
    %v1003 = vmul.f32 %v996, %v1002
    %v1004 = vadd.f32 %v1003, 0.18741608
    %v1005 = vmul.f32 %v996, %v1004
    %v1006 = vadd.f32 %v1005, 1.1283791
    %v1007 = vmul.f32 %v991, %v1006
    %v1008 = vmul.f32 %v996, 3.8918573e-05
    %v1009 = vadd.f32 %v1008, 0.001143296
    %v1010 = vmul.f32 %v996, %v1009
    %v1011 = vadd.f32 %v1010, 0.014752088
    %v1012 = vmul.f32 %v996, %v1011
    %v1013 = vadd.f32 %v1012, 0.112945676
    %v1014 = vmul.f32 %v996, %v1013
    %v1015 = vadd.f32 %v1014, 0.4994258
    %v1016 = vmul.f32 %v996, %v1015
    %v1017 = vadd.f32 %v1016, 1.0
    %v1018 = vrcp.pop %v1017
    %v1019 = vmul.f32 %v1017, %v1018
    %v1020 = vsub.f32 1.0, %v1019
    %v1021 = vmul.f32 %v1018, %v1020
    %v1022 = vadd.f32 %v1018, %v1021
    %vm1023 = vweird.f32 %v1017
    %vm1024 = vweird.f32 %v1018
    %vm1025 = vmor %vm1023, %vm1024
    %v1026 = vsel %vm1025, %v1018, %v1022
    %v1027 = vand.u32 2147483647, %v1017
    %vm1028 = vcmp.eq.f32.partialorder %v1027, 8.507059e+37
    %v1029 = vand.u32 %v1017, 2147483648
    %v1030 = vor.u32 1.1754944e-38, %v1029
    %v1031 = vsel %vm1028, %v1030, %v1026
    %v1032 = vmul.f32 %v1007, %v1031
    %v1033 = vmin.f32 %v1032, 1.0
    %v1034 = vmax.f32 %v1033, -1.0
    %v1035 = vmul.f32 %v992, %v992
    %v1036 = vmin.f32 16.0, %v1035
    %v1037 = vmul.f32 %v1036, 2.1237322e-06
    %v1038 = vadd.f32 %v1037, 0.00028619796
    %v1039 = vmul.f32 %v1036, %v1038
    %v1040 = vadd.f32 %v1039, 0.0036580483
    %v1041 = vmul.f32 %v1036, %v1040
    %v1042 = vadd.f32 %v1041, 0.05243302
    %v1043 = vmul.f32 %v1036, %v1042
    %v1044 = vadd.f32 %v1043, 0.18741608
    %v1045 = vmul.f32 %v1036, %v1044
    %v1046 = vadd.f32 %v1045, 1.1283791
    %v1047 = vmul.f32 %v992, %v1046
    %v1048 = vmul.f32 %v1036, 3.8918573e-05
    %v1049 = vadd.f32 %v1048, 0.001143296
    %v1050 = vmul.f32 %v1036, %v1049
    %v1051 = vadd.f32 %v1050, 0.014752088
    %v1052 = vmul.f32 %v1036, %v1051
    %v1053 = vadd.f32 %v1052, 0.112945676
    %v1054 = vmul.f32 %v1036, %v1053
    %v1055 = vadd.f32 %v1054, 0.4994258
    %v1056 = vmul.f32 %v1036, %v1055
    %v1057 = vadd.f32 %v1056, 1.0
    %v1058 = vrcp.pop %v1057
    %v1059 = vmul.f32 %v1057, %v1058
    %v1060 = vsub.f32 1.0, %v1059
    %v1061 = vmul.f32 %v1058, %v1060
    %v1062 = vadd.f32 %v1058, %v1061
    %vm1063 = vweird.f32 %v1057
    %vm1064 = vweird.f32 %v1058
    %vm1065 = vmor %vm1063, %vm1064
    %v1066 = vsel %vm1065, %v1058, %v1062
    %v1067 = vand.u32 2147483647, %v1057
    %vm1068 = vcmp.eq.f32.partialorder %v1067, 8.507059e+37
    %v1069 = vand.u32 %v1057, 2147483648
    %v1070 = vor.u32 1.1754944e-38, %v1069
    %v1071 = vsel %vm1068, %v1070, %v1066
    %v1072 = vmul.f32 %v1047, %v1071
    %v1073 = vmin.f32 %v1072, 1.0
    %v1074 = vmax.f32 %v1073, -1.0
    %v1075 = vmul.f32 %v993, %v993
    %v1076 = vmin.f32 16.0, %v1075
    %v1077 = vmul.f32 %v1076, 2.1237322e-06
    %v1078 = vadd.f32 %v1077, 0.00028619796
    %v1079 = vmul.f32 %v1076, %v1078
    %v1080 = vadd.f32 %v1079, 0.0036580483
    %v1081 = vmul.f32 %v1076, %v1080
    %v1082 = vadd.f32 %v1081, 0.05243302
    %v1083 = vmul.f32 %v1076, %v1082
    %v1084 = vadd.f32 %v1083, 0.18741608
    %v1085 = vmul.f32 %v1076, %v1084
    %v1086 = vadd.f32 %v1085, 1.1283791
    %v1087 = vmul.f32 %v993, %v1086
    %v1088 = vmul.f32 %v1076, 3.8918573e-05
    %v1089 = vadd.f32 %v1088, 0.001143296
    %v1090 = vmul.f32 %v1076, %v1089
    %v1091 = vadd.f32 %v1090, 0.014752088
    %v1092 = vmul.f32 %v1076, %v1091
    %v1093 = vadd.f32 %v1092, 0.112945676
    %v1094 = vmul.f32 %v1076, %v1093
    %v1095 = vadd.f32 %v1094, 0.4994258
    %v1096 = vmul.f32 %v1076, %v1095
    %v1097 = vadd.f32 %v1096, 1.0
    %v1098 = vrcp.pop %v1097
    %v1099 = vmul.f32 %v1097, %v1098
    %v1100 = vsub.f32 1.0, %v1099
    %v1101 = vmul.f32 %v1098, %v1100
    %v1102 = vadd.f32 %v1098, %v1101
    %vm1103 = vweird.f32 %v1097
    %vm1104 = vweird.f32 %v1098
    %vm1105 = vmor %vm1103, %vm1104
    %v1106 = vsel %vm1105, %v1098, %v1102
    %v1107 = vand.u32 2147483647, %v1097
    %vm1108 = vcmp.eq.f32.partialorder %v1107, 8.507059e+37
    %v1109 = vand.u32 %v1097, 2147483648
    %v1110 = vor.u32 1.1754944e-38, %v1109
    %v1111 = vsel %vm1108, %v1110, %v1106
    %v1112 = vmul.f32 %v1087, %v1111
    %v1113 = vmin.f32 %v1112, 1.0
    %v1114 = vmax.f32 %v1113, -1.0
    %v1115 = vmul.f32 %v994, %v994
    %v1116 = vmin.f32 16.0, %v1115
    %v1117 = vmul.f32 %v1116, 2.1237322e-06
    %v1118 = vadd.f32 %v1117, 0.00028619796
    %v1119 = vmul.f32 %v1116, %v1118
    %v1120 = vadd.f32 %v1119, 0.0036580483
    %v1121 = vmul.f32 %v1116, %v1120
    %v1122 = vadd.f32 %v1121, 0.05243302
    %v1123 = vmul.f32 %v1116, %v1122
    %v1124 = vadd.f32 %v1123, 0.18741608
    %v1125 = vmul.f32 %v1116, %v1124
    %v1126 = vadd.f32 %v1125, 1.1283791
    %v1127 = vmul.f32 %v994, %v1126
    %v1128 = vmul.f32 %v1116, 3.8918573e-05
    %v1129 = vadd.f32 %v1128, 0.001143296
    %v1130 = vmul.f32 %v1116, %v1129
    %v1131 = vadd.f32 %v1130, 0.014752088
    %v1132 = vmul.f32 %v1116, %v1131
    %v1133 = vadd.f32 %v1132, 0.112945676
    %v1134 = vmul.f32 %v1116, %v1133
    %v1135 = vadd.f32 %v1134, 0.4994258
    %v1136 = vmul.f32 %v1116, %v1135
    %v1137 = vadd.f32 %v1136, 1.0
    %v1138 = vrcp.pop %v1137
    %v1139 = vmul.f32 %v1137, %v1138
    %v1140 = vsub.f32 1.0, %v1139
    %v1141 = vmul.f32 %v1138, %v1140
    %v1142 = vadd.f32 %v1138, %v1141
    %vm1143 = vweird.f32 %v1137
    %vm1144 = vweird.f32 %v1138
    %vm1145 = vmor %vm1143, %vm1144
    %v1146 = vsel %vm1145, %v1138, %v1142
    %v1147 = vand.u32 2147483647, %v1137
    %vm1148 = vcmp.eq.f32.partialorder %v1147, 8.507059e+37
    %v1149 = vand.u32 %v1137, 2147483648
    %v1150 = vor.u32 1.1754944e-38, %v1149
    %v1151 = vsel %vm1148, %v1150, %v1146
    %v1152 = vmul.f32 %v1127, %v1151
    %v1153 = vmin.f32 %v1152, 1.0
    %v1154 = vmax.f32 %v1153, -1.0
    %v1155 = vadd.f32 %v1034, 1.0
    %v1156 = vadd.f32 %v1074, 1.0
    %v1157 = vadd.f32 %v1114, 1.0
    %v1158 = vadd.f32 %v1154, 1.0
    %v1159 = vmul.f32 %v987, %v1155
    %v1160 = vmul.f32 %v988, %v1156
    %v1161 = vmul.f32 %v989, %v1157
    %v1162 = vmul.f32 %v990, %v1158
    %v1163 = vadd.f32 %v1159, %v1160
    %1164 = vadd.xlane.f32.xlu0 %v1163
    %v1165 = vpop.xlane.xlu0 %1164
    %v1166 = vadd.f32 %v1161, %v1162
    %1167 = vadd.xlane.f32.xlu0 %v1166
    %v1168 = vpop.xlane.xlu0 %1167
    %v1169 = vrcp.pop 256.0
    %v1170 = vmul.f32 256.0, %v1169
    %v1171 = vsub.f32 1.0, %v1170
    %v1172 = vmul.f32 %v1169, %v1171
    %v1173 = vadd.f32 %v1169, %v1172
    %vm1174 = vweird.f32 %v1169
    %v1175 = vsel %vm1174, %v1169, %v1173
    %v1176 = vmul.f32 %v1165, %v1175
    %v1177 = vmul.f32 %v1168, %v1175
    %v1178 = vsub.f32 %v1159, %v1176
    %v1179 = vsub.f32 %v1160, %v1176
    %v1180 = vsub.f32 %v1161, %v1177
    %v1181 = vsub.f32 %v1162, %v1177
    %v1182 = vmul.f32 %v1178, %v1178
    %v1183 = vmul.f32 %v1179, %v1179
    %v1184 = vmul.f32 %v1180, %v1180
    %v1185 = vmul.f32 %v1181, %v1181
    %v1186 = vadd.f32 %v1182, %v1183
    %1187 = vadd.xlane.f32.xlu0 %v1186
    %v1188 = vpop.xlane.xlu0 %1187
    %v1189 = vadd.f32 %v1184, %v1185
    %1190 = vadd.xlane.f32.xlu0 %v1189
    %v1191 = vpop.xlane.xlu0 %1190
    %v1192 = vmul.f32 %v1188, %v1175
    %v1193 = vmul.f32 %v1191, %v1175
    %v1194 = vadd.f32 %v1192, 1e-05
    %v1195 = vadd.f32 %v1193, 1e-05
    %v1196 = vrsqrt.pop %v1194
    %v1197 = vmul.f32 %v1196, %v1194
    %v1198 = vmul.f32 %v1197, %v1196
    %v1199 = vmul.f32 0.5, %v1198
    %v1200 = vsub.f32 1.5, %v1199
    %v1201 = vmul.f32 %v1196, %v1200
    %vm1202 = vweird.f32 %v1194
    %vm1203 = vweird.f32 %v1196
    %vm1204 = vmor %vm1202, %vm1203
    %v1205 = vsel %vm1204, %v1196, %v1201
    %v1206 = vrsqrt.pop %v1195
    %v1207 = vmul.f32 %v1206, %v1195
    %v1208 = vmul.f32 %v1207, %v1206
    %v1209 = vmul.f32 0.5, %v1208
    %v1210 = vsub.f32 1.5, %v1209
    %v1211 = vmul.f32 %v1206, %v1210
    %vm1212 = vweird.f32 %v1195
    %vm1213 = vweird.f32 %v1206
    %vm1214 = vmor %vm1212, %vm1213
    %v1215 = vsel %vm1214, %v1206, %v1211
    %v1216 = vmul.f32 %v1178, %v1205
    %v1217 = vmul.f32 %v1179, %v1205
    %v1218 = vmul.f32 %v1180, %v1215
    %v1219 = vmul.f32 %v1181, %v1215
    %v1221 = vperm.slane %v302, 0
    %v1222 = vperm.slane %v302, 1
    %v1225 = vmul.f32 %v1216, %v1221
    %v1226 = vmul.f32 %v1217, %v1222
    %v1227 = vmul.f32 %v1218, %v1221
    %v1228 = vmul.f32 %v1219, %v1222
    %v1230 = vperm.slane %v303, 0
    %v1231 = vperm.slane %v303, 1
    %v1234 = vadd.f32 %v1225, %v1230
    %v1235 = vadd.f32 %v1226, %v1231
    %v1236 = vadd.f32 %v1227, %v1230
    %v1237 = vadd.f32 %v1228, %v1231
    %v1238 = vpack.c.bf16 %v1236, %v1234
    %v1239 = vpack.c.bf16 %v1237, %v1235
    %v1241 = vperm.slane %v336, 0
    %v1275 = vunpack.c.l.b16 %v304
    %v1276 = vunpack.c.l.b16 %v305
    %v1277 = vunpack.c.l.b16 %v306
    %v1278 = vunpack.c.l.b16 %v307
    %v1279 = vunpack.c.l.b16 %v308
    %v1280 = vunpack.c.l.b16 %v309
    %v1281 = vunpack.c.l.b16 %v310
    %v1282 = vunpack.c.l.b16 %v311
    %v1283 = vunpack.c.l.b16 %v312
    %v1284 = vunpack.c.l.b16 %v313
    %v1285 = vunpack.c.l.b16 %v314
    %v1286 = vunpack.c.l.b16 %v315
    %v1287 = vunpack.c.l.b16 %v316
    %v1288 = vunpack.c.l.b16 %v317
    %v1289 = vunpack.c.l.b16 %v318
    %v1290 = vunpack.c.l.b16 %v319
    %v1291 = vunpack.c.l.b16 %v320
    %v1292 = vunpack.c.l.b16 %v321
    %v1293 = vunpack.c.l.b16 %v322
    %v1294 = vunpack.c.l.b16 %v323
    %v1295 = vunpack.c.l.b16 %v324
    %v1296 = vunpack.c.l.b16 %v325
    %v1297 = vunpack.c.l.b16 %v326
    %v1298 = vunpack.c.l.b16 %v327
    %v1299 = vunpack.c.l.b16 %v328
    %v1300 = vunpack.c.l.b16 %v329
    %v1301 = vunpack.c.l.b16 %v330
    %v1302 = vunpack.c.l.b16 %v331
    %v1303 = vunpack.c.l.b16 %v332
    %v1304 = vunpack.c.l.b16 %v333
    %v1305 = vunpack.c.l.b16 %v334
    %v1306 = vunpack.c.l.b16 %v335
    %v1307 = vpack.c.b16 %v1276, %v1275
    %v1308 = vpack.c.b16 %v1278, %v1277
    %v1309 = vpack.c.b16 %v1280, %v1279
    %v1310 = vpack.c.b16 %v1282, %v1281
    %v1311 = vpack.c.b16 %v1284, %v1283
    %v1312 = vpack.c.b16 %v1286, %v1285
    %v1313 = vpack.c.b16 %v1288, %v1287
    %v1314 = vpack.c.b16 %v1290, %v1289
    %v1315 = vpack.c.b16 %v1292, %v1291
    %v1316 = vpack.c.b16 %v1294, %v1293
    %v1317 = vpack.c.b16 %v1296, %v1295
    %v1318 = vpack.c.b16 %v1298, %v1297
    %v1319 = vpack.c.b16 %v1300, %v1299
    %v1320 = vpack.c.b16 %v1302, %v1301
    %v1321 = vpack.c.b16 %v1304, %v1303
    %v1322 = vpack.c.b16 %v1306, %v1305
    %1339 = vmatpush.bf16.msra.mxu0 %v1314
    %1340 = vmatpush.bf16.msra.mxu0 %v1313
    %1341 = vmatpush.bf16.msra.mxu0 %v1312
    %1342 = vmatpush.bf16.msra.mxu0 %v1311
    %1343 = vmatpush.bf16.msra.mxu0 %v1310
    %1344 = vmatpush.bf16.msra.mxu0 %v1309
    %1345 = vmatpush.bf16.msra.mxu0 %v1308
    %1346 = vmatpush.bf16.msra.mxu0 %v1307
    %1347 = vmatmul.bf16.gmra.mxu0 %v1238
    %v1348 = vpop.f32.mrf.mxu0
    %v1349 = vadd.f32 %v1241, %v1348
    %v1350 = vpop.f32.mrf.mxu0
    %v1351 = vadd.f32 %v1241, %v1350
    %1352 = vdwg.mxu0
    %1353 = vmatpush.bf16.msra.mxu0 %v1322
    %1354 = vmatpush.bf16.msra.mxu0 %v1321
    %1355 = vmatpush.bf16.msra.mxu0 %v1320
    %1356 = vmatpush.bf16.msra.mxu0 %v1319
    %1357 = vmatpush.bf16.msra.mxu0 %v1318
    %1358 = vmatpush.bf16.msra.mxu0 %v1317
    %1359 = vmatpush.bf16.msra.mxu0 %v1316
    %1360 = vmatpush.bf16.msra.mxu0 %v1315
    %1361 = vmatmul.bf16.gmra.mxu0 %v1239
    %v1362 = vpop.f32.mrf.mxu0
    %v1363 = vadd.f32 %v1349, %v1362
    %v1364 = vpop.f32.mrf.mxu0
    %v1365 = vadd.f32 %v1351, %v1364
    %1366 = vdwg.mxu0
    %v1367 = vmul.f32 %v1363, 0.5
    %v1368 = vmul.f32 %v1365, 0.5
    %v1369 = vmul.f32 %v1363, 0.70710677
    %v1370 = vmul.f32 %v1365, 0.70710677
    %v1371 = vmul.f32 %v1369, %v1369
    %v1372 = vmin.f32 16.0, %v1371
    %v1373 = vmul.f32 %v1372, 2.1237322e-06
    %v1374 = vadd.f32 %v1373, 0.00028619796
    %v1375 = vmul.f32 %v1372, %v1374
    %v1376 = vadd.f32 %v1375, 0.0036580483
    %v1377 = vmul.f32 %v1372, %v1376
    %v1378 = vadd.f32 %v1377, 0.05243302
    %v1379 = vmul.f32 %v1372, %v1378
    %v1380 = vadd.f32 %v1379, 0.18741608
    %v1381 = vmul.f32 %v1372, %v1380
    %v1382 = vadd.f32 %v1381, 1.1283791
    %v1383 = vmul.f32 %v1369, %v1382
    %v1384 = vmul.f32 %v1372, 3.8918573e-05
    %v1385 = vadd.f32 %v1384, 0.001143296
    %v1386 = vmul.f32 %v1372, %v1385
    %v1387 = vadd.f32 %v1386, 0.014752088
    %v1388 = vmul.f32 %v1372, %v1387
    %v1389 = vadd.f32 %v1388, 0.112945676
    %v1390 = vmul.f32 %v1372, %v1389
    %v1391 = vadd.f32 %v1390, 0.4994258
    %v1392 = vmul.f32 %v1372, %v1391
    %v1393 = vadd.f32 %v1392, 1.0
    %v1394 = vrcp.pop %v1393
    %v1395 = vmul.f32 %v1393, %v1394
    %v1396 = vsub.f32 1.0, %v1395
    %v1397 = vmul.f32 %v1394, %v1396
    %v1398 = vadd.f32 %v1394, %v1397
    %vm1399 = vweird.f32 %v1393
    %vm1400 = vweird.f32 %v1394
    %vm1401 = vmor %vm1399, %vm1400
    %v1402 = vsel %vm1401, %v1394, %v1398
    %v1403 = vand.u32 2147483647, %v1393
    %vm1404 = vcmp.eq.f32.partialorder %v1403, 8.507059e+37
    %v1405 = vand.u32 %v1393, 2147483648
    %v1406 = vor.u32 1.1754944e-38, %v1405
    %v1407 = vsel %vm1404, %v1406, %v1402
    %v1408 = vmul.f32 %v1383, %v1407
    %v1409 = vmin.f32 %v1408, 1.0
    %v1410 = vmax.f32 %v1409, -1.0
    %v1411 = vmul.f32 %v1370, %v1370
    %v1412 = vmin.f32 16.0, %v1411
    %v1413 = vmul.f32 %v1412, 2.1237322e-06
    %v1414 = vadd.f32 %v1413, 0.00028619796
    %v1415 = vmul.f32 %v1412, %v1414
    %v1416 = vadd.f32 %v1415, 0.0036580483
    %v1417 = vmul.f32 %v1412, %v1416
    %v1418 = vadd.f32 %v1417, 0.05243302
    %v1419 = vmul.f32 %v1412, %v1418
    %v1420 = vadd.f32 %v1419, 0.18741608
    %v1421 = vmul.f32 %v1412, %v1420
    %v1422 = vadd.f32 %v1421, 1.1283791
    %v1423 = vmul.f32 %v1370, %v1422
    %v1424 = vmul.f32 %v1412, 3.8918573e-05
    %v1425 = vadd.f32 %v1424, 0.001143296
    %v1426 = vmul.f32 %v1412, %v1425
    %v1427 = vadd.f32 %v1426, 0.014752088
    %v1428 = vmul.f32 %v1412, %v1427
    %v1429 = vadd.f32 %v1428, 0.112945676
    %v1430 = vmul.f32 %v1412, %v1429
    %v1431 = vadd.f32 %v1430, 0.4994258
    %v1432 = vmul.f32 %v1412, %v1431
    %v1433 = vadd.f32 %v1432, 1.0
    %v1434 = vrcp.pop %v1433
    %v1435 = vmul.f32 %v1433, %v1434
    %v1436 = vsub.f32 1.0, %v1435
    %v1437 = vmul.f32 %v1434, %v1436
    %v1438 = vadd.f32 %v1434, %v1437
    %vm1439 = vweird.f32 %v1433
    %vm1440 = vweird.f32 %v1434
    %vm1441 = vmor %vm1439, %vm1440
    %v1442 = vsel %vm1441, %v1434, %v1438
    %v1443 = vand.u32 2147483647, %v1433
    %vm1444 = vcmp.eq.f32.partialorder %v1443, 8.507059e+37
    %v1445 = vand.u32 %v1433, 2147483648
    %v1446 = vor.u32 1.1754944e-38, %v1445
    %v1447 = vsel %vm1444, %v1446, %v1442
    %v1448 = vmul.f32 %v1423, %v1447
    %v1449 = vmin.f32 %v1448, 1.0
    %v1450 = vmax.f32 %v1449, -1.0
    %v1451 = vadd.f32 %v1410, 1.0
    %v1452 = vadd.f32 %v1450, 1.0
    %v1453 = vmul.f32 %v1367, %v1451
    %v1454 = vmul.f32 %v1368, %v1452
    %1455 = vadd.xlane.f32.xlu0 %v1453
    %v1456 = vpop.xlane.xlu0 %1455
    %1457 = vadd.xlane.f32.xlu0 %v1454
    %v1458 = vpop.xlane.xlu0 %1457
    %v1459 = vmul.f32 %v1456, %v355
    %v1460 = vmul.f32 %v1458, %v355
    %v1461 = vsub.f32 %v1453, %v1459
    %v1462 = vsub.f32 %v1454, %v1460
    %v1463 = vmul.f32 %v1461, %v1461
    %v1464 = vmul.f32 %v1462, %v1462
    %1465 = vadd.xlane.f32.xlu0 %v1463
    %v1466 = vpop.xlane.xlu0 %1465
    %1467 = vadd.xlane.f32.xlu0 %v1464
    %v1468 = vpop.xlane.xlu0 %1467
    %v1469 = vmul.f32 %v1466, %v355
    %v1470 = vmul.f32 %v1468, %v355
    %v1471 = vadd.f32 %v1469, 1e-05
    %v1472 = vadd.f32 %v1470, 1e-05
    %v1473 = vrsqrt.pop %v1471
    %v1474 = vmul.f32 %v1473, %v1471
    %v1475 = vmul.f32 %v1474, %v1473
    %v1476 = vmul.f32 0.5, %v1475
    %v1477 = vsub.f32 1.5, %v1476
    %v1478 = vmul.f32 %v1473, %v1477
    %vm1479 = vweird.f32 %v1471
    %vm1480 = vweird.f32 %v1473
    %vm1481 = vmor %vm1479, %vm1480
    %v1482 = vsel %vm1481, %v1473, %v1478
    %v1483 = vrsqrt.pop %v1472
    %v1484 = vmul.f32 %v1483, %v1472
    %v1485 = vmul.f32 %v1484, %v1483
    %v1486 = vmul.f32 0.5, %v1485
    %v1487 = vsub.f32 1.5, %v1486
    %v1488 = vmul.f32 %v1483, %v1487
    %vm1489 = vweird.f32 %v1472
    %vm1490 = vweird.f32 %v1483
    %vm1491 = vmor %vm1489, %vm1490
    %v1492 = vsel %vm1491, %v1483, %v1488
    %v1493 = vmul.f32 %v1461, %v1482
    %v1494 = vmul.f32 %v1462, %v1492
    %v1496 = vperm.slane %v337, 0
    %v1498 = vmul.f32 %v1493, %v1496
    %v1499 = vmul.f32 %v1494, %v1496
    %v1501 = vperm.slane %v338, 0
    %v1503 = vadd.f32 %v1498, %v1501
    %v1504 = vadd.f32 %v1499, %v1501
    %v1505 = vadd.f32 %v1503, %v871
    %v1506 = vadd.f32 %v1504, %v872
    %1507 = vst [vmem:[#allocation22] sm:$0xff] %v1505
    %1508 = vst [vmem:[#allocation22 + $0x8] sm:$0xff] %v1506
    // Predicated region
    $region122: #{_lambda_.3} parent=1 // pred_check
      _
    $region123: #{_lambda_.3} parent=1 // pred_check_branch
      %1510 = sbr.rel (0) target = $region125
    $region124: #{_lambda_.3} parent=1 // pred_region
      %1512 = vsyncadd [#allocation4], 0
      %s1513 = sshll.u32 [#allocation22], 4
      %s1514 = int_to_ptr.vmem [resolvable:$true] %s1513
      %s1515 = sshll.u32 %s18, 4
      %s1516 = int_to_ptr.hbm [resolvable:$true] %s1515
      %1521 = dma.vmem_to_hbm [thread:$0]  %s1514, 256, %s1516, [#allocation4], 128, 128, 8
    $region125: #{_lambda_.3} parent=1 // pred_fallthru
      _
    // Predicated region
    $region126: #{_lambda_.3} parent=1 // pred_check
      _
    $region127: #{_lambda_.3} parent=1 // pred_check_branch
      %1523 = sbr.rel (0) target = $region129
    $region128: #{_lambda_.3} parent=1 // pred_region
      %1525 = dma.done [#allocation4], 256
    $region129: #{_lambda_.3} parent=1 // pred_fallthru
      _
    %1526 = vsyncpa [#allocation3], 1
    %1527 = vsyncpa [#allocation6], 1
    %1528 = vsyncpa [#allocation9], 1
    %1529 = vsyncpa [#allocation12], 1
    %1530 = vsyncpa [#allocation15], 1
    %1531 = vsyncpa [#allocation18], 1
    %1532 = vsyncpa [#allocation21], 1
    %1533 = vsyncpa [#allocation4], 1

</llo_original>
